<compile_context>
chip_gen: v5e
topology: v5e:2x2
jax: 0.10.0
libtpu: 0.0.40
codegen_flags: <defaults>
</compile_context>

<pallas_src>
import functools

import jax
import jax.numpy as jnp
from jax.experimental import pallas as pl
from jax.experimental.pallas import tpu as pltpu


# --------------------------------------------------------------------------
# Fused multi-block DecoderTransformer kernel
# --------------------------------------------------------------------------
def _fused_decoder_kernel(x0_ref, xk_ref, th0_ref, thk_ref,
                          g1_ref, b1_ref, wq_ref, wk_ref, wv_ref, wo_ref,
                          bo_ref, g2_ref, b2_ref, w1_ref, bf1_ref, w2_ref,
                          bf2_ref, o_ref, *, num_heads, num_real_k, kp,
                          n_blocks):
    """All DecoderTransformer blocks for a tile of TG (b, m) groups.

    x0_ref  : (TG, D)        f32   c_query (residual stream, updated per block)
    xk_ref  : (TG*Kp, D)     bf16  c_knn, neighbour features (flat, constant)
    th0_ref : (TG, D/2)      bf16  rotary angles of the query point
    thk_ref : (TG*Kp, D/2)   bf16  rotary angles of the neighbours (flat)
    weights : stacked with a leading (L = n_blocks) axis, resident in VMEM
    o_ref   : (TG, D)        f32   final c_query
    """
    TG, D = x0_ref.shape
    H = num_heads
    Dh = D // H
    half = D // 2
    eps = 1e-5
    scale = Dh ** -0.5

    # ---- block-invariant work, hoisted out of the per-block loop ---------
    xk = xk_ref[...]                                       # (TG*Kp, D) bf16
    th0 = th0_ref[...].astype(jnp.float32)                 # (TG, half)
    thk = thk_ref[...].astype(jnp.float32)                 # (TG*Kp, half)
    c0, s0 = jnp.cos(th0), jnp.sin(th0)                    # EUP, once per tile
    ck, sk = jnp.cos(thk), jnp.sin(thk)

    def rope(t, c, s):
        lo, hi = t[..., :half], t[..., half:]
        return jnp.concatenate([lo * c - hi * s, hi * c + lo * s], axis=-1)

    if num_real_k < kp:                                    # padded knn slots
        kidx = jax.lax.broadcasted_iota(jnp.int32, (TG, kp), 1)
        knn_bias = jnp.where(kidx < num_real_k, 0.0, -1e30).astype(jnp.float32)
    else:
        knn_bias = None

    x = x0_ref[...]                                        # (TG, D) f32

    # ---- per-block loop (static, weights already resident) ---------------
    for l in range(n_blocks):
        g1, b1 = g1_ref[l], b1_ref[l]
        g2, b2 = g2_ref[l], b2_ref[l]
        bo, bf1, bf2 = bo_ref[l], bf1_ref[l], bf2_ref[l]
        wq, wk, wv, wo = wq_ref[l], wk_ref[l], wv_ref[l], wo_ref[l]
        w1, w2 = w1_ref[l], w2_ref[l]

        # pre-norm only on the query token (only token 0 is read out,
        # K/V use the raw, un-normalised inputs -- matches the PyTorch block)
        mu = jnp.mean(x, axis=-1, keepdims=True)
        xc = x - mu
        var = jnp.mean(xc * xc, axis=-1, keepdims=True)
        ln0 = xc * jax.lax.rsqrt(var + eps) * g1 + b1

        xb = x.astype(jnp.bfloat16)
        q0 = rope(jnp.dot(ln0.astype(jnp.bfloat16), wq,
                          preferred_element_type=jnp.float32), c0, s0)   # (TG, D)
        k0 = rope(jnp.dot(xb, wk, preferred_element_type=jnp.float32),
                  c0, s0)                                                # (TG, D)
        v0 = jnp.dot(xb, wv, preferred_element_type=jnp.float32)         # (TG, D)
        kk = rope(jnp.dot(xk, wk, preferred_element_type=jnp.float32),
                  ck, sk).reshape(TG, kp, D)                             # (TG, Kp, D)
        vk = jnp.dot(xk, wv,
                     preferred_element_type=jnp.float32).reshape(TG, kp, D)

        # per-head attention of the query token over its (K+1)-token sequence
        outs = []
        for h in range(H):                      # H is small & static
            sl = slice(h * Dh, (h + 1) * Dh)
            qh = q0[:, sl]                                               # (TG, Dh)
            s_self = jnp.sum(qh * k0[:, sl], axis=-1,
                             keepdims=True) * scale                      # (TG, 1)
            s_knn = jnp.sum(qh[:, None, :] * kk[:, :, sl],
                            axis=-1) * scale                             # (TG, Kp)
            if knn_bias is not None:
                s_knn = s_knn + knn_bias
            m = jnp.maximum(jnp.max(s_knn, axis=-1, keepdims=True), s_self)
            p_self = jnp.exp(s_self - m)                                 # (TG, 1)
            p_knn = jnp.exp(s_knn - m)                                   # (TG, Kp)
            inv = pl.reciprocal(
                p_self + jnp.sum(p_knn, axis=-1, keepdims=True),
                approx=True)                                             # (TG, 1)
            o_h = (p_self * v0[:, sl]
                   + jnp.sum(p_knn[:, :, None] * vk[:, :, sl], axis=1)) * inv
            outs.append(o_h)
        attn = jnp.concatenate(outs, axis=-1) if H > 1 else outs[0]      # (TG, D)

        # residual + output projection
        y = x + jnp.dot(attn.astype(jnp.bfloat16), wo,
                        preferred_element_type=jnp.float32) + bo

        # FFN: LayerNorm -> Linear(D,4D) -> ReLU -> Linear(4D,D), residual
        mu2 = jnp.mean(y, axis=-1, keepdims=True)
        yc = y - mu2
        var2 = jnp.mean(yc * yc, axis=-1, keepdims=True)
        ln2 = yc * jax.lax.rsqrt(var2 + eps) * g2 + b2
        h1 = jnp.maximum(
            jnp.dot(ln2.astype(jnp.bfloat16), w1,
                    preferred_element_type=jnp.float32) + bf1, 0.0)
        x = y + jnp.dot(h1.astype(jnp.bfloat16), w2,
                        preferred_element_type=jnp.float32) + bf2

    o_ref[...] = x


def decoder_transformer_stack_pallas(c_query, c_knn2, theta0, theta_knn2,
                                     stacked, *, num_heads, num_real_k, tg):
    G, D = c_query.shape
    Kp = c_knn2.shape[0] // G
    half = theta0.shape[1]
    L = stacked['wq'].shape[0]
    grid = (G // tg,)

    v2 = lambda i: (i, 0)
    full3 = lambda shape: pl.BlockSpec(shape, lambda i: (0, 0, 0))

    in_specs = [
        pl.BlockSpec((tg, D), v2),            # c_query         (f32)
        pl.BlockSpec((tg * Kp, D), v2),       # c_knn (flat)    (bf16)
        pl.BlockSpec((tg, half), v2),         # theta query     (bf16)
        pl.BlockSpec((tg * Kp, half), v2),    # theta knn       (bf16)
        full3((L, 1, D)),                     # layernorm1 gamma
        full3((L, 1, D)),                     # layernorm1 beta
        full3((L, D, D)),                     # Wq
        full3((L, D, D)),                     # Wk
        full3((L, D, D)),                     # Wv
        full3((L, D, D)),                     # Wo
        full3((L, 1, D)),                     # bo
        full3((L, 1, D)),                     # layernorm2 gamma
        full3((L, 1, D)),                     # layernorm2 beta
        full3((L, D, 4 * D)),                 # W1
        full3((L, 1, 4 * D)),                 # b1
        full3((L, 4 * D, D)),                 # W2
        full3((L, 1, D)),                     # b2
    ]
    kernel = functools.partial(_fused_decoder_kernel, num_heads=num_heads,
                               num_real_k=num_real_k, kp=Kp, n_blocks=L)
    return pl.pallas_call(
        kernel,
        out_shape=jax.ShapeDtypeStruct((G, D), jnp.float32),
        grid=grid,
        in_specs=in_specs,
        out_specs=pl.BlockSpec((tg, D), v2),
        compiler_params=pltpu.CompilerParams(
            dimension_semantics=("parallel",),
            vmem_limit_bytes=32 * 1024 * 1024),
    )(c_query, c_knn2, theta0, theta_knn2,
      stacked['g1'], stacked['b1'], stacked['wq'], stacked['wk'],
      stacked['wv'], stacked['wo'], stacked['bo'], stacked['g2'],
      stacked['b2'], stacked['w1'], stacked['bf1'], stacked['w2'],
      stacked['bf2'])


# --------------------------------------------------------------------------
# Plain-JAX glue: triplane sampling, knn, rotary angle tables
# --------------------------------------------------------------------------
def _bilinear_sample_plane(feat, uv):
    """feat: (B, C, R, R) NCHW; uv in [0, 1]^2 -> (B, N, C).
    Mimics F.grid_sample(bilinear, border padding, align_corners=True)."""
    b, C, Hh, Ww = feat.shape
    x = jnp.clip(uv[..., 0], 0.0, 1.0) * (Ww - 1)
    y = jnp.clip(uv[..., 1], 0.0, 1.0) * (Hh - 1)
    x0 = jnp.floor(x)
    y0 = jnp.floor(y)
    x1 = jnp.minimum(x0 + 1, Ww - 1)
    y1 = jnp.minimum(y0 + 1, Hh - 1)
    wx = (x - x0)[..., None]
    wy = (y - y0)[..., None]
    x0i, x1i = x0.astype(jnp.int32), x1.astype(jnp.int32)
    y0i, y1i = y0.astype(jnp.int32), y1.astype(jnp.int32)

    feat_flat = feat.reshape(b, C, Hh * Ww)

    def gather(yi, xi):
        lin = yi * Ww + xi                                   # (B, N)
        g = jax.vmap(lambda f, l: f[:, l])(feat_flat, lin)   # (B, C, N)
        return jnp.transpose(g, (0, 2, 1))                   # (B, N, C)

    v00 = gather(y0i, x0i)
    v01 = gather(y0i, x1i)
    v10 = gather(y1i, x0i)
    v11 = gather(y1i, x1i)
    return (v00 * (1 - wx) * (1 - wy) + v01 * wx * (1 - wy)
            + v10 * (1 - wx) * wy + v11 * wx * wy)


def triplane_to_point_sample(tri_feat, p, padding):
    # TODO(synk): original triplane_to_point_sample source unavailable; using
    # ConvONet-style normalized bilinear plane sampling (xy / xz / yz planes).
    plane_dims = ((0, 1), (0, 2), (1, 2))
    outs = []
    for feat, dims in zip(tri_feat, plane_dims):
        uv = p[..., list(dims)] / (1.0 + padding + 1e-3) + 0.5
        outs.append(_bilinear_sample_plane(feat, uv))
    return outs


def _rotary_theta(coords, half):
    # TODO(synk): PointRotaryEmbedding source unavailable; standard RoPE over
    # the 3 point coordinates with per-axis round-robin frequency assignment.
    inv_freq = 1.0 / (10000.0 ** (jnp.arange(half, dtype=jnp.float32) / half))
    axis_sel = (jnp.arange(half) % 3)[None, :] == jnp.arange(3)[:, None]
    freq_mat = axis_sel.astype(jnp.float32) * inv_freq[None, :]     # (3, half)
    return jnp.einsum('...s,sh->...h', coords, freq_mat)


def _round_up8(n):
    return max(8, -(-n // 8) * 8)


# --------------------------------------------------------------------------
# ULTODecoder2d forward
# --------------------------------------------------------------------------
def ulto_decoder2d_forward(params, tri_feat, query, xyz, c, *,
                           padding, K, num_heads, max_tg=512):
    b, mq, _ = query.shape
    dim = c.shape[-1]
    D = 2 * dim
    half = D // 2
    G = b * mq

    # triplane feature sampling at query / xyz points (gather-heavy -> XLA)
    cq = sum(triplane_to_point_sample(tri_feat, query, padding))        # (b, mq, dim)
    c_query = jnp.einsum('bmd,de->bme', cq, params['w_cq'])             # (b, mq, D)
    c2 = sum(triplane_to_point_sample(tri_feat, xyz, padding))          # (b, mx, dim)
    cc = jnp.concatenate([c, c2], axis=-1)                              # (b, mx, D)

    # knn (neighbour order is irrelevant: attention is permutation invariant)
    d2 = jnp.sum((query[:, :, None, :] - xyz[:, None, :, :]) ** 2, axis=-1)
    _, idx = jax.lax.top_k(-d2, K)                                      # (b, mq, K)
    c_knn = jax.vmap(lambda cb, ib: cb[ib])(cc, idx)                    # (b, mq, K, D)
    knn_xyz = jax.vmap(lambda xb, ib: xb[ib])(xyz, idx)                 # (b, mq, K, 3)

    # rotary angles (half width); cos/sin are evaluated once inside the kernel
    theta0 = _rotary_theta(query, half)                                 # (b, mq, half)
    theta_knn = _rotary_theta(knn_xyz, half)                            # (b, mq, K, half)

    # pad neighbour axis to a multiple of 8 (sublane-clean reshapes in kernel)
    Kp = _round_up8(K)
    if Kp != K:
        padk = Kp - K
        c_knn = jnp.pad(c_knn, ((0, 0), (0, 0), (0, padk), (0, 0)))
        theta_knn = jnp.pad(theta_knn, ((0, 0), (0, 0), (0, padk), (0, 0)))

    # flatten groups; neighbour/rotary streams to bf16, residual stream f32
    c_query = c_query.reshape(G, D).astype(jnp.float32)
    c_knn = c_knn.reshape(G * Kp, D).astype(jnp.bfloat16)
    theta0 = theta0.reshape(G, half).astype(jnp.bfloat16)
    theta_knn = theta_knn.reshape(G * Kp, half).astype(jnp.bfloat16)

    # group-tile size: cap at max_tg, and ensure >= 2 grid steps whenever G
    # allows it (v7x has 2 TensorCores; a 1-step grid also gets no pipelining)
    tg_cap = max(8, (max_tg // 8) * 8)
    tg = min(tg_cap, _round_up8(-(-G // 2)))
    Gp = -(-G // tg) * tg
    if Gp != G:
        padg = Gp - G
        c_query = jnp.pad(c_query, ((0, padg), (0, 0)))
        c_knn = jnp.pad(c_knn, ((0, padg * Kp), (0, 0)))
        theta0 = jnp.pad(theta0, ((0, padg), (0, 0)))
        theta_knn = jnp.pad(theta_knn, ((0, padg * Kp), (0, 0)))

    # stack per-block weights along a leading (n_blocks) axis and run ONE
    # fused pallas_call over all blocks (c_knn / theta DMA'd once per tile)
    stacked = {k: jnp.stack([blk[k] for blk in params['blocks']])
               for k in params['blocks'][0]}
    c_query = decoder_transformer_stack_pallas(
        c_query, c_knn, theta0, theta_knn, stacked,
        num_heads=num_heads, num_real_k=K, tg=tg)

    c_query = c_query[:G]
    out = jnp.dot(c_query, params['w_out'])          # tiny GEMM (dout small) -> XLA
    return out.reshape(b, mq, -1)


# --------------------------------------------------------------------------
# Deterministic parameter init (torch.nn.Linear-style bounds)
# --------------------------------------------------------------------------
def init_linear(key, fin, fout, bias=True):
    kw, kb = jax.random.split(key)
    bound = 1.0 / (fin ** 0.5)
    w = jax.random.uniform(kw, (fin, fout), jnp.float32, -bound, bound)
    if not bias:
        return w
    b = jax.random.uniform(kb, (1, fout), jnp.float32, -bound, bound)
    return w, b


def init_block(key, D):
    ks = jax.random.split(key, 6)
    wq = init_linear(ks[0], D, D, bias=False)
    wk = init_linear(ks[1], D, D, bias=False)
    wv = init_linear(ks[2], D, D, bias=False)
    wo, bo = init_linear(ks[3], D, D)
    w1, bf1 = init_linear(ks[4], D, 4 * D)
    w2, bf2 = init_linear(ks[5], 4 * D, D)
    return dict(
        g1=jnp.ones((1, D), jnp.float32), b1=jnp.zeros((1, D), jnp.float32),
        wq=wq.astype(jnp.bfloat16), wk=wk.astype(jnp.bfloat16),
        wv=wv.astype(jnp.bfloat16),
        wo=wo.astype(jnp.bfloat16), bo=bo,
        g2=jnp.ones((1, D), jnp.float32), b2=jnp.zeros((1, D), jnp.float32),
        w1=w1.astype(jnp.bfloat16), bf1=bf1,
        w2=w2.astype(jnp.bfloat16), bf2=bf2)


# --------------------------------------------------------------------------
if __name__ == "__main__":
    # small, shape-consistent configuration
    dim = 16
    dim_out = 1
    n_blocks = 2
    head_dim = 16
    num_heads = (dim * 2) // head_dim           # = 2
    num_neighbors = 7                           # -> padded neighbour axis Kp = 8
    padding = 0.1
    b, mq, mx, r = 2, 8, 16, 16
    D = 2 * dim

    # deterministic example inputs
    key = jax.random.PRNGKey(0)
    k1, k2, k3, k4 = jax.random.split(key, 4)
    tri_feat = [jax.random.normal(k, (b, dim, r, r), jnp.float32) * 0.5
                for k in jax.random.split(k1, 3)]
    query = jax.random.uniform(k2, (b, mq, 3), jnp.float32, -0.5, 0.5)
    xyz = jax.random.uniform(k3, (b, mx, 3), jnp.float32, -0.5, 0.5)
    c = jax.random.normal(k4, (b, mx, dim), jnp.float32)

    # deterministic parameters
    pkey = jax.random.PRNGKey(42)
    pks = jax.random.split(pkey, n_blocks + 2)
    params = dict(
        w_cq=init_linear(pks[0], dim, D, bias=False),
        blocks=[init_block(pks[1 + i], D) for i in range(n_blocks)],
        w_out=init_linear(pks[n_blocks + 1], D, dim_out, bias=False),
    )

    fwd = jax.jit(functools.partial(ulto_decoder2d_forward,
                                    padding=padding, K=num_neighbors,
                                    num_heads=num_heads, max_tg=512))
    out = fwd(params, tri_feat, query, xyz, c)
    out = jax.block_until_ready(out)
    assert out.shape == (b, mq, dim_out), out.shape
    assert bool(jnp.all(jnp.isfinite(out)))
    print("KERNEL_OK")
</pallas_src>

<mosaic_0001>
module attributes {stable_mosaic.version = 11 : i64} {
  func.func @_fused_decoder_kernel(%arg0: i32, %arg1: memref<8x32xf32, #tpu.memory_space<vmem>>, %arg2: memref<64x32xbf16, #tpu.memory_space<vmem>>, %arg3: memref<8x16xbf16, #tpu.memory_space<vmem>>, %arg4: memref<64x16xbf16, #tpu.memory_space<vmem>>, %arg5: memref<2x1x32xf32, #tpu.memory_space<vmem>>, %arg6: memref<2x1x32xf32, #tpu.memory_space<vmem>>, %arg7: memref<2x32x32xbf16, #tpu.memory_space<vmem>>, %arg8: memref<2x32x32xbf16, #tpu.memory_space<vmem>>, %arg9: memref<2x32x32xbf16, #tpu.memory_space<vmem>>, %arg10: memref<2x32x32xbf16, #tpu.memory_space<vmem>>, %arg11: memref<2x1x32xf32, #tpu.memory_space<vmem>>, %arg12: memref<2x1x32xf32, #tpu.memory_space<vmem>>, %arg13: memref<2x1x32xf32, #tpu.memory_space<vmem>>, %arg14: memref<2x32x128xbf16, #tpu.memory_space<vmem>>, %arg15: memref<2x1x128xf32, #tpu.memory_space<vmem>>, %arg16: memref<2x128x32xbf16, #tpu.memory_space<vmem>>, %arg17: memref<2x1x32xf32, #tpu.memory_space<vmem>>, %arg18: memref<8x32xf32, #tpu.memory_space<vmem>>) attributes {dimension_semantics = [#tpu.dimension_semantics<parallel>], iteration_bounds = array<i64: 2>, scalar_prefetch = 0 : i64, scratch_operands = 0 : i64, tpu.core_type = #tpu.core_type<tc>, window_params = [{transform_indices = @transform_0, window_bounds = array<i64: 8, 32>}, {transform_indices = @transform_1, window_bounds = array<i64: 64, 32>}, {transform_indices = @transform_2, window_bounds = array<i64: 8, 16>}, {transform_indices = @transform_3, window_bounds = array<i64: 64, 16>}, {pipeline_mode = #tpu.pipeline_mode<synchronous>, transform_indices = @transform_4, window_bounds = array<i64: 2, 1, 32>}, {pipeline_mode = #tpu.pipeline_mode<synchronous>, transform_indices = @transform_5, window_bounds = array<i64: 2, 1, 32>}, {pipeline_mode = #tpu.pipeline_mode<synchronous>, transform_indices = @transform_6, window_bounds = array<i64: 2, 32, 32>}, {pipeline_mode = #tpu.pipeline_mode<synchronous>, transform_indices = @transform_7, window_bounds = array<i64: 2, 32, 32>}, {pipeline_mode = #tpu.pipeline_mode<synchronous>, transform_indices = @transform_8, window_bounds = array<i64: 2, 32, 32>}, {pipeline_mode = #tpu.pipeline_mode<synchronous>, transform_indices = @transform_9, window_bounds = array<i64: 2, 32, 32>}, {pipeline_mode = #tpu.pipeline_mode<synchronous>, transform_indices = @transform_10, window_bounds = array<i64: 2, 1, 32>}, {pipeline_mode = #tpu.pipeline_mode<synchronous>, transform_indices = @transform_11, window_bounds = array<i64: 2, 1, 32>}, {pipeline_mode = #tpu.pipeline_mode<synchronous>, transform_indices = @transform_12, window_bounds = array<i64: 2, 1, 32>}, {pipeline_mode = #tpu.pipeline_mode<synchronous>, transform_indices = @transform_13, window_bounds = array<i64: 2, 32, 128>}, {pipeline_mode = #tpu.pipeline_mode<synchronous>, transform_indices = @transform_14, window_bounds = array<i64: 2, 1, 128>}, {pipeline_mode = #tpu.pipeline_mode<synchronous>, transform_indices = @transform_15, window_bounds = array<i64: 2, 128, 32>}, {pipeline_mode = #tpu.pipeline_mode<synchronous>, transform_indices = @transform_16, window_bounds = array<i64: 2, 1, 32>}, {transform_indices = @transform_17, window_bounds = array<i64: 8, 32>}]} {
    %c0 = arith.constant 0 : index
    %c0_0 = arith.constant 0 : index
    %0 = vector.load %arg2[%c0, %c0_0] : memref<64x32xbf16, #tpu.memory_space<vmem>>, vector<64x32xbf16>
    %c0_1 = arith.constant 0 : index
    %c0_2 = arith.constant 0 : index
    %1 = vector.load %arg3[%c0_1, %c0_2] : memref<8x16xbf16, #tpu.memory_space<vmem>>, vector<8x16xbf16>
    %2 = arith.extf %1 : vector<8x16xbf16> to vector<8x16xf32>
    %c0_3 = arith.constant 0 : index
    %c0_4 = arith.constant 0 : index
    %3 = vector.load %arg4[%c0_3, %c0_4] : memref<64x16xbf16, #tpu.memory_space<vmem>>, vector<64x16xbf16>
    %4 = arith.extf %3 : vector<64x16xbf16> to vector<64x16xf32>
    %5 = math.cos %2 : vector<8x16xf32>
    %6 = math.sin %2 : vector<8x16xf32>
    %7 = math.cos %4 : vector<64x16xf32>
    %8 = math.sin %4 : vector<64x16xf32>
    %9 = tpu.iota {dimensions = array<i32: 1>} : vector<8x8xi32>
    %c7_i32 = arith.constant 7 : i32
    %10 = vector.broadcast %c7_i32 : i32 to vector<8x8xi32>
    %11 = arith.cmpi slt, %9, %10 : vector<8x8xi32>
    %cst = arith.constant 0.000000e+00 : f32
    %cst_5 = arith.constant -1.000000e+30 : f32
    %12 = vector.broadcast %cst : f32 to vector<8x8xf32>
    %13 = vector.broadcast %cst_5 : f32 to vector<8x8xf32>
    %14 = arith.select %11, %12, %13 : vector<8x8xi1>, vector<8x8xf32>
    %c0_6 = arith.constant 0 : index
    %c0_7 = arith.constant 0 : index
    %15 = vector.load %arg1[%c0_6, %c0_7] : memref<8x32xf32, #tpu.memory_space<vmem>>, vector<8x32xf32>
    %c0_8 = arith.constant 0 : index
    %c0_9 = arith.constant 0 : index
    %c0_10 = arith.constant 0 : index
    %16 = vector.load %arg5[%c0_8, %c0_9, %c0_10] : memref<2x1x32xf32, #tpu.memory_space<vmem>>, vector<1x1x32xf32>
    %17 = vector.shape_cast %16 : vector<1x1x32xf32> to vector<1x32xf32>
    %c0_11 = arith.constant 0 : index
    %c0_12 = arith.constant 0 : index
    %c0_13 = arith.constant 0 : index
    %18 = vector.load %arg6[%c0_11, %c0_12, %c0_13] : memref<2x1x32xf32, #tpu.memory_space<vmem>>, vector<1x1x32xf32>
    %19 = vector.shape_cast %18 : vector<1x1x32xf32> to vector<1x32xf32>
    %c0_14 = arith.constant 0 : index
    %c0_15 = arith.constant 0 : index
    %c0_16 = arith.constant 0 : index
    %20 = vector.load %arg12[%c0_14, %c0_15, %c0_16] : memref<2x1x32xf32, #tpu.memory_space<vmem>>, vector<1x1x32xf32>
    %21 = vector.shape_cast %20 : vector<1x1x32xf32> to vector<1x32xf32>
    %c0_17 = arith.constant 0 : index
    %c0_18 = arith.constant 0 : index
    %c0_19 = arith.constant 0 : index
    %22 = vector.load %arg13[%c0_17, %c0_18, %c0_19] : memref<2x1x32xf32, #tpu.memory_space<vmem>>, vector<1x1x32xf32>
    %23 = vector.shape_cast %22 : vector<1x1x32xf32> to vector<1x32xf32>
    %c0_20 = arith.constant 0 : index
    %c0_21 = arith.constant 0 : index
    %c0_22 = arith.constant 0 : index
    %24 = vector.load %arg11[%c0_20, %c0_21, %c0_22] : memref<2x1x32xf32, #tpu.memory_space<vmem>>, vector<1x1x32xf32>
    %25 = vector.shape_cast %24 : vector<1x1x32xf32> to vector<1x32xf32>
    %c0_23 = arith.constant 0 : index
    %c0_24 = arith.constant 0 : index
    %c0_25 = arith.constant 0 : index
    %26 = vector.load %arg15[%c0_23, %c0_24, %c0_25] : memref<2x1x128xf32, #tpu.memory_space<vmem>>, vector<1x1x128xf32>
    %27 = vector.shape_cast %26 : vector<1x1x128xf32> to vector<1x128xf32>
    %c0_26 = arith.constant 0 : index
    %c0_27 = arith.constant 0 : index
    %c0_28 = arith.constant 0 : index
    %28 = vector.load %arg17[%c0_26, %c0_27, %c0_28] : memref<2x1x32xf32, #tpu.memory_space<vmem>>, vector<1x1x32xf32>
    %29 = vector.shape_cast %28 : vector<1x1x32xf32> to vector<1x32xf32>
    %c0_29 = arith.constant 0 : index
    %c0_30 = arith.constant 0 : index
    %c0_31 = arith.constant 0 : index
    %30 = vector.load %arg7[%c0_29, %c0_30, %c0_31] : memref<2x32x32xbf16, #tpu.memory_space<vmem>>, vector<1x32x32xbf16>
    %31 = vector.shape_cast %30 : vector<1x32x32xbf16> to vector<32x32xbf16>
    %c0_32 = arith.constant 0 : index
    %c0_33 = arith.constant 0 : index
    %c0_34 = arith.constant 0 : index
    %32 = vector.load %arg8[%c0_32, %c0_33, %c0_34] : memref<2x32x32xbf16, #tpu.memory_space<vmem>>, vector<1x32x32xbf16>
    %33 = vector.shape_cast %32 : vector<1x32x32xbf16> to vector<32x32xbf16>
    %c0_35 = arith.constant 0 : index
    %c0_36 = arith.constant 0 : index
    %c0_37 = arith.constant 0 : index
    %34 = vector.load %arg9[%c0_35, %c0_36, %c0_37] : memref<2x32x32xbf16, #tpu.memory_space<vmem>>, vector<1x32x32xbf16>
    %35 = vector.shape_cast %34 : vector<1x32x32xbf16> to vector<32x32xbf16>
    %c0_38 = arith.constant 0 : index
    %c0_39 = arith.constant 0 : index
    %c0_40 = arith.constant 0 : index
    %36 = vector.load %arg10[%c0_38, %c0_39, %c0_40] : memref<2x32x32xbf16, #tpu.memory_space<vmem>>, vector<1x32x32xbf16>
    %37 = vector.shape_cast %36 : vector<1x32x32xbf16> to vector<32x32xbf16>
    %c0_41 = arith.constant 0 : index
    %c0_42 = arith.constant 0 : index
    %c0_43 = arith.constant 0 : index
    %38 = vector.load %arg14[%c0_41, %c0_42, %c0_43] : memref<2x32x128xbf16, #tpu.memory_space<vmem>>, vector<1x32x128xbf16>
    %39 = vector.shape_cast %38 : vector<1x32x128xbf16> to vector<32x128xbf16>
    %c0_44 = arith.constant 0 : index
    %c0_45 = arith.constant 0 : index
    %c0_46 = arith.constant 0 : index
    %40 = vector.load %arg16[%c0_44, %c0_45, %c0_46] : memref<2x128x32xbf16, #tpu.memory_space<vmem>>, vector<1x128x32xbf16>
    %41 = vector.shape_cast %40 : vector<1x128x32xbf16> to vector<128x32xbf16>
    %cst_47 = arith.constant dense<0.000000e+00> : vector<8xf32>
    %42 = vector.multi_reduction <add>, %15, %cst_47 [1] : vector<8x32xf32> to vector<8xf32>
    %43 = vector.shape_cast %42 : vector<8xf32> to vector<8x1xf32>
    %cst_48 = arith.constant 3.200000e+01 : f32
    %44 = vector.broadcast %cst_48 : f32 to vector<8x1xf32>
    %45 = arith.divf %43, %44 : vector<8x1xf32>
    %46 = vector.broadcast %45 : vector<8x1xf32> to vector<8x32xf32>
    %47 = arith.subf %15, %46 : vector<8x32xf32>
    %48 = arith.mulf %47, %47 : vector<8x32xf32>
    %cst_49 = arith.constant dense<0.000000e+00> : vector<8xf32>
    %49 = vector.multi_reduction <add>, %48, %cst_49 [1] : vector<8x32xf32> to vector<8xf32>
    %50 = vector.shape_cast %49 : vector<8xf32> to vector<8x1xf32>
    %cst_50 = arith.constant 3.200000e+01 : f32
    %51 = vector.broadcast %cst_50 : f32 to vector<8x1xf32>
    %52 = arith.divf %50, %51 : vector<8x1xf32>
    %cst_51 = arith.constant 9.99999974E-6 : f32
    %53 = vector.broadcast %cst_51 : f32 to vector<8x1xf32>
    %54 = arith.addf %52, %53 : vector<8x1xf32>
    %55 = math.rsqrt %54 : vector<8x1xf32>
    %56 = vector.broadcast %55 : vector<8x1xf32> to vector<8x32xf32>
    %57 = arith.mulf %47, %56 : vector<8x32xf32>
    %58 = vector.broadcast %17 : vector<1x32xf32> to vector<8x32xf32>
    %59 = arith.mulf %57, %58 : vector<8x32xf32>
    %60 = vector.broadcast %19 : vector<1x32xf32> to vector<8x32xf32>
    %61 = arith.addf %59, %60 : vector<8x32xf32>
    %62 = arith.truncf %15 : vector<8x32xf32> to vector<8x32xbf16>
    %63 = arith.truncf %61 : vector<8x32xf32> to vector<8x32xbf16>
    %cst_52 = arith.constant dense<0.000000e+00> : vector<8x32xf32>
    %64 = tpu.matmul %63, %31, %cst_52 {dimension_numbers = #tpu.dot_dimension_numbers<[1], [0], [0], [1], [0, 0, 1, 1], [], []>} : vector<8x32xbf16>, vector<32x32xbf16>, vector<8x32xf32> -> vector<8x32xf32>
    %65 = vector.extract_strided_slice %64 {offsets = [0, 0], sizes = [8, 16], strides = [1, 1]} : vector<8x32xf32> to vector<8x16xf32>
    %66 = vector.extract_strided_slice %64 {offsets = [0, 16], sizes = [8, 16], strides = [1, 1]} : vector<8x32xf32> to vector<8x16xf32>
    %67 = arith.mulf %65, %5 : vector<8x16xf32>
    %68 = arith.mulf %66, %6 : vector<8x16xf32>
    %69 = arith.subf %67, %68 : vector<8x16xf32>
    %70 = arith.mulf %66, %5 : vector<8x16xf32>
    %71 = arith.mulf %65, %6 : vector<8x16xf32>
    %72 = arith.addf %70, %71 : vector<8x16xf32>
    %73 = tpu.concatenate %69, %72 in 1 : vector<8x16xf32>, vector<8x16xf32> -> vector<8x32xf32>
    %cst_53 = arith.constant dense<0.000000e+00> : vector<8x32xf32>
    %74 = tpu.matmul %62, %33, %cst_53 {dimension_numbers = #tpu.dot_dimension_numbers<[1], [0], [0], [1], [0, 0, 1, 1], [], []>} : vector<8x32xbf16>, vector<32x32xbf16>, vector<8x32xf32> -> vector<8x32xf32>
    %75 = vector.extract_strided_slice %74 {offsets = [0, 0], sizes = [8, 16], strides = [1, 1]} : vector<8x32xf32> to vector<8x16xf32>
    %76 = vector.extract_strided_slice %74 {offsets = [0, 16], sizes = [8, 16], strides = [1, 1]} : vector<8x32xf32> to vector<8x16xf32>
    %77 = arith.mulf %75, %5 : vector<8x16xf32>
    %78 = arith.mulf %76, %6 : vector<8x16xf32>
    %79 = arith.subf %77, %78 : vector<8x16xf32>
    %80 = arith.mulf %76, %5 : vector<8x16xf32>
    %81 = arith.mulf %75, %6 : vector<8x16xf32>
    %82 = arith.addf %80, %81 : vector<8x16xf32>
    %83 = tpu.concatenate %79, %82 in 1 : vector<8x16xf32>, vector<8x16xf32> -> vector<8x32xf32>
    %cst_54 = arith.constant dense<0.000000e+00> : vector<8x32xf32>
    %84 = tpu.matmul %62, %35, %cst_54 {dimension_numbers = #tpu.dot_dimension_numbers<[1], [0], [0], [1], [0, 0, 1, 1], [], []>} : vector<8x32xbf16>, vector<32x32xbf16>, vector<8x32xf32> -> vector<8x32xf32>
    %cst_55 = arith.constant dense<0.000000e+00> : vector<64x32xf32>
    %85 = tpu.matmul %0, %33, %cst_55 {dimension_numbers = #tpu.dot_dimension_numbers<[1], [0], [0], [1], [0, 0, 1, 1], [], []>} : vector<64x32xbf16>, vector<32x32xbf16>, vector<64x32xf32> -> vector<64x32xf32>
    %86 = vector.extract_strided_slice %85 {offsets = [0, 0], sizes = [64, 16], strides = [1, 1]} : vector<64x32xf32> to vector<64x16xf32>
    %87 = vector.extract_strided_slice %85 {offsets = [0, 16], sizes = [64, 16], strides = [1, 1]} : vector<64x32xf32> to vector<64x16xf32>
    %88 = arith.mulf %86, %7 : vector<64x16xf32>
    %89 = arith.mulf %87, %8 : vector<64x16xf32>
    %90 = arith.subf %88, %89 : vector<64x16xf32>
    %91 = arith.mulf %87, %7 : vector<64x16xf32>
    %92 = arith.mulf %86, %8 : vector<64x16xf32>
    %93 = arith.addf %91, %92 : vector<64x16xf32>
    %94 = tpu.concatenate %90, %93 in 1 : vector<64x16xf32>, vector<64x16xf32> -> vector<64x32xf32>
    %95 = vector.shape_cast %94 : vector<64x32xf32> to vector<8x8x32xf32>
    %cst_56 = arith.constant dense<0.000000e+00> : vector<64x32xf32>
    %96 = tpu.matmul %0, %35, %cst_56 {dimension_numbers = #tpu.dot_dimension_numbers<[1], [0], [0], [1], [0, 0, 1, 1], [], []>} : vector<64x32xbf16>, vector<32x32xbf16>, vector<64x32xf32> -> vector<64x32xf32>
    %97 = vector.shape_cast %96 : vector<64x32xf32> to vector<8x8x32xf32>
    %98 = vector.extract_strided_slice %73 {offsets = [0, 0], sizes = [8, 16], strides = [1, 1]} : vector<8x32xf32> to vector<8x16xf32>
    %99 = vector.extract_strided_slice %83 {offsets = [0, 0], sizes = [8, 16], strides = [1, 1]} : vector<8x32xf32> to vector<8x16xf32>
    %100 = arith.mulf %98, %99 : vector<8x16xf32>
    %cst_57 = arith.constant dense<0.000000e+00> : vector<8xf32>
    %101 = vector.multi_reduction <add>, %100, %cst_57 [1] : vector<8x16xf32> to vector<8xf32>
    %102 = vector.shape_cast %101 : vector<8xf32> to vector<8x1xf32>
    %cst_58 = arith.constant 2.500000e-01 : f32
    %103 = vector.broadcast %cst_58 : f32 to vector<8x1xf32>
    %104 = arith.mulf %102, %103 : vector<8x1xf32>
    %105 = vector.shape_cast %98 : vector<8x16xf32> to vector<8x1x16xf32>
    %106 = vector.extract_strided_slice %95 {offsets = [0, 0, 0], sizes = [8, 8, 16], strides = [1, 1, 1]} : vector<8x8x32xf32> to vector<8x8x16xf32>
    %107 = vector.broadcast %105 : vector<8x1x16xf32> to vector<8x8x16xf32>
    %108 = arith.mulf %107, %106 : vector<8x8x16xf32>
    %cst_59 = arith.constant dense<0.000000e+00> : vector<8x8xf32>
    %109 = vector.multi_reduction <add>, %108, %cst_59 [2] : vector<8x8x16xf32> to vector<8x8xf32>
    %cst_60 = arith.constant 2.500000e-01 : f32
    %110 = vector.broadcast %cst_60 : f32 to vector<8x8xf32>
    %111 = arith.mulf %109, %110 : vector<8x8xf32>
    %112 = arith.addf %111, %14 : vector<8x8xf32>
    %cst_61 = arith.constant dense<0xFF800000> : vector<8xf32>
    %113 = vector.multi_reduction <maximumf>, %112, %cst_61 [1] : vector<8x8xf32> to vector<8xf32>
    %114 = vector.shape_cast %113 : vector<8xf32> to vector<8x1xf32>
    %115 = arith.maximumf %114, %104 : vector<8x1xf32>
    %116 = arith.subf %104, %115 : vector<8x1xf32>
    %117 = math.exp %116 : vector<8x1xf32>
    %118 = vector.broadcast %115 : vector<8x1xf32> to vector<8x8xf32>
    %119 = arith.subf %112, %118 : vector<8x8xf32>
    %120 = math.exp %119 : vector<8x8xf32>
    %cst_62 = arith.constant dense<0.000000e+00> : vector<8xf32>
    %121 = vector.multi_reduction <add>, %120, %cst_62 [1] : vector<8x8xf32> to vector<8xf32>
    %122 = vector.shape_cast %121 : vector<8xf32> to vector<8x1xf32>
    %123 = arith.addf %117, %122 : vector<8x1xf32>
    %124 = tpu.reciprocal %123 {approx = true} : vector<8x1xf32> -> vector<8x1xf32>
    %125 = vector.extract_strided_slice %84 {offsets = [0, 0], sizes = [8, 16], strides = [1, 1]} : vector<8x32xf32> to vector<8x16xf32>
    %126 = vector.broadcast %117 : vector<8x1xf32> to vector<8x16xf32>
    %127 = arith.mulf %126, %125 : vector<8x16xf32>
    %128 = vector.shape_cast %120 : vector<8x8xf32> to vector<8x8x1xf32>
    %129 = vector.extract_strided_slice %97 {offsets = [0, 0, 0], sizes = [8, 8, 16], strides = [1, 1, 1]} : vector<8x8x32xf32> to vector<8x8x16xf32>
    %130 = vector.broadcast %128 : vector<8x8x1xf32> to vector<8x8x16xf32>
    %131 = arith.mulf %130, %129 : vector<8x8x16xf32>
    %cst_63 = arith.constant dense<0.000000e+00> : vector<8x16xf32>
    %132 = vector.multi_reduction <add>, %131, %cst_63 [1] : vector<8x8x16xf32> to vector<8x16xf32>
    %133 = arith.addf %127, %132 : vector<8x16xf32>
    %134 = vector.broadcast %124 : vector<8x1xf32> to vector<8x16xf32>
    %135 = arith.mulf %133, %134 : vector<8x16xf32>
    %136 = vector.extract_strided_slice %73 {offsets = [0, 16], sizes = [8, 16], strides = [1, 1]} : vector<8x32xf32> to vector<8x16xf32>
    %137 = vector.extract_strided_slice %83 {offsets = [0, 16], sizes = [8, 16], strides = [1, 1]} : vector<8x32xf32> to vector<8x16xf32>
    %138 = arith.mulf %136, %137 : vector<8x16xf32>
    %cst_64 = arith.constant dense<0.000000e+00> : vector<8xf32>
    %139 = vector.multi_reduction <add>, %138, %cst_64 [1] : vector<8x16xf32> to vector<8xf32>
    %140 = vector.shape_cast %139 : vector<8xf32> to vector<8x1xf32>
    %cst_65 = arith.constant 2.500000e-01 : f32
    %141 = vector.broadcast %cst_65 : f32 to vector<8x1xf32>
    %142 = arith.mulf %140, %141 : vector<8x1xf32>
    %143 = vector.shape_cast %136 : vector<8x16xf32> to vector<8x1x16xf32>
    %144 = vector.extract_strided_slice %95 {offsets = [0, 0, 16], sizes = [8, 8, 16], strides = [1, 1, 1]} : vector<8x8x32xf32> to vector<8x8x16xf32>
    %145 = vector.broadcast %143 : vector<8x1x16xf32> to vector<8x8x16xf32>
    %146 = arith.mulf %145, %144 : vector<8x8x16xf32>
    %cst_66 = arith.constant dense<0.000000e+00> : vector<8x8xf32>
    %147 = vector.multi_reduction <add>, %146, %cst_66 [2] : vector<8x8x16xf32> to vector<8x8xf32>
    %cst_67 = arith.constant 2.500000e-01 : f32
    %148 = vector.broadcast %cst_67 : f32 to vector<8x8xf32>
    %149 = arith.mulf %147, %148 : vector<8x8xf32>
    %150 = arith.addf %149, %14 : vector<8x8xf32>
    %cst_68 = arith.constant dense<0xFF800000> : vector<8xf32>
    %151 = vector.multi_reduction <maximumf>, %150, %cst_68 [1] : vector<8x8xf32> to vector<8xf32>
    %152 = vector.shape_cast %151 : vector<8xf32> to vector<8x1xf32>
    %153 = arith.maximumf %152, %142 : vector<8x1xf32>
    %154 = arith.subf %142, %153 : vector<8x1xf32>
    %155 = math.exp %154 : vector<8x1xf32>
    %156 = vector.broadcast %153 : vector<8x1xf32> to vector<8x8xf32>
    %157 = arith.subf %150, %156 : vector<8x8xf32>
    %158 = math.exp %157 : vector<8x8xf32>
    %cst_69 = arith.constant dense<0.000000e+00> : vector<8xf32>
    %159 = vector.multi_reduction <add>, %158, %cst_69 [1] : vector<8x8xf32> to vector<8xf32>
    %160 = vector.shape_cast %159 : vector<8xf32> to vector<8x1xf32>
    %161 = arith.addf %155, %160 : vector<8x1xf32>
    %162 = tpu.reciprocal %161 {approx = true} : vector<8x1xf32> -> vector<8x1xf32>
    %163 = vector.extract_strided_slice %84 {offsets = [0, 16], sizes = [8, 16], strides = [1, 1]} : vector<8x32xf32> to vector<8x16xf32>
    %164 = vector.broadcast %155 : vector<8x1xf32> to vector<8x16xf32>
    %165 = arith.mulf %164, %163 : vector<8x16xf32>
    %166 = vector.shape_cast %158 : vector<8x8xf32> to vector<8x8x1xf32>
    %167 = vector.extract_strided_slice %97 {offsets = [0, 0, 16], sizes = [8, 8, 16], strides = [1, 1, 1]} : vector<8x8x32xf32> to vector<8x8x16xf32>
    %168 = vector.broadcast %166 : vector<8x8x1xf32> to vector<8x8x16xf32>
    %169 = arith.mulf %168, %167 : vector<8x8x16xf32>
    %cst_70 = arith.constant dense<0.000000e+00> : vector<8x16xf32>
    %170 = vector.multi_reduction <add>, %169, %cst_70 [1] : vector<8x8x16xf32> to vector<8x16xf32>
    %171 = arith.addf %165, %170 : vector<8x16xf32>
    %172 = vector.broadcast %162 : vector<8x1xf32> to vector<8x16xf32>
    %173 = arith.mulf %171, %172 : vector<8x16xf32>
    %174 = tpu.concatenate %135, %173 in 1 : vector<8x16xf32>, vector<8x16xf32> -> vector<8x32xf32>
    %175 = arith.truncf %174 : vector<8x32xf32> to vector<8x32xbf16>
    %cst_71 = arith.constant dense<0.000000e+00> : vector<8x32xf32>
    %176 = tpu.matmul %175, %37, %cst_71 {dimension_numbers = #tpu.dot_dimension_numbers<[1], [0], [0], [1], [0, 0, 1, 1], [], []>} : vector<8x32xbf16>, vector<32x32xbf16>, vector<8x32xf32> -> vector<8x32xf32>
    %177 = arith.addf %15, %176 : vector<8x32xf32>
    %178 = vector.broadcast %25 : vector<1x32xf32> to vector<8x32xf32>
    %179 = arith.addf %177, %178 : vector<8x32xf32>
    %cst_72 = arith.constant dense<0.000000e+00> : vector<8xf32>
    %180 = vector.multi_reduction <add>, %179, %cst_72 [1] : vector<8x32xf32> to vector<8xf32>
    %181 = vector.shape_cast %180 : vector<8xf32> to vector<8x1xf32>
    %cst_73 = arith.constant 3.200000e+01 : f32
    %182 = vector.broadcast %cst_73 : f32 to vector<8x1xf32>
    %183 = arith.divf %181, %182 : vector<8x1xf32>
    %184 = vector.broadcast %183 : vector<8x1xf32> to vector<8x32xf32>
    %185 = arith.subf %179, %184 : vector<8x32xf32>
    %186 = arith.mulf %185, %185 : vector<8x32xf32>
    %cst_74 = arith.constant dense<0.000000e+00> : vector<8xf32>
    %187 = vector.multi_reduction <add>, %186, %cst_74 [1] : vector<8x32xf32> to vector<8xf32>
    %188 = vector.shape_cast %187 : vector<8xf32> to vector<8x1xf32>
    %cst_75 = arith.constant 3.200000e+01 : f32
    %189 = vector.broadcast %cst_75 : f32 to vector<8x1xf32>
    %190 = arith.divf %188, %189 : vector<8x1xf32>
    %cst_76 = arith.constant 9.99999974E-6 : f32
    %191 = vector.broadcast %cst_76 : f32 to vector<8x1xf32>
    %192 = arith.addf %190, %191 : vector<8x1xf32>
    %193 = math.rsqrt %192 : vector<8x1xf32>
    %194 = vector.broadcast %193 : vector<8x1xf32> to vector<8x32xf32>
    %195 = arith.mulf %185, %194 : vector<8x32xf32>
    %196 = vector.broadcast %21 : vector<1x32xf32> to vector<8x32xf32>
    %197 = arith.mulf %195, %196 : vector<8x32xf32>
    %198 = vector.broadcast %23 : vector<1x32xf32> to vector<8x32xf32>
    %199 = arith.addf %197, %198 : vector<8x32xf32>
    %200 = arith.truncf %199 : vector<8x32xf32> to vector<8x32xbf16>
    %cst_77 = arith.constant dense<0.000000e+00> : vector<8x128xf32>
    %201 = tpu.matmul %200, %39, %cst_77 {dimension_numbers = #tpu.dot_dimension_numbers<[1], [0], [0], [1], [0, 0, 1, 1], [], []>} : vector<8x32xbf16>, vector<32x128xbf16>, vector<8x128xf32> -> vector<8x128xf32>
    %202 = vector.broadcast %27 : vector<1x128xf32> to vector<8x128xf32>
    %203 = arith.addf %201, %202 : vector<8x128xf32>
    %cst_78 = arith.constant 0.000000e+00 : f32
    %204 = vector.broadcast %cst_78 : f32 to vector<8x128xf32>
    %205 = arith.maximumf %203, %204 : vector<8x128xf32>
    %206 = arith.truncf %205 : vector<8x128xf32> to vector<8x128xbf16>
    %cst_79 = arith.constant dense<0.000000e+00> : vector<8x32xf32>
    %207 = tpu.matmul %206, %41, %cst_79 {dimension_numbers = #tpu.dot_dimension_numbers<[1], [0], [0], [1], [0, 0, 1, 1], [], []>} : vector<8x128xbf16>, vector<128x32xbf16>, vector<8x32xf32> -> vector<8x32xf32>
    %208 = arith.addf %179, %207 : vector<8x32xf32>
    %209 = vector.broadcast %29 : vector<1x32xf32> to vector<8x32xf32>
    %210 = arith.addf %208, %209 : vector<8x32xf32>
    %c1 = arith.constant 1 : index
    %c0_80 = arith.constant 0 : index
    %c0_81 = arith.constant 0 : index
    %211 = vector.load %arg5[%c1, %c0_80, %c0_81] : memref<2x1x32xf32, #tpu.memory_space<vmem>>, vector<1x1x32xf32>
    %212 = vector.shape_cast %211 : vector<1x1x32xf32> to vector<1x32xf32>
    %c1_82 = arith.constant 1 : index
    %c0_83 = arith.constant 0 : index
    %c0_84 = arith.constant 0 : index
    %213 = vector.load %arg6[%c1_82, %c0_83, %c0_84] : memref<2x1x32xf32, #tpu.memory_space<vmem>>, vector<1x1x32xf32>
    %214 = vector.shape_cast %213 : vector<1x1x32xf32> to vector<1x32xf32>
    %c1_85 = arith.constant 1 : index
    %c0_86 = arith.constant 0 : index
    %c0_87 = arith.constant 0 : index
    %215 = vector.load %arg12[%c1_85, %c0_86, %c0_87] : memref<2x1x32xf32, #tpu.memory_space<vmem>>, vector<1x1x32xf32>
    %216 = vector.shape_cast %215 : vector<1x1x32xf32> to vector<1x32xf32>
    %c1_88 = arith.constant 1 : index
    %c0_89 = arith.constant 0 : index
    %c0_90 = arith.constant 0 : index
    %217 = vector.load %arg13[%c1_88, %c0_89, %c0_90] : memref<2x1x32xf32, #tpu.memory_space<vmem>>, vector<1x1x32xf32>
    %218 = vector.shape_cast %217 : vector<1x1x32xf32> to vector<1x32xf32>
    %c1_91 = arith.constant 1 : index
    %c0_92 = arith.constant 0 : index
    %c0_93 = arith.constant 0 : index
    %219 = vector.load %arg11[%c1_91, %c0_92, %c0_93] : memref<2x1x32xf32, #tpu.memory_space<vmem>>, vector<1x1x32xf32>
    %220 = vector.shape_cast %219 : vector<1x1x32xf32> to vector<1x32xf32>
    %c1_94 = arith.constant 1 : index
    %c0_95 = arith.constant 0 : index
    %c0_96 = arith.constant 0 : index
    %221 = vector.load %arg15[%c1_94, %c0_95, %c0_96] : memref<2x1x128xf32, #tpu.memory_space<vmem>>, vector<1x1x128xf32>
    %222 = vector.shape_cast %221 : vector<1x1x128xf32> to vector<1x128xf32>
    %c1_97 = arith.constant 1 : index
    %c0_98 = arith.constant 0 : index
    %c0_99 = arith.constant 0 : index
    %223 = vector.load %arg17[%c1_97, %c0_98, %c0_99] : memref<2x1x32xf32, #tpu.memory_space<vmem>>, vector<1x1x32xf32>
    %224 = vector.shape_cast %223 : vector<1x1x32xf32> to vector<1x32xf32>
    %c1_100 = arith.constant 1 : index
    %c0_101 = arith.constant 0 : index
    %c0_102 = arith.constant 0 : index
    %225 = vector.load %arg7[%c1_100, %c0_101, %c0_102] : memref<2x32x32xbf16, #tpu.memory_space<vmem>>, vector<1x32x32xbf16>
    %226 = vector.shape_cast %225 : vector<1x32x32xbf16> to vector<32x32xbf16>
    %c1_103 = arith.constant 1 : index
    %c0_104 = arith.constant 0 : index
    %c0_105 = arith.constant 0 : index
    %227 = vector.load %arg8[%c1_103, %c0_104, %c0_105] : memref<2x32x32xbf16, #tpu.memory_space<vmem>>, vector<1x32x32xbf16>
    %228 = vector.shape_cast %227 : vector<1x32x32xbf16> to vector<32x32xbf16>
    %c1_106 = arith.constant 1 : index
    %c0_107 = arith.constant 0 : index
    %c0_108 = arith.constant 0 : index
    %229 = vector.load %arg9[%c1_106, %c0_107, %c0_108] : memref<2x32x32xbf16, #tpu.memory_space<vmem>>, vector<1x32x32xbf16>
    %230 = vector.shape_cast %229 : vector<1x32x32xbf16> to vector<32x32xbf16>
    %c1_109 = arith.constant 1 : index
    %c0_110 = arith.constant 0 : index
    %c0_111 = arith.constant 0 : index
    %231 = vector.load %arg10[%c1_109, %c0_110, %c0_111] : memref<2x32x32xbf16, #tpu.memory_space<vmem>>, vector<1x32x32xbf16>
    %232 = vector.shape_cast %231 : vector<1x32x32xbf16> to vector<32x32xbf16>
    %c1_112 = arith.constant 1 : index
    %c0_113 = arith.constant 0 : index
    %c0_114 = arith.constant 0 : index
    %233 = vector.load %arg14[%c1_112, %c0_113, %c0_114] : memref<2x32x128xbf16, #tpu.memory_space<vmem>>, vector<1x32x128xbf16>
    %234 = vector.shape_cast %233 : vector<1x32x128xbf16> to vector<32x128xbf16>
    %c1_115 = arith.constant 1 : index
    %c0_116 = arith.constant 0 : index
    %c0_117 = arith.constant 0 : index
    %235 = vector.load %arg16[%c1_115, %c0_116, %c0_117] : memref<2x128x32xbf16, #tpu.memory_space<vmem>>, vector<1x128x32xbf16>
    %236 = vector.shape_cast %235 : vector<1x128x32xbf16> to vector<128x32xbf16>
    %cst_118 = arith.constant dense<0.000000e+00> : vector<8xf32>
    %237 = vector.multi_reduction <add>, %210, %cst_118 [1] : vector<8x32xf32> to vector<8xf32>
    %238 = vector.shape_cast %237 : vector<8xf32> to vector<8x1xf32>
    %cst_119 = arith.constant 3.200000e+01 : f32
    %239 = vector.broadcast %cst_119 : f32 to vector<8x1xf32>
    %240 = arith.divf %238, %239 : vector<8x1xf32>
    %241 = vector.broadcast %240 : vector<8x1xf32> to vector<8x32xf32>
    %242 = arith.subf %210, %241 : vector<8x32xf32>
    %243 = arith.mulf %242, %242 : vector<8x32xf32>
    %cst_120 = arith.constant dense<0.000000e+00> : vector<8xf32>
    %244 = vector.multi_reduction <add>, %243, %cst_120 [1] : vector<8x32xf32> to vector<8xf32>
    %245 = vector.shape_cast %244 : vector<8xf32> to vector<8x1xf32>
    %cst_121 = arith.constant 3.200000e+01 : f32
    %246 = vector.broadcast %cst_121 : f32 to vector<8x1xf32>
    %247 = arith.divf %245, %246 : vector<8x1xf32>
    %cst_122 = arith.constant 9.99999974E-6 : f32
    %248 = vector.broadcast %cst_122 : f32 to vector<8x1xf32>
    %249 = arith.addf %247, %248 : vector<8x1xf32>
    %250 = math.rsqrt %249 : vector<8x1xf32>
    %251 = vector.broadcast %250 : vector<8x1xf32> to vector<8x32xf32>
    %252 = arith.mulf %242, %251 : vector<8x32xf32>
    %253 = vector.broadcast %212 : vector<1x32xf32> to vector<8x32xf32>
    %254 = arith.mulf %252, %253 : vector<8x32xf32>
    %255 = vector.broadcast %214 : vector<1x32xf32> to vector<8x32xf32>
    %256 = arith.addf %254, %255 : vector<8x32xf32>
    %257 = arith.truncf %210 : vector<8x32xf32> to vector<8x32xbf16>
    %258 = arith.truncf %256 : vector<8x32xf32> to vector<8x32xbf16>
    %cst_123 = arith.constant dense<0.000000e+00> : vector<8x32xf32>
    %259 = tpu.matmul %258, %226, %cst_123 {dimension_numbers = #tpu.dot_dimension_numbers<[1], [0], [0], [1], [0, 0, 1, 1], [], []>} : vector<8x32xbf16>, vector<32x32xbf16>, vector<8x32xf32> -> vector<8x32xf32>
    %260 = vector.extract_strided_slice %259 {offsets = [0, 0], sizes = [8, 16], strides = [1, 1]} : vector<8x32xf32> to vector<8x16xf32>
    %261 = vector.extract_strided_slice %259 {offsets = [0, 16], sizes = [8, 16], strides = [1, 1]} : vector<8x32xf32> to vector<8x16xf32>
    %262 = arith.mulf %260, %5 : vector<8x16xf32>
    %263 = arith.mulf %261, %6 : vector<8x16xf32>
    %264 = arith.subf %262, %263 : vector<8x16xf32>
    %265 = arith.mulf %261, %5 : vector<8x16xf32>
    %266 = arith.mulf %260, %6 : vector<8x16xf32>
    %267 = arith.addf %265, %266 : vector<8x16xf32>
    %268 = tpu.concatenate %264, %267 in 1 : vector<8x16xf32>, vector<8x16xf32> -> vector<8x32xf32>
    %cst_124 = arith.constant dense<0.000000e+00> : vector<8x32xf32>
    %269 = tpu.matmul %257, %228, %cst_124 {dimension_numbers = #tpu.dot_dimension_numbers<[1], [0], [0], [1], [0, 0, 1, 1], [], []>} : vector<8x32xbf16>, vector<32x32xbf16>, vector<8x32xf32> -> vector<8x32xf32>
    %270 = vector.extract_strided_slice %269 {offsets = [0, 0], sizes = [8, 16], strides = [1, 1]} : vector<8x32xf32> to vector<8x16xf32>
    %271 = vector.extract_strided_slice %269 {offsets = [0, 16], sizes = [8, 16], strides = [1, 1]} : vector<8x32xf32> to vector<8x16xf32>
    %272 = arith.mulf %270, %5 : vector<8x16xf32>
    %273 = arith.mulf %271, %6 : vector<8x16xf32>
    %274 = arith.subf %272, %273 : vector<8x16xf32>
    %275 = arith.mulf %271, %5 : vector<8x16xf32>
    %276 = arith.mulf %270, %6 : vector<8x16xf32>
    %277 = arith.addf %275, %276 : vector<8x16xf32>
    %278 = tpu.concatenate %274, %277 in 1 : vector<8x16xf32>, vector<8x16xf32> -> vector<8x32xf32>
    %cst_125 = arith.constant dense<0.000000e+00> : vector<8x32xf32>
    %279 = tpu.matmul %257, %230, %cst_125 {dimension_numbers = #tpu.dot_dimension_numbers<[1], [0], [0], [1], [0, 0, 1, 1], [], []>} : vector<8x32xbf16>, vector<32x32xbf16>, vector<8x32xf32> -> vector<8x32xf32>
    %cst_126 = arith.constant dense<0.000000e+00> : vector<64x32xf32>
    %280 = tpu.matmul %0, %228, %cst_126 {dimension_numbers = #tpu.dot_dimension_numbers<[1], [0], [0], [1], [0, 0, 1, 1], [], []>} : vector<64x32xbf16>, vector<32x32xbf16>, vector<64x32xf32> -> vector<64x32xf32>
    %281 = vector.extract_strided_slice %280 {offsets = [0, 0], sizes = [64, 16], strides = [1, 1]} : vector<64x32xf32> to vector<64x16xf32>
    %282 = vector.extract_strided_slice %280 {offsets = [0, 16], sizes = [64, 16], strides = [1, 1]} : vector<64x32xf32> to vector<64x16xf32>
    %283 = arith.mulf %281, %7 : vector<64x16xf32>
    %284 = arith.mulf %282, %8 : vector<64x16xf32>
    %285 = arith.subf %283, %284 : vector<64x16xf32>
    %286 = arith.mulf %282, %7 : vector<64x16xf32>
    %287 = arith.mulf %281, %8 : vector<64x16xf32>
    %288 = arith.addf %286, %287 : vector<64x16xf32>
    %289 = tpu.concatenate %285, %288 in 1 : vector<64x16xf32>, vector<64x16xf32> -> vector<64x32xf32>
    %290 = vector.shape_cast %289 : vector<64x32xf32> to vector<8x8x32xf32>
    %cst_127 = arith.constant dense<0.000000e+00> : vector<64x32xf32>
    %291 = tpu.matmul %0, %230, %cst_127 {dimension_numbers = #tpu.dot_dimension_numbers<[1], [0], [0], [1], [0, 0, 1, 1], [], []>} : vector<64x32xbf16>, vector<32x32xbf16>, vector<64x32xf32> -> vector<64x32xf32>
    %292 = vector.shape_cast %291 : vector<64x32xf32> to vector<8x8x32xf32>
    %293 = vector.extract_strided_slice %268 {offsets = [0, 0], sizes = [8, 16], strides = [1, 1]} : vector<8x32xf32> to vector<8x16xf32>
    %294 = vector.extract_strided_slice %278 {offsets = [0, 0], sizes = [8, 16], strides = [1, 1]} : vector<8x32xf32> to vector<8x16xf32>
    %295 = arith.mulf %293, %294 : vector<8x16xf32>
    %cst_128 = arith.constant dense<0.000000e+00> : vector<8xf32>
    %296 = vector.multi_reduction <add>, %295, %cst_128 [1] : vector<8x16xf32> to vector<8xf32>
    %297 = vector.shape_cast %296 : vector<8xf32> to vector<8x1xf32>
    %cst_129 = arith.constant 2.500000e-01 : f32
    %298 = vector.broadcast %cst_129 : f32 to vector<8x1xf32>
    %299 = arith.mulf %297, %298 : vector<8x1xf32>
    %300 = vector.shape_cast %293 : vector<8x16xf32> to vector<8x1x16xf32>
    %301 = vector.extract_strided_slice %290 {offsets = [0, 0, 0], sizes = [8, 8, 16], strides = [1, 1, 1]} : vector<8x8x32xf32> to vector<8x8x16xf32>
    %302 = vector.broadcast %300 : vector<8x1x16xf32> to vector<8x8x16xf32>
    %303 = arith.mulf %302, %301 : vector<8x8x16xf32>
    %cst_130 = arith.constant dense<0.000000e+00> : vector<8x8xf32>
    %304 = vector.multi_reduction <add>, %303, %cst_130 [2] : vector<8x8x16xf32> to vector<8x8xf32>
    %cst_131 = arith.constant 2.500000e-01 : f32
    %305 = vector.broadcast %cst_131 : f32 to vector<8x8xf32>
    %306 = arith.mulf %304, %305 : vector<8x8xf32>
    %307 = arith.addf %306, %14 : vector<8x8xf32>
    %cst_132 = arith.constant dense<0xFF800000> : vector<8xf32>
    %308 = vector.multi_reduction <maximumf>, %307, %cst_132 [1] : vector<8x8xf32> to vector<8xf32>
    %309 = vector.shape_cast %308 : vector<8xf32> to vector<8x1xf32>
    %310 = arith.maximumf %309, %299 : vector<8x1xf32>
    %311 = arith.subf %299, %310 : vector<8x1xf32>
    %312 = math.exp %311 : vector<8x1xf32>
    %313 = vector.broadcast %310 : vector<8x1xf32> to vector<8x8xf32>
    %314 = arith.subf %307, %313 : vector<8x8xf32>
    %315 = math.exp %314 : vector<8x8xf32>
    %cst_133 = arith.constant dense<0.000000e+00> : vector<8xf32>
    %316 = vector.multi_reduction <add>, %315, %cst_133 [1] : vector<8x8xf32> to vector<8xf32>
    %317 = vector.shape_cast %316 : vector<8xf32> to vector<8x1xf32>
    %318 = arith.addf %312, %317 : vector<8x1xf32>
    %319 = tpu.reciprocal %318 {approx = true} : vector<8x1xf32> -> vector<8x1xf32>
    %320 = vector.extract_strided_slice %279 {offsets = [0, 0], sizes = [8, 16], strides = [1, 1]} : vector<8x32xf32> to vector<8x16xf32>
    %321 = vector.broadcast %312 : vector<8x1xf32> to vector<8x16xf32>
    %322 = arith.mulf %321, %320 : vector<8x16xf32>
    %323 = vector.shape_cast %315 : vector<8x8xf32> to vector<8x8x1xf32>
    %324 = vector.extract_strided_slice %292 {offsets = [0, 0, 0], sizes = [8, 8, 16], strides = [1, 1, 1]} : vector<8x8x32xf32> to vector<8x8x16xf32>
    %325 = vector.broadcast %323 : vector<8x8x1xf32> to vector<8x8x16xf32>
    %326 = arith.mulf %325, %324 : vector<8x8x16xf32>
    %cst_134 = arith.constant dense<0.000000e+00> : vector<8x16xf32>
    %327 = vector.multi_reduction <add>, %326, %cst_134 [1] : vector<8x8x16xf32> to vector<8x16xf32>
    %328 = arith.addf %322, %327 : vector<8x16xf32>
    %329 = vector.broadcast %319 : vector<8x1xf32> to vector<8x16xf32>
    %330 = arith.mulf %328, %329 : vector<8x16xf32>
    %331 = vector.extract_strided_slice %268 {offsets = [0, 16], sizes = [8, 16], strides = [1, 1]} : vector<8x32xf32> to vector<8x16xf32>
    %332 = vector.extract_strided_slice %278 {offsets = [0, 16], sizes = [8, 16], strides = [1, 1]} : vector<8x32xf32> to vector<8x16xf32>
    %333 = arith.mulf %331, %332 : vector<8x16xf32>
    %cst_135 = arith.constant dense<0.000000e+00> : vector<8xf32>
    %334 = vector.multi_reduction <add>, %333, %cst_135 [1] : vector<8x16xf32> to vector<8xf32>
    %335 = vector.shape_cast %334 : vector<8xf32> to vector<8x1xf32>
    %cst_136 = arith.constant 2.500000e-01 : f32
    %336 = vector.broadcast %cst_136 : f32 to vector<8x1xf32>
    %337 = arith.mulf %335, %336 : vector<8x1xf32>
    %338 = vector.shape_cast %331 : vector<8x16xf32> to vector<8x1x16xf32>
    %339 = vector.extract_strided_slice %290 {offsets = [0, 0, 16], sizes = [8, 8, 16], strides = [1, 1, 1]} : vector<8x8x32xf32> to vector<8x8x16xf32>
    %340 = vector.broadcast %338 : vector<8x1x16xf32> to vector<8x8x16xf32>
    %341 = arith.mulf %340, %339 : vector<8x8x16xf32>
    %cst_137 = arith.constant dense<0.000000e+00> : vector<8x8xf32>
    %342 = vector.multi_reduction <add>, %341, %cst_137 [2] : vector<8x8x16xf32> to vector<8x8xf32>
    %cst_138 = arith.constant 2.500000e-01 : f32
    %343 = vector.broadcast %cst_138 : f32 to vector<8x8xf32>
    %344 = arith.mulf %342, %343 : vector<8x8xf32>
    %345 = arith.addf %344, %14 : vector<8x8xf32>
    %cst_139 = arith.constant dense<0xFF800000> : vector<8xf32>
    %346 = vector.multi_reduction <maximumf>, %345, %cst_139 [1] : vector<8x8xf32> to vector<8xf32>
    %347 = vector.shape_cast %346 : vector<8xf32> to vector<8x1xf32>
    %348 = arith.maximumf %347, %337 : vector<8x1xf32>
    %349 = arith.subf %337, %348 : vector<8x1xf32>
    %350 = math.exp %349 : vector<8x1xf32>
    %351 = vector.broadcast %348 : vector<8x1xf32> to vector<8x8xf32>
    %352 = arith.subf %345, %351 : vector<8x8xf32>
    %353 = math.exp %352 : vector<8x8xf32>
    %cst_140 = arith.constant dense<0.000000e+00> : vector<8xf32>
    %354 = vector.multi_reduction <add>, %353, %cst_140 [1] : vector<8x8xf32> to vector<8xf32>
    %355 = vector.shape_cast %354 : vector<8xf32> to vector<8x1xf32>
    %356 = arith.addf %350, %355 : vector<8x1xf32>
    %357 = tpu.reciprocal %356 {approx = true} : vector<8x1xf32> -> vector<8x1xf32>
    %358 = vector.extract_strided_slice %279 {offsets = [0, 16], sizes = [8, 16], strides = [1, 1]} : vector<8x32xf32> to vector<8x16xf32>
    %359 = vector.broadcast %350 : vector<8x1xf32> to vector<8x16xf32>
    %360 = arith.mulf %359, %358 : vector<8x16xf32>
    %361 = vector.shape_cast %353 : vector<8x8xf32> to vector<8x8x1xf32>
    %362 = vector.extract_strided_slice %292 {offsets = [0, 0, 16], sizes = [8, 8, 16], strides = [1, 1, 1]} : vector<8x8x32xf32> to vector<8x8x16xf32>
    %363 = vector.broadcast %361 : vector<8x8x1xf32> to vector<8x8x16xf32>
    %364 = arith.mulf %363, %362 : vector<8x8x16xf32>
    %cst_141 = arith.constant dense<0.000000e+00> : vector<8x16xf32>
    %365 = vector.multi_reduction <add>, %364, %cst_141 [1] : vector<8x8x16xf32> to vector<8x16xf32>
    %366 = arith.addf %360, %365 : vector<8x16xf32>
    %367 = vector.broadcast %357 : vector<8x1xf32> to vector<8x16xf32>
    %368 = arith.mulf %366, %367 : vector<8x16xf32>
    %369 = tpu.concatenate %330, %368 in 1 : vector<8x16xf32>, vector<8x16xf32> -> vector<8x32xf32>
    %370 = arith.truncf %369 : vector<8x32xf32> to vector<8x32xbf16>
    %cst_142 = arith.constant dense<0.000000e+00> : vector<8x32xf32>
    %371 = tpu.matmul %370, %232, %cst_142 {dimension_numbers = #tpu.dot_dimension_numbers<[1], [0], [0], [1], [0, 0, 1, 1], [], []>} : vector<8x32xbf16>, vector<32x32xbf16>, vector<8x32xf32> -> vector<8x32xf32>
    %372 = arith.addf %210, %371 : vector<8x32xf32>
    %373 = vector.broadcast %220 : vector<1x32xf32> to vector<8x32xf32>
    %374 = arith.addf %372, %373 : vector<8x32xf32>
    %cst_143 = arith.constant dense<0.000000e+00> : vector<8xf32>
    %375 = vector.multi_reduction <add>, %374, %cst_143 [1] : vector<8x32xf32> to vector<8xf32>
    %376 = vector.shape_cast %375 : vector<8xf32> to vector<8x1xf32>
    %cst_144 = arith.constant 3.200000e+01 : f32
    %377 = vector.broadcast %cst_144 : f32 to vector<8x1xf32>
    %378 = arith.divf %376, %377 : vector<8x1xf32>
    %379 = vector.broadcast %378 : vector<8x1xf32> to vector<8x32xf32>
    %380 = arith.subf %374, %379 : vector<8x32xf32>
    %381 = arith.mulf %380, %380 : vector<8x32xf32>
    %cst_145 = arith.constant dense<0.000000e+00> : vector<8xf32>
    %382 = vector.multi_reduction <add>, %381, %cst_145 [1] : vector<8x32xf32> to vector<8xf32>
    %383 = vector.shape_cast %382 : vector<8xf32> to vector<8x1xf32>
    %cst_146 = arith.constant 3.200000e+01 : f32
    %384 = vector.broadcast %cst_146 : f32 to vector<8x1xf32>
    %385 = arith.divf %383, %384 : vector<8x1xf32>
    %cst_147 = arith.constant 9.99999974E-6 : f32
    %386 = vector.broadcast %cst_147 : f32 to vector<8x1xf32>
    %387 = arith.addf %385, %386 : vector<8x1xf32>
    %388 = math.rsqrt %387 : vector<8x1xf32>
    %389 = vector.broadcast %388 : vector<8x1xf32> to vector<8x32xf32>
    %390 = arith.mulf %380, %389 : vector<8x32xf32>
    %391 = vector.broadcast %216 : vector<1x32xf32> to vector<8x32xf32>
    %392 = arith.mulf %390, %391 : vector<8x32xf32>
    %393 = vector.broadcast %218 : vector<1x32xf32> to vector<8x32xf32>
    %394 = arith.addf %392, %393 : vector<8x32xf32>
    %395 = arith.truncf %394 : vector<8x32xf32> to vector<8x32xbf16>
    %cst_148 = arith.constant dense<0.000000e+00> : vector<8x128xf32>
    %396 = tpu.matmul %395, %234, %cst_148 {dimension_numbers = #tpu.dot_dimension_numbers<[1], [0], [0], [1], [0, 0, 1, 1], [], []>} : vector<8x32xbf16>, vector<32x128xbf16>, vector<8x128xf32> -> vector<8x128xf32>
    %397 = vector.broadcast %222 : vector<1x128xf32> to vector<8x128xf32>
    %398 = arith.addf %396, %397 : vector<8x128xf32>
    %cst_149 = arith.constant 0.000000e+00 : f32
    %399 = vector.broadcast %cst_149 : f32 to vector<8x128xf32>
    %400 = arith.maximumf %398, %399 : vector<8x128xf32>
    %401 = arith.truncf %400 : vector<8x128xf32> to vector<8x128xbf16>
    %cst_150 = arith.constant dense<0.000000e+00> : vector<8x32xf32>
    %402 = tpu.matmul %401, %236, %cst_150 {dimension_numbers = #tpu.dot_dimension_numbers<[1], [0], [0], [1], [0, 0, 1, 1], [], []>} : vector<8x128xbf16>, vector<128x32xbf16>, vector<8x32xf32> -> vector<8x32xf32>
    %403 = arith.addf %374, %402 : vector<8x32xf32>
    %404 = vector.broadcast %224 : vector<1x32xf32> to vector<8x32xf32>
    %405 = arith.addf %403, %404 : vector<8x32xf32>
    %c0_151 = arith.constant 0 : index
    %c0_152 = arith.constant 0 : index
    %406 = vector.load %arg18[%c0_151, %c0_152] : memref<8x32xf32, #tpu.memory_space<vmem>>, vector<8x32xf32>
    tpu.vector_store %arg18[%c0_151, %c0_152], %405 {strides = array<i32>} : memref<8x32xf32, #tpu.memory_space<vmem>>, vector<8x32xf32>,
    return
  }
  func.func @transform_0(%arg0: i32) -> (i32, i32) {
    %c0_i32 = arith.constant 0 : i32
    %c0_i32_0 = arith.constant 0 : i32
    return %arg0, %c0_i32 : i32, i32
  }
  func.func @transform_1(%arg0: i32) -> (i32, i32) {
    %c0_i32 = arith.constant 0 : i32
    %c0_i32_0 = arith.constant 0 : i32
    return %arg0, %c0_i32 : i32, i32
  }
  func.func @transform_2(%arg0: i32) -> (i32, i32) {
    %c0_i32 = arith.constant 0 : i32
    %c0_i32_0 = arith.constant 0 : i32
    return %arg0, %c0_i32 : i32, i32
  }
  func.func @transform_3(%arg0: i32) -> (i32, i32) {
    %c0_i32 = arith.constant 0 : i32
    %c0_i32_0 = arith.constant 0 : i32
    return %arg0, %c0_i32 : i32, i32
  }
  func.func @transform_4(%arg0: i32) -> (i32, i32, i32) {
    %c0_i32 = arith.constant 0 : i32
    %c0_i32_0 = arith.constant 0 : i32
    %c0_i32_1 = arith.constant 0 : i32
    %c0_i32_2 = arith.constant 0 : i32
    return %c0_i32, %c0_i32_0, %c0_i32_1 : i32, i32, i32
  }
  func.func @transform_5(%arg0: i32) -> (i32, i32, i32) {
    %c0_i32 = arith.constant 0 : i32
    %c0_i32_0 = arith.constant 0 : i32
    %c0_i32_1 = arith.constant 0 : i32
    %c0_i32_2 = arith.constant 0 : i32
    return %c0_i32, %c0_i32_0, %c0_i32_1 : i32, i32, i32
  }
  func.func @transform_6(%arg0: i32) -> (i32, i32, i32) {
    %c0_i32 = arith.constant 0 : i32
    %c0_i32_0 = arith.constant 0 : i32
    %c0_i32_1 = arith.constant 0 : i32
    %c0_i32_2 = arith.constant 0 : i32
    return %c0_i32, %c0_i32_0, %c0_i32_1 : i32, i32, i32
  }
  func.func @transform_7(%arg0: i32) -> (i32, i32, i32) {
    %c0_i32 = arith.constant 0 : i32
    %c0_i32_0 = arith.constant 0 : i32
    %c0_i32_1 = arith.constant 0 : i32
    %c0_i32_2 = arith.constant 0 : i32
    return %c0_i32, %c0_i32_0, %c0_i32_1 : i32, i32, i32
  }
  func.func @transform_8(%arg0: i32) -> (i32, i32, i32) {
    %c0_i32 = arith.constant 0 : i32
    %c0_i32_0 = arith.constant 0 : i32
    %c0_i32_1 = arith.constant 0 : i32
    %c0_i32_2 = arith.constant 0 : i32
    return %c0_i32, %c0_i32_0, %c0_i32_1 : i32, i32, i32
  }
  func.func @transform_9(%arg0: i32) -> (i32, i32, i32) {
    %c0_i32 = arith.constant 0 : i32
    %c0_i32_0 = arith.constant 0 : i32
    %c0_i32_1 = arith.constant 0 : i32
    %c0_i32_2 = arith.constant 0 : i32
    return %c0_i32, %c0_i32_0, %c0_i32_1 : i32, i32, i32
  }
  func.func @transform_10(%arg0: i32) -> (i32, i32, i32) {
    %c0_i32 = arith.constant 0 : i32
    %c0_i32_0 = arith.constant 0 : i32
    %c0_i32_1 = arith.constant 0 : i32
    %c0_i32_2 = arith.constant 0 : i32
    return %c0_i32, %c0_i32_0, %c0_i32_1 : i32, i32, i32
  }
  func.func @transform_11(%arg0: i32) -> (i32, i32, i32) {
    %c0_i32 = arith.constant 0 : i32
    %c0_i32_0 = arith.constant 0 : i32
    %c0_i32_1 = arith.constant 0 : i32
    %c0_i32_2 = arith.constant 0 : i32
    return %c0_i32, %c0_i32_0, %c0_i32_1 : i32, i32, i32
  }
  func.func @transform_12(%arg0: i32) -> (i32, i32, i32) {
    %c0_i32 = arith.constant 0 : i32
    %c0_i32_0 = arith.constant 0 : i32
    %c0_i32_1 = arith.constant 0 : i32
    %c0_i32_2 = arith.constant 0 : i32
    return %c0_i32, %c0_i32_0, %c0_i32_1 : i32, i32, i32
  }
  func.func @transform_13(%arg0: i32) -> (i32, i32, i32) {
    %c0_i32 = arith.constant 0 : i32
    %c0_i32_0 = arith.constant 0 : i32
    %c0_i32_1 = arith.constant 0 : i32
    %c0_i32_2 = arith.constant 0 : i32
    return %c0_i32, %c0_i32_0, %c0_i32_1 : i32, i32, i32
  }
  func.func @transform_14(%arg0: i32) -> (i32, i32, i32) {
    %c0_i32 = arith.constant 0 : i32
    %c0_i32_0 = arith.constant 0 : i32
    %c0_i32_1 = arith.constant 0 : i32
    %c0_i32_2 = arith.constant 0 : i32
    return %c0_i32, %c0_i32_0, %c0_i32_1 : i32, i32, i32
  }
  func.func @transform_15(%arg0: i32) -> (i32, i32, i32) {
    %c0_i32 = arith.constant 0 : i32
    %c0_i32_0 = arith.constant 0 : i32
    %c0_i32_1 = arith.constant 0 : i32
    %c0_i32_2 = arith.constant 0 : i32
    return %c0_i32, %c0_i32_0, %c0_i32_1 : i32, i32, i32
  }
  func.func @transform_16(%arg0: i32) -> (i32, i32, i32) {
    %c0_i32 = arith.constant 0 : i32
    %c0_i32_0 = arith.constant 0 : i32
    %c0_i32_1 = arith.constant 0 : i32
    %c0_i32_2 = arith.constant 0 : i32
    return %c0_i32, %c0_i32_0, %c0_i32_1 : i32, i32, i32
  }
  func.func @transform_17(%arg0: i32) -> (i32, i32) {
    %c0_i32 = arith.constant 0 : i32
    %c0_i32_0 = arith.constant 0 : i32
    return %arg0, %c0_i32 : i32, i32
  }
}

</mosaic_0001>

<llo_original>
// kernel: neg.1
$region0: #{neg.1}
  #allocation0 [shape = 's32[1]{0}', space=sflag, size = 0x4, scoped, tag = 'scoped memory for neg.1']
  %s0 = inlined_call_operand.vmem [shape: f32[2,8,16], index: 0, kind: input, shape index: {}]
  %s1 = inlined_call_operand.vmem [shape: f32[2,8,16], index: 1, kind: output, shape index: {}]
  %v2 = vld [vmem:[%s0] sm:$0xff]
  %3 = xla_tuple %v2
  %4 = xla_tuple %3
  %v5 = vxor.u32 %v2, 2147483648
  %6 = xla_tuple %v5
  %7 = vst [vmem:[%s1] sm:$0xff] %v5
  %s8 = scalar_lea.vmem %s0, 8
  %v9 = vld [vmem:[%s8] sm:$0xff]
  %10 = xla_tuple %v9
  %11 = xla_tuple %10
  %v12 = vxor.u32 %v9, 2147483648
  %13 = xla_tuple %v12
  %s14 = scalar_lea.vmem %s1, 8
  %15 = vst [vmem:[%s14] sm:$0xff] %v12

// kernel: ulto_decoder2d_forward.1
$region0: #{ulto_decoder2d_forward.1}
  #allocation0 [shape = 'u32[]', space=smem, size = 0x4, offset = 0x4, fixed_abs, tag = 'smem constant byte address 0x4 - core index']
  #allocation1 [shape = 'u32[72,128]{1,0:T(1,128)}', space=vmem, size = 0x9000, scoped, tag = 'internal scratch']
  %s0 = inlined_call_operand.vmem [shape: f32[16,32], index: 0, kind: input, shape index: {}]
  %s1 = inlined_call_operand.vmem [shape: bf16[128,32], index: 1, kind: input, shape index: {}]
  %s2 = inlined_call_operand.vmem [shape: bf16[16,16], index: 2, kind: input, shape index: {}]
  %s3 = inlined_call_operand.vmem [shape: bf16[128,16], index: 3, kind: input, shape index: {}]
  %s4 = inlined_call_operand.vmem [shape: f32[2,1,32], index: 4, kind: input, shape index: {}]
  %s5 = inlined_call_operand.vmem [shape: f32[2,1,32], index: 5, kind: input, shape index: {}]
  %s6 = inlined_call_operand.vmem [shape: bf16[2,32,32], index: 6, kind: input, shape index: {}]
  %s7 = inlined_call_operand.vmem [shape: bf16[2,32,32], index: 7, kind: input, shape index: {}]
  %s8 = inlined_call_operand.vmem [shape: bf16[2,32,32], index: 8, kind: input, shape index: {}]
  %s9 = inlined_call_operand.vmem [shape: bf16[2,32,32], index: 9, kind: input, shape index: {}]
  %s10 = inlined_call_operand.vmem [shape: f32[2,1,32], index: 10, kind: input, shape index: {}]
  %s11 = inlined_call_operand.vmem [shape: f32[2,1,32], index: 11, kind: input, shape index: {}]
  %s12 = inlined_call_operand.vmem [shape: f32[2,1,32], index: 12, kind: input, shape index: {}]
  %s13 = inlined_call_operand.vmem [shape: bf16[2,32,128], index: 13, kind: input, shape index: {}]
  %s14 = inlined_call_operand.vmem [shape: f32[2,1,128], index: 14, kind: input, shape index: {}]
  %s15 = inlined_call_operand.vmem [shape: bf16[2,128,32], index: 15, kind: input, shape index: {}]
  %s16 = inlined_call_operand.vmem [shape: f32[2,1,32], index: 16, kind: input, shape index: {}]
  %s17 = inlined_call_operand.vmem [shape: f32[16,32], index: 17, kind: output, shape index: {}]
  %s18 = sld [smem:[#allocation0]]
  $region101: #{ulto_decoder2d_forward.1} parent=0
    _
  %s20 = ssub.s32 1, %s18
  %s21 = scalar_select 0, %s20, %s18
  loop: start=0, step=1, limit=4
  $region2: #{ulto_decoder2d_forward.1} parent=0 // loop_pre_header
    _
  $region3: #{ulto_decoder2d_forward.1} parent=0 // loop_header
    %s23 = sphi 0, %s27
    %p24 = scmp.ge.s32.totalorder %s23, 4
    %s33 = sphi 0, %s35
    %s36 = sphi 0, %s33
    %s37 = sphi 0, %s36
    %s53 = sphi 0, %s37
    %s59 = sphi 0, %s61
    %s62 = sphi 0, %s59
    %s63 = sphi 0, %s62
    %s79 = sphi 0, %s63
    %s85 = sphi 0, %s87
    %s88 = sphi 0, %s85
    %s89 = sphi 0, %s88
    %s105 = sphi 0, %s89
    %s111 = sphi 0, %s113
    %s114 = sphi 0, %s111
    %s115 = sphi 0, %s114
    %s131 = sphi 0, %s115
    %s135 = sphi 0, %s135
    %s137 = sphi 0, %s135
    %s138 = sphi 0, %s137
    %s152 = sphi 0, %s138
    %s156 = sphi 0, %s156
    %s158 = sphi 0, %s156
    %s159 = sphi 0, %s158
    %s173 = sphi 0, %s159
    %s177 = sphi 0, %s177
    %s179 = sphi 0, %s177
    %s180 = sphi 0, %s179
    %s194 = sphi 0, %s180
    %s198 = sphi 0, %s198
    %s200 = sphi 0, %s198
    %s201 = sphi 0, %s200
    %s215 = sphi 0, %s201
    %s219 = sphi 0, %s219
    %s221 = sphi 0, %s219
    %s222 = sphi 0, %s221
    %s236 = sphi 0, %s222
    %s240 = sphi 0, %s240
    %s242 = sphi 0, %s240
    %s243 = sphi 0, %s242
    %s257 = sphi 0, %s243
    %s261 = sphi 0, %s261
    %s263 = sphi 0, %s261
    %s264 = sphi 0, %s263
    %s278 = sphi 0, %s264
    %s282 = sphi 0, %s282
    %s284 = sphi 0, %s282
    %s285 = sphi 0, %s284
    %s299 = sphi 0, %s285
    %s303 = sphi 0, %s303
    %s305 = sphi 0, %s303
    %s306 = sphi 0, %s305
    %s320 = sphi 0, %s306
    %s324 = sphi 0, %s324
    %s326 = sphi 0, %s324
    %s327 = sphi 0, %s326
    %s341 = sphi 0, %s327
    %s345 = sphi 0, %s345
    %s347 = sphi 0, %s345
    %s348 = sphi 0, %s347
    %s362 = sphi 0, %s348
    %s366 = sphi 0, %s366
    %s368 = sphi 0, %s366
    %s369 = sphi 0, %s368
    %s383 = sphi 0, %s369
    %s387 = sphi 0, %s387
    %s389 = sphi 0, %s387
    %s390 = sphi 0, %s389
    %s404 = sphi 0, %s390
    %s410 = sphi 0, %s412
    %s413 = sphi 0, %s410
    %s414 = sphi 0, %s413
    %s430 = sphi 0, %s414
  $region4: #{ulto_decoder2d_forward.1} parent=0 // loop_header_branch
    %26 = sbr.rel (%p24) target = $region8
  $region5: #{ulto_decoder2d_forward.1} parent=0 // loop_body
    %s28 = ssub.s32 %s23, 1
    %s29 = ssub.s32 %s23, 2
    %s30 = sadd.s32 %s23, 1
    %s31 = ssub.s32 %s23, %s30
    %p32 = scmp.eq.s32.totalorder %s31, 0
    %s34 = sadd.s32 %s33, 1
    %s35 = scalar_select %p32, %s33, %s34
    %p38 = pneg %p32
    %p39 = scmp.eq.s32.totalorder %s23, 1
    %p40 = por %p38, %p39
    %p41 = scmp.ne.s32.totalorder %s33, %s36
    %p42 = scmp.eq.s32.totalorder %s23, 0
    %p43 = por %p41, %p42
    %p44 = scmp.ne.s32.totalorder %s33, %s36
    %p45 = scmp.eq.s32.totalorder %s28, 1
    %p46 = por %p44, %p45
    %p47 = scmp.ne.s32.totalorder %s36, %s37
    %p48 = scmp.eq.s32.totalorder %s28, 0
    %p49 = por %p47, %p48
    %p50 = scmp.ne.s32.totalorder %s36, %s37
    %p51 = scmp.eq.s32.totalorder %s29, 1
    %p52 = por %p50, %p51
    %p54 = scmp.ne.s32.totalorder %s37, %s53
    %p55 = scmp.eq.s32.totalorder %s29, 0
    %p56 = por %p54, %p55
    %s57 = ssub.s32 %s23, %s30
    %p58 = scmp.eq.s32.totalorder %s57, 0
    %s60 = sadd.s32 %s59, 1
    %s61 = scalar_select %p58, %s59, %s60
    %p64 = pneg %p58
    %p65 = scmp.eq.s32.totalorder %s23, 1
    %p66 = por %p64, %p65
    %p67 = scmp.ne.s32.totalorder %s59, %s62
    %p68 = scmp.eq.s32.totalorder %s23, 0
    %p69 = por %p67, %p68
    %p70 = scmp.ne.s32.totalorder %s59, %s62
    %p71 = scmp.eq.s32.totalorder %s28, 1
    %p72 = por %p70, %p71
    %p73 = scmp.ne.s32.totalorder %s62, %s63
    %p74 = scmp.eq.s32.totalorder %s28, 0
    %p75 = por %p73, %p74
    %p76 = scmp.ne.s32.totalorder %s62, %s63
    %p77 = scmp.eq.s32.totalorder %s29, 1
    %p78 = por %p76, %p77
    %p80 = scmp.ne.s32.totalorder %s63, %s79
    %p81 = scmp.eq.s32.totalorder %s29, 0
    %p82 = por %p80, %p81
    %s83 = ssub.s32 %s23, %s30
    %p84 = scmp.eq.s32.totalorder %s83, 0
    %s86 = sadd.s32 %s85, 1
    %s87 = scalar_select %p84, %s85, %s86
    %p90 = pneg %p84
    %p91 = scmp.eq.s32.totalorder %s23, 1
    %p92 = por %p90, %p91
    %p93 = scmp.ne.s32.totalorder %s85, %s88
    %p94 = scmp.eq.s32.totalorder %s23, 0
    %p95 = por %p93, %p94
    %p96 = scmp.ne.s32.totalorder %s85, %s88
    %p97 = scmp.eq.s32.totalorder %s28, 1
    %p98 = por %p96, %p97
    %p99 = scmp.ne.s32.totalorder %s88, %s89
    %p100 = scmp.eq.s32.totalorder %s28, 0
    %p101 = por %p99, %p100
    %p102 = scmp.ne.s32.totalorder %s88, %s89
    %p103 = scmp.eq.s32.totalorder %s29, 1
    %p104 = por %p102, %p103
    %p106 = scmp.ne.s32.totalorder %s89, %s105
    %p107 = scmp.eq.s32.totalorder %s29, 0
    %p108 = por %p106, %p107
    %s109 = ssub.s32 %s23, %s30
    %p110 = scmp.eq.s32.totalorder %s109, 0
    %s112 = sadd.s32 %s111, 1
    %s113 = scalar_select %p110, %s111, %s112
    %p116 = pneg %p110
    %p117 = scmp.eq.s32.totalorder %s23, 1
    %p118 = por %p116, %p117
    %p119 = scmp.ne.s32.totalorder %s111, %s114
    %p120 = scmp.eq.s32.totalorder %s23, 0
    %p121 = por %p119, %p120
    %p122 = scmp.ne.s32.totalorder %s111, %s114
    %p123 = scmp.eq.s32.totalorder %s28, 1
    %p124 = por %p122, %p123
    %p125 = scmp.ne.s32.totalorder %s114, %s115
    %p126 = scmp.eq.s32.totalorder %s28, 0
    %p127 = por %p125, %p126
    %p128 = scmp.ne.s32.totalorder %s114, %s115
    %p129 = scmp.eq.s32.totalorder %s29, 1
    %p130 = por %p128, %p129
    %p132 = scmp.ne.s32.totalorder %s115, %s131
    %p133 = scmp.eq.s32.totalorder %s29, 0
    %p134 = por %p132, %p133
    %s136 = sadd.s32 %s135, 1
    %p139 = scmp.eq.s32.totalorder %s23, 1
    %p140 = scmp.ne.s32.totalorder %s135, %s137
    %p141 = scmp.eq.s32.totalorder %s23, 0
    %p142 = por %p140, %p141
    %p143 = scmp.ne.s32.totalorder %s135, %s137
    %p144 = scmp.eq.s32.totalorder %s28, 1
    %p145 = por %p143, %p144
    %p146 = scmp.ne.s32.totalorder %s137, %s138
    %p147 = scmp.eq.s32.totalorder %s28, 0
    %p148 = por %p146, %p147
    %p149 = scmp.ne.s32.totalorder %s137, %s138
    %p150 = scmp.eq.s32.totalorder %s29, 1
    %p151 = por %p149, %p150
    %p153 = scmp.ne.s32.totalorder %s138, %s152
    %p154 = scmp.eq.s32.totalorder %s29, 0
    %p155 = por %p153, %p154
    %s157 = sadd.s32 %s156, 1
    %p160 = scmp.eq.s32.totalorder %s23, 1
    %p161 = scmp.ne.s32.totalorder %s156, %s158
    %p162 = scmp.eq.s32.totalorder %s23, 0
    %p163 = por %p161, %p162
    %p164 = scmp.ne.s32.totalorder %s156, %s158
    %p165 = scmp.eq.s32.totalorder %s28, 1
    %p166 = por %p164, %p165
    %p167 = scmp.ne.s32.totalorder %s158, %s159
    %p168 = scmp.eq.s32.totalorder %s28, 0
    %p169 = por %p167, %p168
    %p170 = scmp.ne.s32.totalorder %s158, %s159
    %p171 = scmp.eq.s32.totalorder %s29, 1
    %p172 = por %p170, %p171
    %p174 = scmp.ne.s32.totalorder %s159, %s173
    %p175 = scmp.eq.s32.totalorder %s29, 0
    %p176 = por %p174, %p175
    %s178 = sadd.s32 %s177, 1
    %p181 = scmp.eq.s32.totalorder %s23, 1
    %p182 = scmp.ne.s32.totalorder %s177, %s179
    %p183 = scmp.eq.s32.totalorder %s23, 0
    %p184 = por %p182, %p183
    %p185 = scmp.ne.s32.totalorder %s177, %s179
    %p186 = scmp.eq.s32.totalorder %s28, 1
    %p187 = por %p185, %p186
    %p188 = scmp.ne.s32.totalorder %s179, %s180
    %p189 = scmp.eq.s32.totalorder %s28, 0
    %p190 = por %p188, %p189
    %p191 = scmp.ne.s32.totalorder %s179, %s180
    %p192 = scmp.eq.s32.totalorder %s29, 1
    %p193 = por %p191, %p192
    %p195 = scmp.ne.s32.totalorder %s180, %s194
    %p196 = scmp.eq.s32.totalorder %s29, 0
    %p197 = por %p195, %p196
    %s199 = sadd.s32 %s198, 1
    %p202 = scmp.eq.s32.totalorder %s23, 1
    %p203 = scmp.ne.s32.totalorder %s198, %s200
    %p204 = scmp.eq.s32.totalorder %s23, 0
    %p205 = por %p203, %p204
    %p206 = scmp.ne.s32.totalorder %s198, %s200
    %p207 = scmp.eq.s32.totalorder %s28, 1
    %p208 = por %p206, %p207
    %p209 = scmp.ne.s32.totalorder %s200, %s201
    %p210 = scmp.eq.s32.totalorder %s28, 0
    %p211 = por %p209, %p210
    %p212 = scmp.ne.s32.totalorder %s200, %s201
    %p213 = scmp.eq.s32.totalorder %s29, 1
    %p214 = por %p212, %p213
    %p216 = scmp.ne.s32.totalorder %s201, %s215
    %p217 = scmp.eq.s32.totalorder %s29, 0
    %p218 = por %p216, %p217
    %s220 = sadd.s32 %s219, 1
    %p223 = scmp.eq.s32.totalorder %s23, 1
    %p224 = scmp.ne.s32.totalorder %s219, %s221
    %p225 = scmp.eq.s32.totalorder %s23, 0
    %p226 = por %p224, %p225
    %p227 = scmp.ne.s32.totalorder %s219, %s221
    %p228 = scmp.eq.s32.totalorder %s28, 1
    %p229 = por %p227, %p228
    %p230 = scmp.ne.s32.totalorder %s221, %s222
    %p231 = scmp.eq.s32.totalorder %s28, 0
    %p232 = por %p230, %p231
    %p233 = scmp.ne.s32.totalorder %s221, %s222
    %p234 = scmp.eq.s32.totalorder %s29, 1
    %p235 = por %p233, %p234
    %p237 = scmp.ne.s32.totalorder %s222, %s236
    %p238 = scmp.eq.s32.totalorder %s29, 0
    %p239 = por %p237, %p238
    %s241 = sadd.s32 %s240, 1
    %p244 = scmp.eq.s32.totalorder %s23, 1
    %p245 = scmp.ne.s32.totalorder %s240, %s242
    %p246 = scmp.eq.s32.totalorder %s23, 0
    %p247 = por %p245, %p246
    %p248 = scmp.ne.s32.totalorder %s240, %s242
    %p249 = scmp.eq.s32.totalorder %s28, 1
    %p250 = por %p248, %p249
    %p251 = scmp.ne.s32.totalorder %s242, %s243
    %p252 = scmp.eq.s32.totalorder %s28, 0
    %p253 = por %p251, %p252
    %p254 = scmp.ne.s32.totalorder %s242, %s243
    %p255 = scmp.eq.s32.totalorder %s29, 1
    %p256 = por %p254, %p255
    %p258 = scmp.ne.s32.totalorder %s243, %s257
    %p259 = scmp.eq.s32.totalorder %s29, 0
    %p260 = por %p258, %p259
    %s262 = sadd.s32 %s261, 1
    %p265 = scmp.eq.s32.totalorder %s23, 1
    %p266 = scmp.ne.s32.totalorder %s261, %s263
    %p267 = scmp.eq.s32.totalorder %s23, 0
    %p268 = por %p266, %p267
    %p269 = scmp.ne.s32.totalorder %s261, %s263
    %p270 = scmp.eq.s32.totalorder %s28, 1
    %p271 = por %p269, %p270
    %p272 = scmp.ne.s32.totalorder %s263, %s264
    %p273 = scmp.eq.s32.totalorder %s28, 0
    %p274 = por %p272, %p273
    %p275 = scmp.ne.s32.totalorder %s263, %s264
    %p276 = scmp.eq.s32.totalorder %s29, 1
    %p277 = por %p275, %p276
    %p279 = scmp.ne.s32.totalorder %s264, %s278
    %p280 = scmp.eq.s32.totalorder %s29, 0
    %p281 = por %p279, %p280
    %s283 = sadd.s32 %s282, 1
    %p286 = scmp.eq.s32.totalorder %s23, 1
    %p287 = scmp.ne.s32.totalorder %s282, %s284
    %p288 = scmp.eq.s32.totalorder %s23, 0
    %p289 = por %p287, %p288
    %p290 = scmp.ne.s32.totalorder %s282, %s284
    %p291 = scmp.eq.s32.totalorder %s28, 1
    %p292 = por %p290, %p291
    %p293 = scmp.ne.s32.totalorder %s284, %s285
    %p294 = scmp.eq.s32.totalorder %s28, 0
    %p295 = por %p293, %p294
    %p296 = scmp.ne.s32.totalorder %s284, %s285
    %p297 = scmp.eq.s32.totalorder %s29, 1
    %p298 = por %p296, %p297
    %p300 = scmp.ne.s32.totalorder %s285, %s299
    %p301 = scmp.eq.s32.totalorder %s29, 0
    %p302 = por %p300, %p301
    %s304 = sadd.s32 %s303, 1
    %p307 = scmp.eq.s32.totalorder %s23, 1
    %p308 = scmp.ne.s32.totalorder %s303, %s305
    %p309 = scmp.eq.s32.totalorder %s23, 0
    %p310 = por %p308, %p309
    %p311 = scmp.ne.s32.totalorder %s303, %s305
    %p312 = scmp.eq.s32.totalorder %s28, 1
    %p313 = por %p311, %p312
    %p314 = scmp.ne.s32.totalorder %s305, %s306
    %p315 = scmp.eq.s32.totalorder %s28, 0
    %p316 = por %p314, %p315
    %p317 = scmp.ne.s32.totalorder %s305, %s306
    %p318 = scmp.eq.s32.totalorder %s29, 1
    %p319 = por %p317, %p318
    %p321 = scmp.ne.s32.totalorder %s306, %s320
    %p322 = scmp.eq.s32.totalorder %s29, 0
    %p323 = por %p321, %p322
    %s325 = sadd.s32 %s324, 1
    %p328 = scmp.eq.s32.totalorder %s23, 1
    %p329 = scmp.ne.s32.totalorder %s324, %s326
    %p330 = scmp.eq.s32.totalorder %s23, 0
    %p331 = por %p329, %p330
    %p332 = scmp.ne.s32.totalorder %s324, %s326
    %p333 = scmp.eq.s32.totalorder %s28, 1
    %p334 = por %p332, %p333
    %p335 = scmp.ne.s32.totalorder %s326, %s327
    %p336 = scmp.eq.s32.totalorder %s28, 0
    %p337 = por %p335, %p336
    %p338 = scmp.ne.s32.totalorder %s326, %s327
    %p339 = scmp.eq.s32.totalorder %s29, 1
    %p340 = por %p338, %p339
    %p342 = scmp.ne.s32.totalorder %s327, %s341
    %p343 = scmp.eq.s32.totalorder %s29, 0
    %p344 = por %p342, %p343
    %s346 = sadd.s32 %s345, 1
    %p349 = scmp.eq.s32.totalorder %s23, 1
    %p350 = scmp.ne.s32.totalorder %s345, %s347
    %p351 = scmp.eq.s32.totalorder %s23, 0
    %p352 = por %p350, %p351
    %p353 = scmp.ne.s32.totalorder %s345, %s347
    %p354 = scmp.eq.s32.totalorder %s28, 1
    %p355 = por %p353, %p354
    %p356 = scmp.ne.s32.totalorder %s347, %s348
    %p357 = scmp.eq.s32.totalorder %s28, 0
    %p358 = por %p356, %p357
    %p359 = scmp.ne.s32.totalorder %s347, %s348
    %p360 = scmp.eq.s32.totalorder %s29, 1
    %p361 = por %p359, %p360
    %p363 = scmp.ne.s32.totalorder %s348, %s362
    %p364 = scmp.eq.s32.totalorder %s29, 0
    %p365 = por %p363, %p364
    %s367 = sadd.s32 %s366, 1
    %p370 = scmp.eq.s32.totalorder %s23, 1
    %p371 = scmp.ne.s32.totalorder %s366, %s368
    %p372 = scmp.eq.s32.totalorder %s23, 0
    %p373 = por %p371, %p372
    %p374 = scmp.ne.s32.totalorder %s366, %s368
    %p375 = scmp.eq.s32.totalorder %s28, 1
    %p376 = por %p374, %p375
    %p377 = scmp.ne.s32.totalorder %s368, %s369
    %p378 = scmp.eq.s32.totalorder %s28, 0
    %p379 = por %p377, %p378
    %p380 = scmp.ne.s32.totalorder %s368, %s369
    %p381 = scmp.eq.s32.totalorder %s29, 1
    %p382 = por %p380, %p381
    %p384 = scmp.ne.s32.totalorder %s369, %s383
    %p385 = scmp.eq.s32.totalorder %s29, 0
    %p386 = por %p384, %p385
    %s388 = sadd.s32 %s387, 1
    %p391 = scmp.eq.s32.totalorder %s23, 1
    %p392 = scmp.ne.s32.totalorder %s387, %s389
    %p393 = scmp.eq.s32.totalorder %s23, 0
    %p394 = por %p392, %p393
    %p395 = scmp.ne.s32.totalorder %s387, %s389
    %p396 = scmp.eq.s32.totalorder %s28, 1
    %p397 = por %p395, %p396
    %p398 = scmp.ne.s32.totalorder %s389, %s390
    %p399 = scmp.eq.s32.totalorder %s28, 0
    %p400 = por %p398, %p399
    %p401 = scmp.ne.s32.totalorder %s389, %s390
    %p402 = scmp.eq.s32.totalorder %s29, 1
    %p403 = por %p401, %p402
    %p405 = scmp.ne.s32.totalorder %s390, %s404
    %p406 = scmp.eq.s32.totalorder %s29, 0
    %p407 = por %p405, %p406
    %s408 = ssub.s32 %s23, %s30
    %p409 = scmp.eq.s32.totalorder %s408, 0
    %s411 = sadd.s32 %s410, 1
    %s412 = scalar_select %p409, %s410, %s411
    %p415 = pneg %p409
    %p416 = scmp.eq.s32.totalorder %s23, 1
    %p417 = por %p415, %p416
    %p418 = scmp.ne.s32.totalorder %s410, %s413
    %p419 = scmp.eq.s32.totalorder %s23, 0
    %p420 = por %p418, %p419
    %p421 = scmp.ne.s32.totalorder %s410, %s413
    %p422 = scmp.eq.s32.totalorder %s28, 1
    %p423 = por %p421, %p422
    %p424 = scmp.ne.s32.totalorder %s413, %s414
    %p425 = scmp.eq.s32.totalorder %s28, 0
    %p426 = por %p424, %p425
    %p427 = scmp.ne.s32.totalorder %s413, %s414
    %p428 = scmp.eq.s32.totalorder %s29, 1
    %p429 = por %p427, %p428
    %p431 = scmp.ne.s32.totalorder %s414, %s430
    %p432 = scmp.eq.s32.totalorder %s29, 0
    %p433 = por %p431, %p432
    %p434 = scmp.le.s32.totalorder 1, %s23
    %p435 = scmp.lt.s32.totalorder %s23, 3
    %p436 = pnand %p434, %p435
    %p437 = pneg %p436
    // Predicated region
    $region9: #{ulto_decoder2d_forward.1} parent=5 // pred_check
      _
    $region10: #{ulto_decoder2d_forward.1} parent=5 // pred_check_branch
      %439 = sbr.rel (%p436) target = $region12
    $region11: #{ulto_decoder2d_forward.1} parent=5 // pred_region
      %s440 = ssub.s32 %s23, 1
      // Predicated region
      $region13: #{ulto_decoder2d_forward.1} parent=11 // pred_check
        %p441 = pneg %p148
      $region14: #{ulto_decoder2d_forward.1} parent=11 // pred_check_branch
        %443 = sbr.rel (%p441) target = $region16
      $region15: #{ulto_decoder2d_forward.1} parent=11 // pred_region
        _
      $region16: #{ulto_decoder2d_forward.1} parent=11 // pred_fallthru
        _
      // Predicated region
      $region17: #{ulto_decoder2d_forward.1} parent=11 // pred_check
        %p444 = pneg %p169
      $region18: #{ulto_decoder2d_forward.1} parent=11 // pred_check_branch
        %446 = sbr.rel (%p444) target = $region20
      $region19: #{ulto_decoder2d_forward.1} parent=11 // pred_region
        _
      $region20: #{ulto_decoder2d_forward.1} parent=11 // pred_fallthru
        _
      // Predicated region
      $region21: #{ulto_decoder2d_forward.1} parent=11 // pred_check
        %p447 = pneg %p190
      $region22: #{ulto_decoder2d_forward.1} parent=11 // pred_check_branch
        %449 = sbr.rel (%p447) target = $region24
      $region23: #{ulto_decoder2d_forward.1} parent=11 // pred_region
        _
      $region24: #{ulto_decoder2d_forward.1} parent=11 // pred_fallthru
        _
      // Predicated region
      $region25: #{ulto_decoder2d_forward.1} parent=11 // pred_check
        %p450 = pneg %p211
      $region26: #{ulto_decoder2d_forward.1} parent=11 // pred_check_branch
        %452 = sbr.rel (%p450) target = $region28
      $region27: #{ulto_decoder2d_forward.1} parent=11 // pred_region
        _
      $region28: #{ulto_decoder2d_forward.1} parent=11 // pred_fallthru
        _
      // Predicated region
      $region29: #{ulto_decoder2d_forward.1} parent=11 // pred_check
        %p453 = pneg %p232
      $region30: #{ulto_decoder2d_forward.1} parent=11 // pred_check_branch
        %455 = sbr.rel (%p453) target = $region32
      $region31: #{ulto_decoder2d_forward.1} parent=11 // pred_region
        _
      $region32: #{ulto_decoder2d_forward.1} parent=11 // pred_fallthru
        _
      // Predicated region
      $region33: #{ulto_decoder2d_forward.1} parent=11 // pred_check
        %p456 = pneg %p253
      $region34: #{ulto_decoder2d_forward.1} parent=11 // pred_check_branch
        %458 = sbr.rel (%p456) target = $region36
      $region35: #{ulto_decoder2d_forward.1} parent=11 // pred_region
        _
      $region36: #{ulto_decoder2d_forward.1} parent=11 // pred_fallthru
        _
      // Predicated region
      $region37: #{ulto_decoder2d_forward.1} parent=11 // pred_check
        %p459 = pneg %p274
      $region38: #{ulto_decoder2d_forward.1} parent=11 // pred_check_branch
        %461 = sbr.rel (%p459) target = $region40
      $region39: #{ulto_decoder2d_forward.1} parent=11 // pred_region
        _
      $region40: #{ulto_decoder2d_forward.1} parent=11 // pred_fallthru
        _
      // Predicated region
      $region41: #{ulto_decoder2d_forward.1} parent=11 // pred_check
        %p462 = pneg %p295
      $region42: #{ulto_decoder2d_forward.1} parent=11 // pred_check_branch
        %464 = sbr.rel (%p462) target = $region44
      $region43: #{ulto_decoder2d_forward.1} parent=11 // pred_region
        _
      $region44: #{ulto_decoder2d_forward.1} parent=11 // pred_fallthru
        _
      // Predicated region
      $region45: #{ulto_decoder2d_forward.1} parent=11 // pred_check
        %p465 = pneg %p316
      $region46: #{ulto_decoder2d_forward.1} parent=11 // pred_check_branch
        %467 = sbr.rel (%p465) target = $region48
      $region47: #{ulto_decoder2d_forward.1} parent=11 // pred_region
        _
      $region48: #{ulto_decoder2d_forward.1} parent=11 // pred_fallthru
        _
      // Predicated region
      $region49: #{ulto_decoder2d_forward.1} parent=11 // pred_check
        %p468 = pneg %p337
      $region50: #{ulto_decoder2d_forward.1} parent=11 // pred_check_branch
        %470 = sbr.rel (%p468) target = $region52
      $region51: #{ulto_decoder2d_forward.1} parent=11 // pred_region
        _
      $region52: #{ulto_decoder2d_forward.1} parent=11 // pred_fallthru
        _
      // Predicated region
      $region53: #{ulto_decoder2d_forward.1} parent=11 // pred_check
        %p471 = pneg %p358
      $region54: #{ulto_decoder2d_forward.1} parent=11 // pred_check_branch
        %473 = sbr.rel (%p471) target = $region56
      $region55: #{ulto_decoder2d_forward.1} parent=11 // pred_region
        _
      $region56: #{ulto_decoder2d_forward.1} parent=11 // pred_fallthru
        _
      // Predicated region
      $region57: #{ulto_decoder2d_forward.1} parent=11 // pred_check
        %p474 = pneg %p379
      $region58: #{ulto_decoder2d_forward.1} parent=11 // pred_check_branch
        %476 = sbr.rel (%p474) target = $region60
      $region59: #{ulto_decoder2d_forward.1} parent=11 // pred_region
        _
      $region60: #{ulto_decoder2d_forward.1} parent=11 // pred_fallthru
        _
      // Predicated region
      $region61: #{ulto_decoder2d_forward.1} parent=11 // pred_check
        %p477 = pneg %p400
      $region62: #{ulto_decoder2d_forward.1} parent=11 // pred_check_branch
        %479 = sbr.rel (%p477) target = $region64
      $region63: #{ulto_decoder2d_forward.1} parent=11 // pred_region
        _
      $region64: #{ulto_decoder2d_forward.1} parent=11 // pred_fallthru
        _
    $region12: #{ulto_decoder2d_forward.1} parent=5 // pred_fallthru
      _
    %p480 = scmp.lt.s32.totalorder %s23, 2
    // Predicated region
    $region65: #{ulto_decoder2d_forward.1} parent=5 // pred_check
      %p481 = pneg %p480
    $region66: #{ulto_decoder2d_forward.1} parent=5 // pred_check_branch
      %483 = sbr.rel (%p481) target = $region68
    $region67: #{ulto_decoder2d_forward.1} parent=5 // pred_region
      // Predicated region
      $region69: #{ulto_decoder2d_forward.1} parent=67 // pred_check
        %p484 = pneg %p43
      $region70: #{ulto_decoder2d_forward.1} parent=67 // pred_check_branch
        %486 = sbr.rel (%p484) target = $region72
      $region71: #{ulto_decoder2d_forward.1} parent=67 // pred_region
        %p487 = scmp.lt.s32.totalorder %s23, 1
        %s488 = scalar_select %p487, %s23, 1
        %s489 = smul.addr %s488, 8
        %s490 = scalar_lea.vmem %s0, %s489
      $region72: #{ulto_decoder2d_forward.1} parent=67 // pred_fallthru
        _
      // Predicated region
      $region73: #{ulto_decoder2d_forward.1} parent=67 // pred_check
        %p491 = pneg %p69
      $region74: #{ulto_decoder2d_forward.1} parent=67 // pred_check_branch
        %493 = sbr.rel (%p491) target = $region76
      $region75: #{ulto_decoder2d_forward.1} parent=67 // pred_region
        %s494 = smul.u32 8, %s23
        %p495 = scmp.lt.s32.totalorder %s494, 15
        %s496 = scalar_select %p495, %s494, 15
        %s497 = smul.addr %s496, 4
        %s498 = scalar_lea.vmem %s1, %s497
        %s499 = smul.u32 8, %s23
      $region76: #{ulto_decoder2d_forward.1} parent=67 // pred_fallthru
        _
      // Predicated region
      $region77: #{ulto_decoder2d_forward.1} parent=67 // pred_check
        %p500 = pneg %p95
      $region78: #{ulto_decoder2d_forward.1} parent=67 // pred_check_branch
        %502 = sbr.rel (%p500) target = $region80
      $region79: #{ulto_decoder2d_forward.1} parent=67 // pred_region
        %p503 = scmp.lt.s32.totalorder %s23, 1
        %s504 = scalar_select %p503, %s23, 1
        %s505 = smul.addr %s504, 4
        %s506 = scalar_lea.vmem %s2, %s505
      $region80: #{ulto_decoder2d_forward.1} parent=67 // pred_fallthru
        _
      // Predicated region
      $region81: #{ulto_decoder2d_forward.1} parent=67 // pred_check
        %p507 = pneg %p121
      $region82: #{ulto_decoder2d_forward.1} parent=67 // pred_check_branch
        %509 = sbr.rel (%p507) target = $region84
      $region83: #{ulto_decoder2d_forward.1} parent=67 // pred_region
        %s510 = smul.u32 8, %s23
        %p511 = scmp.lt.s32.totalorder %s510, 15
        %s512 = scalar_select %p511, %s510, 15
        %s513 = smul.addr %s512, 4
        %s514 = scalar_lea.vmem %s3, %s513
        %s515 = smul.u32 8, %s23
      $region84: #{ulto_decoder2d_forward.1} parent=67 // pred_fallthru
        _
    $region68: #{ulto_decoder2d_forward.1} parent=5 // pred_fallthru
      _
    %p516 = scmp.le.s32.totalorder 1, %s23
    %p517 = scmp.lt.s32.totalorder %s23, 3
    %p518 = pnand %p516, %p517
    %p519 = pneg %p518
    // Predicated region
    $region85: #{ulto_decoder2d_forward.1} parent=5 // pred_check
      _
    $region86: #{ulto_decoder2d_forward.1} parent=5 // pred_check_branch
      %521 = sbr.rel (%p518) target = $region88
    $region87: #{ulto_decoder2d_forward.1} parent=5 // pred_region
      %s522 = ssub.s32 %s23, 1
      %p523 = scmp.lt.s32.totalorder %s28, 1
      %s524 = scalar_select %p523, %s28, 1
      %s525 = smul.addr %s524, 8
      %s526 = scalar_lea.vmem %s0, %s525
      %p527 = pneg %p49
      %p528 = pneg %p46
      %s529 = smul.u32 8, %s28
      %p530 = scmp.lt.s32.totalorder %s529, 15
      %s531 = scalar_select %p530, %s529, 15
      %s532 = smul.addr %s531, 4
      %s533 = scalar_lea.vmem %s1, %s532
      %p534 = pneg %p75
      %p535 = pneg %p72
      %p536 = scmp.lt.s32.totalorder %s28, 1
      %s537 = scalar_select %p536, %s28, 1
      %s538 = smul.addr %s537, 4
      %s539 = scalar_lea.vmem %s2, %s538
      %p540 = pneg %p101
      %p541 = pneg %p98
      %s542 = smul.u32 8, %s28
      %p543 = scmp.lt.s32.totalorder %s542, 15
      %s544 = scalar_select %p543, %s542, 15
      %s545 = smul.addr %s544, 4
      %s546 = scalar_lea.vmem %s3, %s545
      %p547 = pneg %p127
      %p548 = pneg %p124
      %p549 = pneg %p148
      %p550 = pneg %p145
      %p551 = pneg %p169
      %p552 = pneg %p166
      %p553 = pneg %p190
      %p554 = pneg %p187
      %p555 = pneg %p211
      %p556 = pneg %p208
      %p557 = pneg %p232
      %p558 = pneg %p229
      %p559 = pneg %p253
      %p560 = pneg %p250
      %p561 = pneg %p274
      %p562 = pneg %p271
      %p563 = pneg %p295
      %p564 = pneg %p292
      %p565 = pneg %p316
      %p566 = pneg %p313
      %p567 = pneg %p337
      %p568 = pneg %p334
      %p569 = pneg %p358
      %p570 = pneg %p355
      %p571 = pneg %p379
      %p572 = pneg %p376
      %p573 = pneg %p400
      %p574 = pneg %p397
      %p575 = pneg %p426
      %p576 = pneg %p423
      %p577 = scmp.lt.s32.totalorder %s28, 1
      %s578 = scalar_select %p577, %s28, 1
      %s579 = smul.addr %s578, 8
      %s580 = scalar_lea.vmem %s17, %s579
      %p581 = scmp.lt.s32.totalorder %s28, 1
      %s582 = scalar_select %p581, %s28, 1
      %s583 = smul.addr %s582, 8
      %s584 = scalar_lea.vmem %s0, %s583
      %s585 = smul.u32 8, %s28
      %p586 = scmp.lt.s32.totalorder %s585, 15
      %s587 = scalar_select %p586, %s585, 15
      %s588 = smul.addr %s587, 4
      %s589 = scalar_lea.vmem %s1, %s588
      %s590 = smul.u32 8, %s28
      %p591 = scmp.lt.s32.totalorder %s28, 1
      %s592 = scalar_select %p591, %s28, 1
      %s593 = smul.addr %s592, 4
      %s594 = scalar_lea.vmem %s2, %s593
      %s595 = smul.u32 8, %s28
      %p596 = scmp.lt.s32.totalorder %s595, 15
      %s597 = scalar_select %p596, %s595, 15
      %s598 = smul.addr %s597, 4
      %s599 = scalar_lea.vmem %s3, %s598
      %s600 = smul.u32 8, %s28
      %p601 = scmp.lt.s32.totalorder %s28, 1
      %s602 = scalar_select %p601, %s28, 1
      %s603 = smul.addr %s602, 8
      %s604 = scalar_lea.vmem %s17, %s603
      %v606 = vld [vmem:[%s589] sm:$0xf]
      %v607 = vld [vmem:[%s589 + $0x4] sm:$0xf]
      %v608 = vld [vmem:[%s589 + $0x8] sm:$0xf]
      %v609 = vld [vmem:[%s589 + $0xc] sm:$0xf]
      %v610 = vld [vmem:[%s589 + $0x10] sm:$0xf]
      %v611 = vld [vmem:[%s589 + $0x14] sm:$0xf]
      %v612 = vld [vmem:[%s589 + $0x18] sm:$0xf]
      %v613 = vld [vmem:[%s589 + $0x1c] sm:$0xf]
      %v614 = vld [vmem:[%s594] sm:$0xf]
      %v615 = vunpack.c.l.bf16 %v614
      %v616 = vld [vmem:[%s599] sm:$0xf]
      %v617 = vld [vmem:[%s599 + $0x4] sm:$0xf]
      %v618 = vld [vmem:[%s599 + $0x8] sm:$0xf]
      %v619 = vld [vmem:[%s599 + $0xc] sm:$0xf]
      %v620 = vld [vmem:[%s599 + $0x10] sm:$0xf]
      %v621 = vld [vmem:[%s599 + $0x14] sm:$0xf]
      %v622 = vld [vmem:[%s599 + $0x18] sm:$0xf]
      %v623 = vld [vmem:[%s599 + $0x1c] sm:$0xf]
      %v624 = vunpack.c.l.bf16 %v616
      %v625 = vunpack.c.l.bf16 %v617
      %v626 = vunpack.c.l.bf16 %v618
      %v627 = vunpack.c.l.bf16 %v619
      %v628 = vunpack.c.l.bf16 %v620
      %v629 = vunpack.c.l.bf16 %v621
      %v630 = vunpack.c.l.bf16 %v622
      %v631 = vunpack.c.l.bf16 %v623
      %v632 = vand.u32 2147483647, %v615
      %vm633 = vcmp.le.f32.partialorder %v632, 0.7853982
      %vm634 = vcmp.lt.s32.totalorder %v615, 0
      %v635 = vand.u32 %v615, 2139095040
      %v636 = vshrl.u32 %v635, 23
      %v637 = vsub.s32 %v636, 127
      %v638 = vand.u32 2147483647, %v615
      %v639 = vand.u32 %v638, 8388607
      %v640 = vor.u32 %v639, 8388608
      %v641 = vsub.s32 0, %v640
      %v642 = vadd.s32 %v637, 1
      %vm643 = vcmp.gt.s32.totalorder %v642, 0
      %v644 = vsel %vm643, %v642, 0
      %v645 = vshrl.u32 %v644, 5
      %v646 = vand.u32 %v644, 31
      %v647 = vsub.s32 32, %v646
      %v648 = vshrl.u32 683565275, %v647
      %v649 = vshll.u32 683565275, %v646
      %v650 = vshrl.u32 2475754826, %v647
      %v651 = vor.u32 %v649, %v650
      %v652 = vshll.u32 2475754826, %v646
      %v653 = vshrl.u32 2131351028, %v647
      %v654 = vor.u32 %v652, %v653
      %v655 = vshll.u32 2131351028, %v646
      %v656 = vshrl.u32 2102212464, %v647
      %v657 = vor.u32 %v655, %v656
      %v658 = vshll.u32 2102212464, %v646
      %v659 = vshrl.u32 920167782, %v647
      %v660 = vor.u32 %v658, %v659
      %v661 = vshll.u32 920167782, %v646
      %v662 = vshrl.u32 1326507024, %v647
      %v663 = vor.u32 %v661, %v662
      %vm664 = vcmp.lt.s32.totalorder %v645, 1
      %vm665 = vcmp.lt.s32.totalorder %v645, 2
      %vm666 = vcmp.lt.s32.totalorder %v645, 3
      %vm667 = vcmp.lt.s32.totalorder %v645, 4
      %v668 = vsel %vm664, %v648, %v651
      %v669 = vsel %vm667, %v657, 2102212464
      %v670 = vsel %vm666, %v654, %v669
      %v671 = vsel %vm665, %v668, %v670
      %v672 = vsel %vm664, %v651, %v654
      %v673 = vsel %vm667, %v660, 920167782
      %v674 = vsel %vm666, %v657, %v673
      %v675 = vsel %vm665, %v672, %v674
      %v676 = vsel %vm664, %v654, %v657
      %v677 = vsel %vm667, %v663, 1326507024
      %v678 = vsel %vm666, %v660, %v677
      %v679 = vsel %vm665, %v676, %v678
      %v680 = vshll.u32 %v640, 8
      %v681 = vand.u32 %v680, 65535
      %v682 = vshrl.u32 %v680, 16
      %v683 = vand.u32 %v679, 65535
      %v684 = vshrl.u32 %v679, 16
      %v685 = vmul.u32 %v681, %v683
      %v686 = vmul.u32 %v681, %v684
      %v687 = vmul.u32 %v682, %v683
      %v688 = vmul.u32 %v682, %v684
      %v689 = vshll.u32 %v686, 16
      %v690 = vshrl.u32 %v686, 16
      %v691 = vshll.u32 %v687, 16
      %v692 = vshrl.u32 %v687, 16
      %vm693 = vc.u32 %v685, %v689
      %v694 = vsel %vm693, 1, 0
      %v695 = vadd.s32 %v685, %v689
      %v696 = vadd.s32 %v688, %v694
      %vm697 = vc.u32 %v695, %v691
      %v698 = vsel %vm697, 1, 0
      %v699 = vadd.s32 %v695, %v691
      %v700 = vadd.s32 %v696, %v698
      %v701 = vadd.s32 %v700, %v690
      %v702 = vadd.s32 %v701, %v692
      %v703 = vand.u32 %v680, 65535
      %v704 = vshrl.u32 %v680, 16
      %v705 = vand.u32 %v675, 65535
      %v706 = vshrl.u32 %v675, 16
      %v707 = vmul.u32 %v703, %v705
      %v708 = vmul.u32 %v703, %v706
      %v709 = vmul.u32 %v704, %v705
      %v710 = vmul.u32 %v704, %v706
      %v711 = vshll.u32 %v708, 16
      %v712 = vshrl.u32 %v708, 16
      %v713 = vshll.u32 %v709, 16
      %v714 = vshrl.u32 %v709, 16
      %vm715 = vc.u32 %v707, %v711
      %v716 = vsel %vm715, 1, 0
      %v717 = vadd.s32 %v707, %v711
      %v718 = vadd.s32 %v710, %v716
      %vm719 = vc.u32 %v717, %v713
      %v720 = vsel %vm719, 1, 0
      %v721 = vadd.s32 %v717, %v713
      %v722 = vadd.s32 %v718, %v720
      %v723 = vadd.s32 %v722, %v712
      %v724 = vadd.s32 %v723, %v714
      %v725 = vmul.u32 %v680, %v671
      %v726 = vadd.s32 %v702, %v721
      %vm727 = vc.u32 %v702, %v721
      %v728 = vadd.s32 %v724, 1
      %v729 = vsel %vm727, %v728, %v724
      %v730 = vadd.s32 %v725, %v729
      %v731 = vadd.s32 %v730, 536870912
      %v732 = vshrl.u32 %v731, 30
      %v733 = vshll.u32 %v732, 30
      %v734 = vsub.s32 %v730, %v733
      %vm735 = vcmp.lt.s32.totalorder %v734, 0
      %v736 = vsub.s32 0, %v734
      %v737 = vsel %vm735, %v736, %v734
      %v738 = vclz %v737
      %v739 = vsub.s32 %v738, 2
      %vm740 = vcmp.gt.s32.totalorder 0, %v739
      %v741 = vsel %vm740, 0, %v739
      %v742 = vsub.s32 32, %v741
      %v743 = vshll.u32 %v734, %v741
      %v744 = vshrl.u32 %v726, %v742
      %v745 = vor.u32 %v743, %v744
      %v746 = vsub.s32 4294967266, %v741
      %v747 = vadd.s32 %v746, 127
      %v748 = vshll.u32 %v747, 23
      %v749 = vor.u32 4788187, %v748
      %v750 = vand.u32 2147483647, %v749
      %v752 = vcvt.s32.f32 %v745
      %v753 = vmul.f32 %v752, %v750
      %v754 = vxor.u32 %v753, 2147483648
      %v755 = vsel %vm634, %v754, %v753
      %v756 = vsub.s32 4, %v732
      %v757 = vsel %vm634, %v756, %v732
      %v758 = vsel %vm633, %v615, %v755
      %v759 = vsel %vm633, 0, %v757
      %v760 = vmul.f32 %v758, %v758
      %v761 = vmul.f32 %v760, -0.001358992
      %v762 = vadd.f32 %v761, 0.041655596
      %v763 = vmul.f32 %v760, %v762
      %v764 = vadd.f32 %v763, -0.4999988
      %v765 = vmul.f32 %v760, %v764
      %v766 = vadd.f32 1.0, %v765
      %v767 = vmul.f32 %v758, %v758
      %v768 = vmul.f32 %v767, -0.00019511016
      %v769 = vadd.f32 %v768, 0.008332121
      %v770 = vmul.f32 %v767, %v769
      %v771 = vadd.f32 %v770, -0.16666654
      %v772 = vmul.f32 %v767, %v771
      %v773 = vadd.f32 %v772, 1.0
      %v774 = vmul.f32 %v773, %v758
      %vm775 = vweird.f32 %v615
      %v776 = vand.u32 %v759, 3
      %vm777 = vcmp.lt.s32.totalorder %v776, 2
      %vm778 = vcmp.eq.s32.totalorder %v776, 0
      %v779 = vxor.u32 %v774, 2147483648
      %v780 = vsel %vm778, %v766, %v779
      %vm781 = vcmp.eq.s32.totalorder %v776, 2
      %v782 = vxor.u32 %v766, 2147483648
      %v783 = vsel %vm781, %v782, %v774
      %v784 = vsel %vm777, %v780, %v783
      %v785 = vsel %vm775, nan, %v784
      %v786 = vand.u32 2147483647, %v615
      %vm787 = vcmp.le.f32.partialorder %v786, 0.7853982
      %vm788 = vcmp.lt.s32.totalorder %v615, 0
      %v789 = vand.u32 %v615, 2139095040
      %v790 = vshrl.u32 %v789, 23
      %v791 = vsub.s32 %v790, 127
      %v792 = vand.u32 2147483647, %v615
      %v793 = vand.u32 %v792, 8388607
      %v794 = vor.u32 %v793, 8388608
      %v795 = vsub.s32 0, %v794
      %v796 = vadd.s32 %v791, 1
      %vm797 = vcmp.gt.s32.totalorder %v796, 0
      %v798 = vsel %vm797, %v796, 0
      %v799 = vshrl.u32 %v798, 5
      %v800 = vand.u32 %v798, 31
      %v801 = vsub.s32 32, %v800
      %v802 = vshrl.u32 683565275, %v801
      %v803 = vshll.u32 683565275, %v800
      %v804 = vshrl.u32 2475754826, %v801
      %v805 = vor.u32 %v803, %v804
      %v806 = vshll.u32 2475754826, %v800
      %v807 = vshrl.u32 2131351028, %v801
      %v808 = vor.u32 %v806, %v807
      %v809 = vshll.u32 2131351028, %v800
      %v810 = vshrl.u32 2102212464, %v801
      %v811 = vor.u32 %v809, %v810
      %v812 = vshll.u32 2102212464, %v800
      %v813 = vshrl.u32 920167782, %v801
      %v814 = vor.u32 %v812, %v813
      %v815 = vshll.u32 920167782, %v800
      %v816 = vshrl.u32 1326507024, %v801
      %v817 = vor.u32 %v815, %v816
      %vm818 = vcmp.lt.s32.totalorder %v799, 1
      %vm819 = vcmp.lt.s32.totalorder %v799, 2
      %vm820 = vcmp.lt.s32.totalorder %v799, 3
      %vm821 = vcmp.lt.s32.totalorder %v799, 4
      %v822 = vsel %vm818, %v802, %v805
      %v823 = vsel %vm821, %v811, 2102212464
      %v824 = vsel %vm820, %v808, %v823
      %v825 = vsel %vm819, %v822, %v824
      %v826 = vsel %vm818, %v805, %v808
      %v827 = vsel %vm821, %v814, 920167782
      %v828 = vsel %vm820, %v811, %v827
      %v829 = vsel %vm819, %v826, %v828
      %v830 = vsel %vm818, %v808, %v811
      %v831 = vsel %vm821, %v817, 1326507024
      %v832 = vsel %vm820, %v814, %v831
      %v833 = vsel %vm819, %v830, %v832
      %v834 = vshll.u32 %v794, 8
      %v835 = vand.u32 %v834, 65535
      %v836 = vshrl.u32 %v834, 16
      %v837 = vand.u32 %v833, 65535
      %v838 = vshrl.u32 %v833, 16
      %v839 = vmul.u32 %v835, %v837
      %v840 = vmul.u32 %v835, %v838
      %v841 = vmul.u32 %v836, %v837
      %v842 = vmul.u32 %v836, %v838
      %v843 = vshll.u32 %v840, 16
      %v844 = vshrl.u32 %v840, 16
      %v845 = vshll.u32 %v841, 16
      %v846 = vshrl.u32 %v841, 16
      %vm847 = vc.u32 %v839, %v843
      %v848 = vsel %vm847, 1, 0
      %v849 = vadd.s32 %v839, %v843
      %v850 = vadd.s32 %v842, %v848
      %vm851 = vc.u32 %v849, %v845
      %v852 = vsel %vm851, 1, 0
      %v853 = vadd.s32 %v849, %v845
      %v854 = vadd.s32 %v850, %v852
      %v855 = vadd.s32 %v854, %v844
      %v856 = vadd.s32 %v855, %v846
      %v857 = vand.u32 %v834, 65535
      %v858 = vshrl.u32 %v834, 16
      %v859 = vand.u32 %v829, 65535
      %v860 = vshrl.u32 %v829, 16
      %v861 = vmul.u32 %v857, %v859
      %v862 = vmul.u32 %v857, %v860
      %v863 = vmul.u32 %v858, %v859
      %v864 = vmul.u32 %v858, %v860
      %v865 = vshll.u32 %v862, 16
      %v866 = vshrl.u32 %v862, 16
      %v867 = vshll.u32 %v863, 16
      %v868 = vshrl.u32 %v863, 16
      %vm869 = vc.u32 %v861, %v865
      %v870 = vsel %vm869, 1, 0
      %v871 = vadd.s32 %v861, %v865
      %v872 = vadd.s32 %v864, %v870
      %vm873 = vc.u32 %v871, %v867
      %v874 = vsel %vm873, 1, 0
      %v875 = vadd.s32 %v871, %v867
      %v876 = vadd.s32 %v872, %v874
      %v877 = vadd.s32 %v876, %v866
      %v878 = vadd.s32 %v877, %v868
      %v879 = vmul.u32 %v834, %v825
      %v880 = vadd.s32 %v856, %v875
      %vm881 = vc.u32 %v856, %v875
      %v882 = vadd.s32 %v878, 1
      %v883 = vsel %vm881, %v882, %v878
      %v884 = vadd.s32 %v879, %v883
      %v885 = vadd.s32 %v884, 536870912
      %v886 = vshrl.u32 %v885, 30
      %v887 = vshll.u32 %v886, 30
      %v888 = vsub.s32 %v884, %v887
      %vm889 = vcmp.lt.s32.totalorder %v888, 0
      %v890 = vsub.s32 0, %v888
      %v891 = vsel %vm889, %v890, %v888
      %v892 = vclz %v891
      %v893 = vsub.s32 %v892, 2
      %vm894 = vcmp.gt.s32.totalorder 0, %v893
      %v895 = vsel %vm894, 0, %v893
      %v896 = vsub.s32 32, %v895
      %v897 = vshll.u32 %v888, %v895
      %v898 = vshrl.u32 %v880, %v896
      %v899 = vor.u32 %v897, %v898
      %v900 = vsub.s32 4294967266, %v895
      %v901 = vadd.s32 %v900, 127
      %v902 = vshll.u32 %v901, 23
      %v903 = vor.u32 4788187, %v902
      %v904 = vand.u32 2147483647, %v903
      %v906 = vcvt.s32.f32 %v899
      %v907 = vmul.f32 %v906, %v904
      %v908 = vxor.u32 %v907, 2147483648
      %v909 = vsel %vm788, %v908, %v907
      %v910 = vsub.s32 4, %v886
      %v911 = vsel %vm788, %v910, %v886
      %v912 = vsel %vm787, %v615, %v909
      %v913 = vsel %vm787, 0, %v911
      %v914 = vmul.f32 %v912, %v912
      %v915 = vmul.f32 %v914, -0.001358992
      %v916 = vadd.f32 %v915, 0.041655596
      %v917 = vmul.f32 %v914, %v916
      %v918 = vadd.f32 %v917, -0.4999988
      %v919 = vmul.f32 %v914, %v918
      %v920 = vadd.f32 1.0, %v919
      %v921 = vmul.f32 %v912, %v912
      %v922 = vmul.f32 %v921, -0.00019511016
      %v923 = vadd.f32 %v922, 0.008332121
      %v924 = vmul.f32 %v921, %v923
      %v925 = vadd.f32 %v924, -0.16666654
      %v926 = vmul.f32 %v921, %v925
      %v927 = vadd.f32 %v926, 1.0
      %v928 = vmul.f32 %v927, %v912
      %vm929 = vweird.f32 %v615
      %v930 = vadd.s32 %v913, 3
      %v931 = vand.u32 %v930, 3
      %vm932 = vcmp.lt.s32.totalorder %v931, 2
      %vm933 = vcmp.eq.s32.totalorder %v931, 0
      %v934 = vxor.u32 %v928, 2147483648
      %v935 = vsel %vm933, %v920, %v934
      %vm936 = vcmp.eq.s32.totalorder %v931, 2
      %v937 = vxor.u32 %v920, 2147483648
      %v938 = vsel %vm936, %v937, %v928
      %v939 = vsel %vm932, %v935, %v938
      %v940 = vsel %vm929, nan, %v939
      %v941 = vand.u32 2147483647, %v624
      %vm942 = vcmp.le.f32.partialorder %v941, 0.7853982
      %vm943 = vcmp.lt.s32.totalorder %v624, 0
      %v944 = vand.u32 %v624, 2139095040
      %v945 = vshrl.u32 %v944, 23
      %v946 = vsub.s32 %v945, 127
      %v947 = vand.u32 2147483647, %v624
      %v948 = vand.u32 %v947, 8388607
      %v949 = vor.u32 %v948, 8388608
      %v950 = vsub.s32 0, %v949
      %v951 = vadd.s32 %v946, 1
      %vm952 = vcmp.gt.s32.totalorder %v951, 0
      %v953 = vsel %vm952, %v951, 0
      %v954 = vshrl.u32 %v953, 5
      %v955 = vand.u32 %v953, 31
      %v956 = vsub.s32 32, %v955
      %v957 = vshrl.u32 683565275, %v956
      %v958 = vshll.u32 683565275, %v955
      %v959 = vshrl.u32 2475754826, %v956
      %v960 = vor.u32 %v958, %v959
      %v961 = vshll.u32 2475754826, %v955
      %v962 = vshrl.u32 2131351028, %v956
      %v963 = vor.u32 %v961, %v962
      %v964 = vshll.u32 2131351028, %v955
      %v965 = vshrl.u32 2102212464, %v956
      %v966 = vor.u32 %v964, %v965
      %v967 = vshll.u32 2102212464, %v955
      %v968 = vshrl.u32 920167782, %v956
      %v969 = vor.u32 %v967, %v968
      %v970 = vshll.u32 920167782, %v955
      %v971 = vshrl.u32 1326507024, %v956
      %v972 = vor.u32 %v970, %v971
      %vm973 = vcmp.lt.s32.totalorder %v954, 1
      %vm974 = vcmp.lt.s32.totalorder %v954, 2
      %vm975 = vcmp.lt.s32.totalorder %v954, 3
      %vm976 = vcmp.lt.s32.totalorder %v954, 4
      %v977 = vsel %vm973, %v957, %v960
      %v978 = vsel %vm976, %v966, 2102212464
      %v979 = vsel %vm975, %v963, %v978
      %v980 = vsel %vm974, %v977, %v979
      %v981 = vsel %vm973, %v960, %v963
      %v982 = vsel %vm976, %v969, 920167782
      %v983 = vsel %vm975, %v966, %v982
      %v984 = vsel %vm974, %v981, %v983
      %v985 = vsel %vm973, %v963, %v966
      %v986 = vsel %vm976, %v972, 1326507024
      %v987 = vsel %vm975, %v969, %v986
      %v988 = vsel %vm974, %v985, %v987
      %v989 = vshll.u32 %v949, 8
      %v990 = vand.u32 %v989, 65535
      %v991 = vshrl.u32 %v989, 16
      %v992 = vand.u32 %v988, 65535
      %v993 = vshrl.u32 %v988, 16
      %v994 = vmul.u32 %v990, %v992
      %v995 = vmul.u32 %v990, %v993
      %v996 = vmul.u32 %v991, %v992
      %v997 = vmul.u32 %v991, %v993
      %v998 = vshll.u32 %v995, 16
      %v999 = vshrl.u32 %v995, 16
      %v1000 = vshll.u32 %v996, 16
      %v1001 = vshrl.u32 %v996, 16
      %vm1002 = vc.u32 %v994, %v998
      %v1003 = vsel %vm1002, 1, 0
      %v1004 = vadd.s32 %v994, %v998
      %v1005 = vadd.s32 %v997, %v1003
      %vm1006 = vc.u32 %v1004, %v1000
      %v1007 = vsel %vm1006, 1, 0
      %v1008 = vadd.s32 %v1004, %v1000
      %v1009 = vadd.s32 %v1005, %v1007
      %v1010 = vadd.s32 %v1009, %v999
      %v1011 = vadd.s32 %v1010, %v1001
      %v1012 = vand.u32 %v989, 65535
      %v1013 = vshrl.u32 %v989, 16
      %v1014 = vand.u32 %v984, 65535
      %v1015 = vshrl.u32 %v984, 16
      %v1016 = vmul.u32 %v1012, %v1014
      %v1017 = vmul.u32 %v1012, %v1015
      %v1018 = vmul.u32 %v1013, %v1014
      %v1019 = vmul.u32 %v1013, %v1015
      %v1020 = vshll.u32 %v1017, 16
      %v1021 = vshrl.u32 %v1017, 16
      %v1022 = vshll.u32 %v1018, 16
      %v1023 = vshrl.u32 %v1018, 16
      %vm1024 = vc.u32 %v1016, %v1020
      %v1025 = vsel %vm1024, 1, 0
      %v1026 = vadd.s32 %v1016, %v1020
      %v1027 = vadd.s32 %v1019, %v1025
      %vm1028 = vc.u32 %v1026, %v1022
      %v1029 = vsel %vm1028, 1, 0
      %v1030 = vadd.s32 %v1026, %v1022
      %v1031 = vadd.s32 %v1027, %v1029
      %v1032 = vadd.s32 %v1031, %v1021
      %v1033 = vadd.s32 %v1032, %v1023
      %v1034 = vmul.u32 %v989, %v980
      %v1035 = vadd.s32 %v1011, %v1030
      %vm1036 = vc.u32 %v1011, %v1030
      %v1037 = vadd.s32 %v1033, 1
      %v1038 = vsel %vm1036, %v1037, %v1033
      %v1039 = vadd.s32 %v1034, %v1038
      %v1040 = vadd.s32 %v1039, 536870912
      %v1041 = vshrl.u32 %v1040, 30
      %v1042 = vshll.u32 %v1041, 30
      %v1043 = vsub.s32 %v1039, %v1042
      %vm1044 = vcmp.lt.s32.totalorder %v1043, 0
      %v1045 = vsub.s32 0, %v1043
      %v1046 = vsel %vm1044, %v1045, %v1043
      %v1047 = vclz %v1046
      %v1048 = vsub.s32 %v1047, 2
      %vm1049 = vcmp.gt.s32.totalorder 0, %v1048
      %v1050 = vsel %vm1049, 0, %v1048
      %v1051 = vsub.s32 32, %v1050
      %v1052 = vshll.u32 %v1043, %v1050
      %v1053 = vshrl.u32 %v1035, %v1051
      %v1054 = vor.u32 %v1052, %v1053
      %v1055 = vsub.s32 4294967266, %v1050
      %v1056 = vadd.s32 %v1055, 127
      %v1057 = vshll.u32 %v1056, 23
      %v1058 = vor.u32 4788187, %v1057
      %v1059 = vand.u32 2147483647, %v1058
      %v1061 = vcvt.s32.f32 %v1054
      %v1062 = vmul.f32 %v1061, %v1059
      %v1063 = vxor.u32 %v1062, 2147483648
      %v1064 = vsel %vm943, %v1063, %v1062
      %v1065 = vsub.s32 4, %v1041
      %v1066 = vsel %vm943, %v1065, %v1041
      %v1067 = vsel %vm942, %v624, %v1064
      %v1068 = vsel %vm942, 0, %v1066
      %v1069 = vmul.f32 %v1067, %v1067
      %v1070 = vmul.f32 %v1069, -0.001358992
      %v1071 = vadd.f32 %v1070, 0.041655596
      %v1072 = vmul.f32 %v1069, %v1071
      %v1073 = vadd.f32 %v1072, -0.4999988
      %v1074 = vmul.f32 %v1069, %v1073
      %v1075 = vadd.f32 1.0, %v1074
      %v1076 = vmul.f32 %v1067, %v1067
      %v1077 = vmul.f32 %v1076, -0.00019511016
      %v1078 = vadd.f32 %v1077, 0.008332121
      %v1079 = vmul.f32 %v1076, %v1078
      %v1080 = vadd.f32 %v1079, -0.16666654
      %v1081 = vmul.f32 %v1076, %v1080
      %v1082 = vadd.f32 %v1081, 1.0
      %v1083 = vmul.f32 %v1082, %v1067
      %vm1084 = vweird.f32 %v624
      %v1085 = vand.u32 %v1068, 3
      %vm1086 = vcmp.lt.s32.totalorder %v1085, 2
      %vm1087 = vcmp.eq.s32.totalorder %v1085, 0
      %v1088 = vxor.u32 %v1083, 2147483648
      %v1089 = vsel %vm1087, %v1075, %v1088
      %vm1090 = vcmp.eq.s32.totalorder %v1085, 2
      %v1091 = vxor.u32 %v1075, 2147483648
      %v1092 = vsel %vm1090, %v1091, %v1083
      %v1093 = vsel %vm1086, %v1089, %v1092
      %v1094 = vsel %vm1084, nan, %v1093
      %v1095 = vand.u32 2147483647, %v625
      %vm1096 = vcmp.le.f32.partialorder %v1095, 0.7853982
      %vm1097 = vcmp.lt.s32.totalorder %v625, 0
      %v1098 = vand.u32 %v625, 2139095040
      %v1099 = vshrl.u32 %v1098, 23
      %v1100 = vsub.s32 %v1099, 127
      %v1101 = vand.u32 2147483647, %v625
      %v1102 = vand.u32 %v1101, 8388607
      %v1103 = vor.u32 %v1102, 8388608
      %v1104 = vsub.s32 0, %v1103
      %v1105 = vadd.s32 %v1100, 1
      %vm1106 = vcmp.gt.s32.totalorder %v1105, 0
      %v1107 = vsel %vm1106, %v1105, 0
      %v1108 = vshrl.u32 %v1107, 5
      %v1109 = vand.u32 %v1107, 31
      %v1110 = vsub.s32 32, %v1109
      %v1111 = vshrl.u32 683565275, %v1110
      %v1112 = vshll.u32 683565275, %v1109
      %v1113 = vshrl.u32 2475754826, %v1110
      %v1114 = vor.u32 %v1112, %v1113
      %v1115 = vshll.u32 2475754826, %v1109
      %v1116 = vshrl.u32 2131351028, %v1110
      %v1117 = vor.u32 %v1115, %v1116
      %v1118 = vshll.u32 2131351028, %v1109
      %v1119 = vshrl.u32 2102212464, %v1110
      %v1120 = vor.u32 %v1118, %v1119
      %v1121 = vshll.u32 2102212464, %v1109
      %v1122 = vshrl.u32 920167782, %v1110
      %v1123 = vor.u32 %v1121, %v1122
      %v1124 = vshll.u32 920167782, %v1109
      %v1125 = vshrl.u32 1326507024, %v1110
      %v1126 = vor.u32 %v1124, %v1125
      %vm1127 = vcmp.lt.s32.totalorder %v1108, 1
      %vm1128 = vcmp.lt.s32.totalorder %v1108, 2
      %vm1129 = vcmp.lt.s32.totalorder %v1108, 3
      %vm1130 = vcmp.lt.s32.totalorder %v1108, 4
      %v1131 = vsel %vm1127, %v1111, %v1114
      %v1132 = vsel %vm1130, %v1120, 2102212464
      %v1133 = vsel %vm1129, %v1117, %v1132
      %v1134 = vsel %vm1128, %v1131, %v1133
      %v1135 = vsel %vm1127, %v1114, %v1117
      %v1136 = vsel %vm1130, %v1123, 920167782
      %v1137 = vsel %vm1129, %v1120, %v1136
      %v1138 = vsel %vm1128, %v1135, %v1137
      %v1139 = vsel %vm1127, %v1117, %v1120
      %v1140 = vsel %vm1130, %v1126, 1326507024
      %v1141 = vsel %vm1129, %v1123, %v1140
      %v1142 = vsel %vm1128, %v1139, %v1141
      %v1143 = vshll.u32 %v1103, 8
      %v1144 = vand.u32 %v1143, 65535
      %v1145 = vshrl.u32 %v1143, 16
      %v1146 = vand.u32 %v1142, 65535
      %v1147 = vshrl.u32 %v1142, 16
      %v1148 = vmul.u32 %v1144, %v1146
      %v1149 = vmul.u32 %v1144, %v1147
      %v1150 = vmul.u32 %v1145, %v1146
      %v1151 = vmul.u32 %v1145, %v1147
      %v1152 = vshll.u32 %v1149, 16
      %v1153 = vshrl.u32 %v1149, 16
      %v1154 = vshll.u32 %v1150, 16
      %v1155 = vshrl.u32 %v1150, 16
      %vm1156 = vc.u32 %v1148, %v1152
      %v1157 = vsel %vm1156, 1, 0
      %v1158 = vadd.s32 %v1148, %v1152
      %v1159 = vadd.s32 %v1151, %v1157
      %vm1160 = vc.u32 %v1158, %v1154
      %v1161 = vsel %vm1160, 1, 0
      %v1162 = vadd.s32 %v1158, %v1154
      %v1163 = vadd.s32 %v1159, %v1161
      %v1164 = vadd.s32 %v1163, %v1153
      %v1165 = vadd.s32 %v1164, %v1155
      %v1166 = vand.u32 %v1143, 65535
      %v1167 = vshrl.u32 %v1143, 16
      %v1168 = vand.u32 %v1138, 65535
      %v1169 = vshrl.u32 %v1138, 16
      %v1170 = vmul.u32 %v1166, %v1168
      %v1171 = vmul.u32 %v1166, %v1169
      %v1172 = vmul.u32 %v1167, %v1168
      %v1173 = vmul.u32 %v1167, %v1169
      %v1174 = vshll.u32 %v1171, 16
      %v1175 = vshrl.u32 %v1171, 16
      %v1176 = vshll.u32 %v1172, 16
      %v1177 = vshrl.u32 %v1172, 16
      %vm1178 = vc.u32 %v1170, %v1174
      %v1179 = vsel %vm1178, 1, 0
      %v1180 = vadd.s32 %v1170, %v1174
      %v1181 = vadd.s32 %v1173, %v1179
      %vm1182 = vc.u32 %v1180, %v1176
      %v1183 = vsel %vm1182, 1, 0
      %v1184 = vadd.s32 %v1180, %v1176
      %v1185 = vadd.s32 %v1181, %v1183
      %v1186 = vadd.s32 %v1185, %v1175
      %v1187 = vadd.s32 %v1186, %v1177
      %v1188 = vmul.u32 %v1143, %v1134
      %v1189 = vadd.s32 %v1165, %v1184
      %vm1190 = vc.u32 %v1165, %v1184
      %v1191 = vadd.s32 %v1187, 1
      %v1192 = vsel %vm1190, %v1191, %v1187
      %v1193 = vadd.s32 %v1188, %v1192
      %v1194 = vadd.s32 %v1193, 536870912
      %v1195 = vshrl.u32 %v1194, 30
      %v1196 = vshll.u32 %v1195, 30
      %v1197 = vsub.s32 %v1193, %v1196
      %vm1198 = vcmp.lt.s32.totalorder %v1197, 0
      %v1199 = vsub.s32 0, %v1197
      %v1200 = vsel %vm1198, %v1199, %v1197
      %v1201 = vclz %v1200
      %v1202 = vsub.s32 %v1201, 2
      %vm1203 = vcmp.gt.s32.totalorder 0, %v1202
      %v1204 = vsel %vm1203, 0, %v1202
      %v1205 = vsub.s32 32, %v1204
      %v1206 = vshll.u32 %v1197, %v1204
      %v1207 = vshrl.u32 %v1189, %v1205
      %v1208 = vor.u32 %v1206, %v1207
      %v1209 = vsub.s32 4294967266, %v1204
      %v1210 = vadd.s32 %v1209, 127
      %v1211 = vshll.u32 %v1210, 23
      %v1212 = vor.u32 4788187, %v1211
      %v1213 = vand.u32 2147483647, %v1212
      %v1215 = vcvt.s32.f32 %v1208
      %v1216 = vmul.f32 %v1215, %v1213
      %v1217 = vxor.u32 %v1216, 2147483648
      %v1218 = vsel %vm1097, %v1217, %v1216
      %v1219 = vsub.s32 4, %v1195
      %v1220 = vsel %vm1097, %v1219, %v1195
      %v1221 = vsel %vm1096, %v625, %v1218
      %v1222 = vsel %vm1096, 0, %v1220
      %v1223 = vmul.f32 %v1221, %v1221
      %v1224 = vmul.f32 %v1223, -0.001358992
      %v1225 = vadd.f32 %v1224, 0.041655596
      %v1226 = vmul.f32 %v1223, %v1225
      %v1227 = vadd.f32 %v1226, -0.4999988
      %v1228 = vmul.f32 %v1223, %v1227
      %v1229 = vadd.f32 1.0, %v1228
      %v1230 = vmul.f32 %v1221, %v1221
      %v1231 = vmul.f32 %v1230, -0.00019511016
      %v1232 = vadd.f32 %v1231, 0.008332121
      %v1233 = vmul.f32 %v1230, %v1232
      %v1234 = vadd.f32 %v1233, -0.16666654
      %v1235 = vmul.f32 %v1230, %v1234
      %v1236 = vadd.f32 %v1235, 1.0
      %v1237 = vmul.f32 %v1236, %v1221
      %vm1238 = vweird.f32 %v625
      %v1239 = vand.u32 %v1222, 3
      %vm1240 = vcmp.lt.s32.totalorder %v1239, 2
      %vm1241 = vcmp.eq.s32.totalorder %v1239, 0
      %v1242 = vxor.u32 %v1237, 2147483648
      %v1243 = vsel %vm1241, %v1229, %v1242
      %vm1244 = vcmp.eq.s32.totalorder %v1239, 2
      %v1245 = vxor.u32 %v1229, 2147483648
      %v1246 = vsel %vm1244, %v1245, %v1237
      %v1247 = vsel %vm1240, %v1243, %v1246
      %v1248 = vsel %vm1238, nan, %v1247
      %v1249 = vand.u32 2147483647, %v626
      %vm1250 = vcmp.le.f32.partialorder %v1249, 0.7853982
      %vm1251 = vcmp.lt.s32.totalorder %v626, 0
      %v1252 = vand.u32 %v626, 2139095040
      %v1253 = vshrl.u32 %v1252, 23
      %v1254 = vsub.s32 %v1253, 127
      %v1255 = vand.u32 2147483647, %v626
      %v1256 = vand.u32 %v1255, 8388607
      %v1257 = vor.u32 %v1256, 8388608
      %v1258 = vsub.s32 0, %v1257
      %v1259 = vadd.s32 %v1254, 1
      %vm1260 = vcmp.gt.s32.totalorder %v1259, 0
      %v1261 = vsel %vm1260, %v1259, 0
      %v1262 = vshrl.u32 %v1261, 5
      %v1263 = vand.u32 %v1261, 31
      %v1264 = vsub.s32 32, %v1263
      %v1265 = vshrl.u32 683565275, %v1264
      %v1266 = vshll.u32 683565275, %v1263
      %v1267 = vshrl.u32 2475754826, %v1264
      %v1268 = vor.u32 %v1266, %v1267
      %v1269 = vshll.u32 2475754826, %v1263
      %v1270 = vshrl.u32 2131351028, %v1264
      %v1271 = vor.u32 %v1269, %v1270
      %v1272 = vshll.u32 2131351028, %v1263
      %v1273 = vshrl.u32 2102212464, %v1264
      %v1274 = vor.u32 %v1272, %v1273
      %v1275 = vshll.u32 2102212464, %v1263
      %v1276 = vshrl.u32 920167782, %v1264
      %v1277 = vor.u32 %v1275, %v1276
      %v1278 = vshll.u32 920167782, %v1263
      %v1279 = vshrl.u32 1326507024, %v1264
      %v1280 = vor.u32 %v1278, %v1279
      %vm1281 = vcmp.lt.s32.totalorder %v1262, 1
      %vm1282 = vcmp.lt.s32.totalorder %v1262, 2
      %vm1283 = vcmp.lt.s32.totalorder %v1262, 3
      %vm1284 = vcmp.lt.s32.totalorder %v1262, 4
      %v1285 = vsel %vm1281, %v1265, %v1268
      %v1286 = vsel %vm1284, %v1274, 2102212464
      %v1287 = vsel %vm1283, %v1271, %v1286
      %v1288 = vsel %vm1282, %v1285, %v1287
      %v1289 = vsel %vm1281, %v1268, %v1271
      %v1290 = vsel %vm1284, %v1277, 920167782
      %v1291 = vsel %vm1283, %v1274, %v1290
      %v1292 = vsel %vm1282, %v1289, %v1291
      %v1293 = vsel %vm1281, %v1271, %v1274
      %v1294 = vsel %vm1284, %v1280, 1326507024
      %v1295 = vsel %vm1283, %v1277, %v1294
      %v1296 = vsel %vm1282, %v1293, %v1295
      %v1297 = vshll.u32 %v1257, 8
      %v1298 = vand.u32 %v1297, 65535
      %v1299 = vshrl.u32 %v1297, 16
      %v1300 = vand.u32 %v1296, 65535
      %v1301 = vshrl.u32 %v1296, 16
      %v1302 = vmul.u32 %v1298, %v1300
      %v1303 = vmul.u32 %v1298, %v1301
      %v1304 = vmul.u32 %v1299, %v1300
      %v1305 = vmul.u32 %v1299, %v1301
      %v1306 = vshll.u32 %v1303, 16
      %v1307 = vshrl.u32 %v1303, 16
      %v1308 = vshll.u32 %v1304, 16
      %v1309 = vshrl.u32 %v1304, 16
      %vm1310 = vc.u32 %v1302, %v1306
      %v1311 = vsel %vm1310, 1, 0
      %v1312 = vadd.s32 %v1302, %v1306
      %v1313 = vadd.s32 %v1305, %v1311
      %vm1314 = vc.u32 %v1312, %v1308
      %v1315 = vsel %vm1314, 1, 0
      %v1316 = vadd.s32 %v1312, %v1308
      %v1317 = vadd.s32 %v1313, %v1315
      %v1318 = vadd.s32 %v1317, %v1307
      %v1319 = vadd.s32 %v1318, %v1309
      %v1320 = vand.u32 %v1297, 65535
      %v1321 = vshrl.u32 %v1297, 16
      %v1322 = vand.u32 %v1292, 65535
      %v1323 = vshrl.u32 %v1292, 16
      %v1324 = vmul.u32 %v1320, %v1322
      %v1325 = vmul.u32 %v1320, %v1323
      %v1326 = vmul.u32 %v1321, %v1322
      %v1327 = vmul.u32 %v1321, %v1323
      %v1328 = vshll.u32 %v1325, 16
      %v1329 = vshrl.u32 %v1325, 16
      %v1330 = vshll.u32 %v1326, 16
      %v1331 = vshrl.u32 %v1326, 16
      %vm1332 = vc.u32 %v1324, %v1328
      %v1333 = vsel %vm1332, 1, 0
      %v1334 = vadd.s32 %v1324, %v1328
      %v1335 = vadd.s32 %v1327, %v1333
      %vm1336 = vc.u32 %v1334, %v1330
      %v1337 = vsel %vm1336, 1, 0
      %v1338 = vadd.s32 %v1334, %v1330
      %v1339 = vadd.s32 %v1335, %v1337
      %v1340 = vadd.s32 %v1339, %v1329
      %v1341 = vadd.s32 %v1340, %v1331
      %v1342 = vmul.u32 %v1297, %v1288
      %v1343 = vadd.s32 %v1319, %v1338
      %vm1344 = vc.u32 %v1319, %v1338
      %v1345 = vadd.s32 %v1341, 1
      %v1346 = vsel %vm1344, %v1345, %v1341
      %v1347 = vadd.s32 %v1342, %v1346
      %v1348 = vadd.s32 %v1347, 536870912
      %v1349 = vshrl.u32 %v1348, 30
      %v1350 = vshll.u32 %v1349, 30
      %v1351 = vsub.s32 %v1347, %v1350
      %vm1352 = vcmp.lt.s32.totalorder %v1351, 0
      %v1353 = vsub.s32 0, %v1351
      %v1354 = vsel %vm1352, %v1353, %v1351
      %v1355 = vclz %v1354
      %v1356 = vsub.s32 %v1355, 2
      %vm1357 = vcmp.gt.s32.totalorder 0, %v1356
      %v1358 = vsel %vm1357, 0, %v1356
      %v1359 = vsub.s32 32, %v1358
      %v1360 = vshll.u32 %v1351, %v1358
      %v1361 = vshrl.u32 %v1343, %v1359
      %v1362 = vor.u32 %v1360, %v1361
      %v1363 = vsub.s32 4294967266, %v1358
      %v1364 = vadd.s32 %v1363, 127
      %v1365 = vshll.u32 %v1364, 23
      %v1366 = vor.u32 4788187, %v1365
      %v1367 = vand.u32 2147483647, %v1366
      %v1369 = vcvt.s32.f32 %v1362
      %v1370 = vmul.f32 %v1369, %v1367
      %v1371 = vxor.u32 %v1370, 2147483648
      %v1372 = vsel %vm1251, %v1371, %v1370
      %v1373 = vsub.s32 4, %v1349
      %v1374 = vsel %vm1251, %v1373, %v1349
      %v1375 = vsel %vm1250, %v626, %v1372
      %v1376 = vsel %vm1250, 0, %v1374
      %v1377 = vmul.f32 %v1375, %v1375
      %v1378 = vmul.f32 %v1377, -0.001358992
      %v1379 = vadd.f32 %v1378, 0.041655596
      %v1380 = vmul.f32 %v1377, %v1379
      %v1381 = vadd.f32 %v1380, -0.4999988
      %v1382 = vmul.f32 %v1377, %v1381
      %v1383 = vadd.f32 1.0, %v1382
      %v1384 = vmul.f32 %v1375, %v1375
      %v1385 = vmul.f32 %v1384, -0.00019511016
      %v1386 = vadd.f32 %v1385, 0.008332121
      %v1387 = vmul.f32 %v1384, %v1386
      %v1388 = vadd.f32 %v1387, -0.16666654
      %v1389 = vmul.f32 %v1384, %v1388
      %v1390 = vadd.f32 %v1389, 1.0
      %v1391 = vmul.f32 %v1390, %v1375
      %vm1392 = vweird.f32 %v626
      %v1393 = vand.u32 %v1376, 3
      %vm1394 = vcmp.lt.s32.totalorder %v1393, 2
      %vm1395 = vcmp.eq.s32.totalorder %v1393, 0
      %v1396 = vxor.u32 %v1391, 2147483648
      %v1397 = vsel %vm1395, %v1383, %v1396
      %vm1398 = vcmp.eq.s32.totalorder %v1393, 2
      %v1399 = vxor.u32 %v1383, 2147483648
      %v1400 = vsel %vm1398, %v1399, %v1391
      %v1401 = vsel %vm1394, %v1397, %v1400
      %v1402 = vsel %vm1392, nan, %v1401
      %v1403 = vand.u32 2147483647, %v627
      %vm1404 = vcmp.le.f32.partialorder %v1403, 0.7853982
      %vm1405 = vcmp.lt.s32.totalorder %v627, 0
      %v1406 = vand.u32 %v627, 2139095040
      %v1407 = vshrl.u32 %v1406, 23
      %v1408 = vsub.s32 %v1407, 127
      %v1409 = vand.u32 2147483647, %v627
      %v1410 = vand.u32 %v1409, 8388607
      %v1411 = vor.u32 %v1410, 8388608
      %v1412 = vsub.s32 0, %v1411
      %v1413 = vadd.s32 %v1408, 1
      %vm1414 = vcmp.gt.s32.totalorder %v1413, 0
      %v1415 = vsel %vm1414, %v1413, 0
      %v1416 = vshrl.u32 %v1415, 5
      %v1417 = vand.u32 %v1415, 31
      %v1418 = vsub.s32 32, %v1417
      %v1419 = vshrl.u32 683565275, %v1418
      %v1420 = vshll.u32 683565275, %v1417
      %v1421 = vshrl.u32 2475754826, %v1418
      %v1422 = vor.u32 %v1420, %v1421
      %v1423 = vshll.u32 2475754826, %v1417
      %v1424 = vshrl.u32 2131351028, %v1418
      %v1425 = vor.u32 %v1423, %v1424
      %v1426 = vshll.u32 2131351028, %v1417
      %v1427 = vshrl.u32 2102212464, %v1418
      %v1428 = vor.u32 %v1426, %v1427
      %v1429 = vshll.u32 2102212464, %v1417
      %v1430 = vshrl.u32 920167782, %v1418
      %v1431 = vor.u32 %v1429, %v1430
      %v1432 = vshll.u32 920167782, %v1417
      %v1433 = vshrl.u32 1326507024, %v1418
      %v1434 = vor.u32 %v1432, %v1433
      %vm1435 = vcmp.lt.s32.totalorder %v1416, 1
      %vm1436 = vcmp.lt.s32.totalorder %v1416, 2
      %vm1437 = vcmp.lt.s32.totalorder %v1416, 3
      %vm1438 = vcmp.lt.s32.totalorder %v1416, 4
      %v1439 = vsel %vm1435, %v1419, %v1422
      %v1440 = vsel %vm1438, %v1428, 2102212464
      %v1441 = vsel %vm1437, %v1425, %v1440
      %v1442 = vsel %vm1436, %v1439, %v1441
      %v1443 = vsel %vm1435, %v1422, %v1425
      %v1444 = vsel %vm1438, %v1431, 920167782
      %v1445 = vsel %vm1437, %v1428, %v1444
      %v1446 = vsel %vm1436, %v1443, %v1445
      %v1447 = vsel %vm1435, %v1425, %v1428
      %v1448 = vsel %vm1438, %v1434, 1326507024
      %v1449 = vsel %vm1437, %v1431, %v1448
      %v1450 = vsel %vm1436, %v1447, %v1449
      %v1451 = vshll.u32 %v1411, 8
      %v1452 = vand.u32 %v1451, 65535
      %v1453 = vshrl.u32 %v1451, 16
      %v1454 = vand.u32 %v1450, 65535
      %v1455 = vshrl.u32 %v1450, 16
      %v1456 = vmul.u32 %v1452, %v1454
      %v1457 = vmul.u32 %v1452, %v1455
      %v1458 = vmul.u32 %v1453, %v1454
      %v1459 = vmul.u32 %v1453, %v1455
      %v1460 = vshll.u32 %v1457, 16
      %v1461 = vshrl.u32 %v1457, 16
      %v1462 = vshll.u32 %v1458, 16
      %v1463 = vshrl.u32 %v1458, 16
      %vm1464 = vc.u32 %v1456, %v1460
      %v1465 = vsel %vm1464, 1, 0
      %v1466 = vadd.s32 %v1456, %v1460
      %v1467 = vadd.s32 %v1459, %v1465
      %vm1468 = vc.u32 %v1466, %v1462
      %v1469 = vsel %vm1468, 1, 0
      %v1470 = vadd.s32 %v1466, %v1462
      %v1471 = vadd.s32 %v1467, %v1469
      %v1472 = vadd.s32 %v1471, %v1461
      %v1473 = vadd.s32 %v1472, %v1463
      %v1474 = vand.u32 %v1451, 65535
      %v1475 = vshrl.u32 %v1451, 16
      %v1476 = vand.u32 %v1446, 65535
      %v1477 = vshrl.u32 %v1446, 16
      %v1478 = vmul.u32 %v1474, %v1476
      %v1479 = vmul.u32 %v1474, %v1477
      %v1480 = vmul.u32 %v1475, %v1476
      %v1481 = vmul.u32 %v1475, %v1477
      %v1482 = vshll.u32 %v1479, 16
      %v1483 = vshrl.u32 %v1479, 16
      %v1484 = vshll.u32 %v1480, 16
      %v1485 = vshrl.u32 %v1480, 16
      %vm1486 = vc.u32 %v1478, %v1482
      %v1487 = vsel %vm1486, 1, 0
      %v1488 = vadd.s32 %v1478, %v1482
      %v1489 = vadd.s32 %v1481, %v1487
      %vm1490 = vc.u32 %v1488, %v1484
      %v1491 = vsel %vm1490, 1, 0
      %v1492 = vadd.s32 %v1488, %v1484
      %v1493 = vadd.s32 %v1489, %v1491
      %v1494 = vadd.s32 %v1493, %v1483
      %v1495 = vadd.s32 %v1494, %v1485
      %v1496 = vmul.u32 %v1451, %v1442
      %v1497 = vadd.s32 %v1473, %v1492
      %vm1498 = vc.u32 %v1473, %v1492
      %v1499 = vadd.s32 %v1495, 1
      %v1500 = vsel %vm1498, %v1499, %v1495
      %v1501 = vadd.s32 %v1496, %v1500
      %v1502 = vadd.s32 %v1501, 536870912
      %v1503 = vshrl.u32 %v1502, 30
      %v1504 = vshll.u32 %v1503, 30
      %v1505 = vsub.s32 %v1501, %v1504
      %vm1506 = vcmp.lt.s32.totalorder %v1505, 0
      %v1507 = vsub.s32 0, %v1505
      %v1508 = vsel %vm1506, %v1507, %v1505
      %v1509 = vclz %v1508
      %v1510 = vsub.s32 %v1509, 2
      %vm1511 = vcmp.gt.s32.totalorder 0, %v1510
      %v1512 = vsel %vm1511, 0, %v1510
      %v1513 = vsub.s32 32, %v1512
      %v1514 = vshll.u32 %v1505, %v1512
      %v1515 = vshrl.u32 %v1497, %v1513
      %v1516 = vor.u32 %v1514, %v1515
      %v1517 = vsub.s32 4294967266, %v1512
      %v1518 = vadd.s32 %v1517, 127
      %v1519 = vshll.u32 %v1518, 23
      %v1520 = vor.u32 4788187, %v1519
      %v1521 = vand.u32 2147483647, %v1520
      %v1523 = vcvt.s32.f32 %v1516
      %v1524 = vmul.f32 %v1523, %v1521
      %v1525 = vxor.u32 %v1524, 2147483648
      %v1526 = vsel %vm1405, %v1525, %v1524
      %v1527 = vsub.s32 4, %v1503
      %v1528 = vsel %vm1405, %v1527, %v1503
      %v1529 = vsel %vm1404, %v627, %v1526
      %v1530 = vsel %vm1404, 0, %v1528
      %v1531 = vmul.f32 %v1529, %v1529
      %v1532 = vmul.f32 %v1531, -0.001358992
      %v1533 = vadd.f32 %v1532, 0.041655596
      %v1534 = vmul.f32 %v1531, %v1533
      %v1535 = vadd.f32 %v1534, -0.4999988
      %v1536 = vmul.f32 %v1531, %v1535
      %v1537 = vadd.f32 1.0, %v1536
      %v1538 = vmul.f32 %v1529, %v1529
      %v1539 = vmul.f32 %v1538, -0.00019511016
      %v1540 = vadd.f32 %v1539, 0.008332121
      %v1541 = vmul.f32 %v1538, %v1540
      %v1542 = vadd.f32 %v1541, -0.16666654
      %v1543 = vmul.f32 %v1538, %v1542
      %v1544 = vadd.f32 %v1543, 1.0
      %v1545 = vmul.f32 %v1544, %v1529
      %vm1546 = vweird.f32 %v627
      %v1547 = vand.u32 %v1530, 3
      %vm1548 = vcmp.lt.s32.totalorder %v1547, 2
      %vm1549 = vcmp.eq.s32.totalorder %v1547, 0
      %v1550 = vxor.u32 %v1545, 2147483648
      %v1551 = vsel %vm1549, %v1537, %v1550
      %vm1552 = vcmp.eq.s32.totalorder %v1547, 2
      %v1553 = vxor.u32 %v1537, 2147483648
      %v1554 = vsel %vm1552, %v1553, %v1545
      %v1555 = vsel %vm1548, %v1551, %v1554
      %v1556 = vsel %vm1546, nan, %v1555
      %v1557 = vand.u32 2147483647, %v628
      %vm1558 = vcmp.le.f32.partialorder %v1557, 0.7853982
      %vm1559 = vcmp.lt.s32.totalorder %v628, 0
      %v1560 = vand.u32 %v628, 2139095040
      %v1561 = vshrl.u32 %v1560, 23
      %v1562 = vsub.s32 %v1561, 127
      %v1563 = vand.u32 2147483647, %v628
      %v1564 = vand.u32 %v1563, 8388607
      %v1565 = vor.u32 %v1564, 8388608
      %v1566 = vsub.s32 0, %v1565
      %v1567 = vadd.s32 %v1562, 1
      %vm1568 = vcmp.gt.s32.totalorder %v1567, 0
      %v1569 = vsel %vm1568, %v1567, 0
      %v1570 = vshrl.u32 %v1569, 5
      %v1571 = vand.u32 %v1569, 31
      %v1572 = vsub.s32 32, %v1571
      %v1573 = vshrl.u32 683565275, %v1572
      %v1574 = vshll.u32 683565275, %v1571
      %v1575 = vshrl.u32 2475754826, %v1572
      %v1576 = vor.u32 %v1574, %v1575
      %v1577 = vshll.u32 2475754826, %v1571
      %v1578 = vshrl.u32 2131351028, %v1572
      %v1579 = vor.u32 %v1577, %v1578
      %v1580 = vshll.u32 2131351028, %v1571
      %v1581 = vshrl.u32 2102212464, %v1572
      %v1582 = vor.u32 %v1580, %v1581
      %v1583 = vshll.u32 2102212464, %v1571
      %v1584 = vshrl.u32 920167782, %v1572
      %v1585 = vor.u32 %v1583, %v1584
      %v1586 = vshll.u32 920167782, %v1571
      %v1587 = vshrl.u32 1326507024, %v1572
      %v1588 = vor.u32 %v1586, %v1587
      %vm1589 = vcmp.lt.s32.totalorder %v1570, 1
      %vm1590 = vcmp.lt.s32.totalorder %v1570, 2
      %vm1591 = vcmp.lt.s32.totalorder %v1570, 3
      %vm1592 = vcmp.lt.s32.totalorder %v1570, 4
      %v1593 = vsel %vm1589, %v1573, %v1576
      %v1594 = vsel %vm1592, %v1582, 2102212464
      %v1595 = vsel %vm1591, %v1579, %v1594
      %v1596 = vsel %vm1590, %v1593, %v1595
      %v1597 = vsel %vm1589, %v1576, %v1579
      %v1598 = vsel %vm1592, %v1585, 920167782
      %v1599 = vsel %vm1591, %v1582, %v1598
      %v1600 = vsel %vm1590, %v1597, %v1599
      %v1601 = vsel %vm1589, %v1579, %v1582
      %v1602 = vsel %vm1592, %v1588, 1326507024
      %v1603 = vsel %vm1591, %v1585, %v1602
      %v1604 = vsel %vm1590, %v1601, %v1603
      %v1605 = vshll.u32 %v1565, 8
      %v1606 = vand.u32 %v1605, 65535
      %v1607 = vshrl.u32 %v1605, 16
      %v1608 = vand.u32 %v1604, 65535
      %v1609 = vshrl.u32 %v1604, 16
      %v1610 = vmul.u32 %v1606, %v1608
      %v1611 = vmul.u32 %v1606, %v1609
      %v1612 = vmul.u32 %v1607, %v1608
      %v1613 = vmul.u32 %v1607, %v1609
      %v1614 = vshll.u32 %v1611, 16
      %v1615 = vshrl.u32 %v1611, 16
      %v1616 = vshll.u32 %v1612, 16
      %v1617 = vshrl.u32 %v1612, 16
      %vm1618 = vc.u32 %v1610, %v1614
      %v1619 = vsel %vm1618, 1, 0
      %v1620 = vadd.s32 %v1610, %v1614
      %v1621 = vadd.s32 %v1613, %v1619
      %vm1622 = vc.u32 %v1620, %v1616
      %v1623 = vsel %vm1622, 1, 0
      %v1624 = vadd.s32 %v1620, %v1616
      %v1625 = vadd.s32 %v1621, %v1623
      %v1626 = vadd.s32 %v1625, %v1615
      %v1627 = vadd.s32 %v1626, %v1617
      %v1628 = vand.u32 %v1605, 65535
      %v1629 = vshrl.u32 %v1605, 16
      %v1630 = vand.u32 %v1600, 65535
      %v1631 = vshrl.u32 %v1600, 16
      %v1632 = vmul.u32 %v1628, %v1630
      %v1633 = vmul.u32 %v1628, %v1631
      %v1634 = vmul.u32 %v1629, %v1630
      %v1635 = vmul.u32 %v1629, %v1631
      %v1636 = vshll.u32 %v1633, 16
      %v1637 = vshrl.u32 %v1633, 16
      %v1638 = vshll.u32 %v1634, 16
      %v1639 = vshrl.u32 %v1634, 16
      %vm1640 = vc.u32 %v1632, %v1636
      %v1641 = vsel %vm1640, 1, 0
      %v1642 = vadd.s32 %v1632, %v1636
      %v1643 = vadd.s32 %v1635, %v1641
      %vm1644 = vc.u32 %v1642, %v1638
      %v1645 = vsel %vm1644, 1, 0
      %v1646 = vadd.s32 %v1642, %v1638
      %v1647 = vadd.s32 %v1643, %v1645
      %v1648 = vadd.s32 %v1647, %v1637
      %v1649 = vadd.s32 %v1648, %v1639
      %v1650 = vmul.u32 %v1605, %v1596
      %v1651 = vadd.s32 %v1627, %v1646
      %vm1652 = vc.u32 %v1627, %v1646
      %v1653 = vadd.s32 %v1649, 1
      %v1654 = vsel %vm1652, %v1653, %v1649
      %v1655 = vadd.s32 %v1650, %v1654
      %v1656 = vadd.s32 %v1655, 536870912
      %v1657 = vshrl.u32 %v1656, 30
      %v1658 = vshll.u32 %v1657, 30
      %v1659 = vsub.s32 %v1655, %v1658
      %vm1660 = vcmp.lt.s32.totalorder %v1659, 0
      %v1661 = vsub.s32 0, %v1659
      %v1662 = vsel %vm1660, %v1661, %v1659
      %v1663 = vclz %v1662
      %v1664 = vsub.s32 %v1663, 2
      %vm1665 = vcmp.gt.s32.totalorder 0, %v1664
      %v1666 = vsel %vm1665, 0, %v1664
      %v1667 = vsub.s32 32, %v1666
      %v1668 = vshll.u32 %v1659, %v1666
      %v1669 = vshrl.u32 %v1651, %v1667
      %v1670 = vor.u32 %v1668, %v1669
      %v1671 = vsub.s32 4294967266, %v1666
      %v1672 = vadd.s32 %v1671, 127
      %v1673 = vshll.u32 %v1672, 23
      %v1674 = vor.u32 4788187, %v1673
      %v1675 = vand.u32 2147483647, %v1674
      %v1677 = vcvt.s32.f32 %v1670
      %v1678 = vmul.f32 %v1677, %v1675
      %v1679 = vxor.u32 %v1678, 2147483648
      %v1680 = vsel %vm1559, %v1679, %v1678
      %v1681 = vsub.s32 4, %v1657
      %v1682 = vsel %vm1559, %v1681, %v1657
      %v1683 = vsel %vm1558, %v628, %v1680
      %v1684 = vsel %vm1558, 0, %v1682
      %v1685 = vmul.f32 %v1683, %v1683
      %v1686 = vmul.f32 %v1685, -0.001358992
      %v1687 = vadd.f32 %v1686, 0.041655596
      %v1688 = vmul.f32 %v1685, %v1687
      %v1689 = vadd.f32 %v1688, -0.4999988
      %v1690 = vmul.f32 %v1685, %v1689
      %v1691 = vadd.f32 1.0, %v1690
      %v1692 = vmul.f32 %v1683, %v1683
      %v1693 = vmul.f32 %v1692, -0.00019511016
      %v1694 = vadd.f32 %v1693, 0.008332121
      %v1695 = vmul.f32 %v1692, %v1694
      %v1696 = vadd.f32 %v1695, -0.16666654
      %v1697 = vmul.f32 %v1692, %v1696
      %v1698 = vadd.f32 %v1697, 1.0
      %v1699 = vmul.f32 %v1698, %v1683
      %vm1700 = vweird.f32 %v628
      %v1701 = vand.u32 %v1684, 3
      %vm1702 = vcmp.lt.s32.totalorder %v1701, 2
      %vm1703 = vcmp.eq.s32.totalorder %v1701, 0
      %v1704 = vxor.u32 %v1699, 2147483648
      %v1705 = vsel %vm1703, %v1691, %v1704
      %vm1706 = vcmp.eq.s32.totalorder %v1701, 2
      %v1707 = vxor.u32 %v1691, 2147483648
      %v1708 = vsel %vm1706, %v1707, %v1699
      %v1709 = vsel %vm1702, %v1705, %v1708
      %v1710 = vsel %vm1700, nan, %v1709
      %v1711 = vand.u32 2147483647, %v629
      %vm1712 = vcmp.le.f32.partialorder %v1711, 0.7853982
      %vm1713 = vcmp.lt.s32.totalorder %v629, 0
      %v1714 = vand.u32 %v629, 2139095040
      %v1715 = vshrl.u32 %v1714, 23
      %v1716 = vsub.s32 %v1715, 127
      %v1717 = vand.u32 2147483647, %v629
      %v1718 = vand.u32 %v1717, 8388607
      %v1719 = vor.u32 %v1718, 8388608
      %v1720 = vsub.s32 0, %v1719
      %v1721 = vadd.s32 %v1716, 1
      %vm1722 = vcmp.gt.s32.totalorder %v1721, 0
      %v1723 = vsel %vm1722, %v1721, 0
      %v1724 = vshrl.u32 %v1723, 5
      %v1725 = vand.u32 %v1723, 31
      %v1726 = vsub.s32 32, %v1725
      %v1727 = vshrl.u32 683565275, %v1726
      %v1728 = vshll.u32 683565275, %v1725
      %v1729 = vshrl.u32 2475754826, %v1726
      %v1730 = vor.u32 %v1728, %v1729
      %v1731 = vshll.u32 2475754826, %v1725
      %v1732 = vshrl.u32 2131351028, %v1726
      %v1733 = vor.u32 %v1731, %v1732
      %v1734 = vshll.u32 2131351028, %v1725
      %v1735 = vshrl.u32 2102212464, %v1726
      %v1736 = vor.u32 %v1734, %v1735
      %v1737 = vshll.u32 2102212464, %v1725
      %v1738 = vshrl.u32 920167782, %v1726
      %v1739 = vor.u32 %v1737, %v1738
      %v1740 = vshll.u32 920167782, %v1725
      %v1741 = vshrl.u32 1326507024, %v1726
      %v1742 = vor.u32 %v1740, %v1741
      %vm1743 = vcmp.lt.s32.totalorder %v1724, 1
      %vm1744 = vcmp.lt.s32.totalorder %v1724, 2
      %vm1745 = vcmp.lt.s32.totalorder %v1724, 3
      %vm1746 = vcmp.lt.s32.totalorder %v1724, 4
      %v1747 = vsel %vm1743, %v1727, %v1730
      %v1748 = vsel %vm1746, %v1736, 2102212464
      %v1749 = vsel %vm1745, %v1733, %v1748
      %v1750 = vsel %vm1744, %v1747, %v1749
      %v1751 = vsel %vm1743, %v1730, %v1733
      %v1752 = vsel %vm1746, %v1739, 920167782
      %v1753 = vsel %vm1745, %v1736, %v1752
      %v1754 = vsel %vm1744, %v1751, %v1753
      %v1755 = vsel %vm1743, %v1733, %v1736
      %v1756 = vsel %vm1746, %v1742, 1326507024
      %v1757 = vsel %vm1745, %v1739, %v1756
      %v1758 = vsel %vm1744, %v1755, %v1757
      %v1759 = vshll.u32 %v1719, 8
      %v1760 = vand.u32 %v1759, 65535
      %v1761 = vshrl.u32 %v1759, 16
      %v1762 = vand.u32 %v1758, 65535
      %v1763 = vshrl.u32 %v1758, 16
      %v1764 = vmul.u32 %v1760, %v1762
      %v1765 = vmul.u32 %v1760, %v1763
      %v1766 = vmul.u32 %v1761, %v1762
      %v1767 = vmul.u32 %v1761, %v1763
      %v1768 = vshll.u32 %v1765, 16
      %v1769 = vshrl.u32 %v1765, 16
      %v1770 = vshll.u32 %v1766, 16
      %v1771 = vshrl.u32 %v1766, 16
      %vm1772 = vc.u32 %v1764, %v1768
      %v1773 = vsel %vm1772, 1, 0
      %v1774 = vadd.s32 %v1764, %v1768
      %v1775 = vadd.s32 %v1767, %v1773
      %vm1776 = vc.u32 %v1774, %v1770
      %v1777 = vsel %vm1776, 1, 0
      %v1778 = vadd.s32 %v1774, %v1770
      %v1779 = vadd.s32 %v1775, %v1777
      %v1780 = vadd.s32 %v1779, %v1769
      %v1781 = vadd.s32 %v1780, %v1771
      %v1782 = vand.u32 %v1759, 65535
      %v1783 = vshrl.u32 %v1759, 16
      %v1784 = vand.u32 %v1754, 65535
      %v1785 = vshrl.u32 %v1754, 16
      %v1786 = vmul.u32 %v1782, %v1784
      %v1787 = vmul.u32 %v1782, %v1785
      %v1788 = vmul.u32 %v1783, %v1784
      %v1789 = vmul.u32 %v1783, %v1785
      %v1790 = vshll.u32 %v1787, 16
      %v1791 = vshrl.u32 %v1787, 16
      %v1792 = vshll.u32 %v1788, 16
      %v1793 = vshrl.u32 %v1788, 16
      %vm1794 = vc.u32 %v1786, %v1790
      %v1795 = vsel %vm1794, 1, 0
      %v1796 = vadd.s32 %v1786, %v1790
      %v1797 = vadd.s32 %v1789, %v1795
      %vm1798 = vc.u32 %v1796, %v1792
      %v1799 = vsel %vm1798, 1, 0
      %v1800 = vadd.s32 %v1796, %v1792
      %v1801 = vadd.s32 %v1797, %v1799
      %v1802 = vadd.s32 %v1801, %v1791
      %v1803 = vadd.s32 %v1802, %v1793
      %v1804 = vmul.u32 %v1759, %v1750
      %v1805 = vadd.s32 %v1781, %v1800
      %vm1806 = vc.u32 %v1781, %v1800
      %v1807 = vadd.s32 %v1803, 1
      %v1808 = vsel %vm1806, %v1807, %v1803
      %v1809 = vadd.s32 %v1804, %v1808
      %v1810 = vadd.s32 %v1809, 536870912
      %v1811 = vshrl.u32 %v1810, 30
      %v1812 = vshll.u32 %v1811, 30
      %v1813 = vsub.s32 %v1809, %v1812
      %vm1814 = vcmp.lt.s32.totalorder %v1813, 0
      %v1815 = vsub.s32 0, %v1813
      %v1816 = vsel %vm1814, %v1815, %v1813
      %v1817 = vclz %v1816
      %v1818 = vsub.s32 %v1817, 2
      %vm1819 = vcmp.gt.s32.totalorder 0, %v1818
      %v1820 = vsel %vm1819, 0, %v1818
      %v1821 = vsub.s32 32, %v1820
      %v1822 = vshll.u32 %v1813, %v1820
      %v1823 = vshrl.u32 %v1805, %v1821
      %v1824 = vor.u32 %v1822, %v1823
      %v1825 = vsub.s32 4294967266, %v1820
      %v1826 = vadd.s32 %v1825, 127
      %v1827 = vshll.u32 %v1826, 23
      %v1828 = vor.u32 4788187, %v1827
      %v1829 = vand.u32 2147483647, %v1828
      %v1831 = vcvt.s32.f32 %v1824
      %v1832 = vmul.f32 %v1831, %v1829
      %v1833 = vxor.u32 %v1832, 2147483648
      %v1834 = vsel %vm1713, %v1833, %v1832
      %v1835 = vsub.s32 4, %v1811
      %v1836 = vsel %vm1713, %v1835, %v1811
      %v1837 = vsel %vm1712, %v629, %v1834
      %v1838 = vsel %vm1712, 0, %v1836
      %v1839 = vmul.f32 %v1837, %v1837
      %v1840 = vmul.f32 %v1839, -0.001358992
      %v1841 = vadd.f32 %v1840, 0.041655596
      %v1842 = vmul.f32 %v1839, %v1841
      %v1843 = vadd.f32 %v1842, -0.4999988
      %v1844 = vmul.f32 %v1839, %v1843
      %v1845 = vadd.f32 1.0, %v1844
      %v1846 = vmul.f32 %v1837, %v1837
      %v1847 = vmul.f32 %v1846, -0.00019511016
      %v1848 = vadd.f32 %v1847, 0.008332121
      %v1849 = vmul.f32 %v1846, %v1848
      %v1850 = vadd.f32 %v1849, -0.16666654
      %v1851 = vmul.f32 %v1846, %v1850
      %v1852 = vadd.f32 %v1851, 1.0
      %v1853 = vmul.f32 %v1852, %v1837
      %vm1854 = vweird.f32 %v629
      %v1855 = vand.u32 %v1838, 3
      %vm1856 = vcmp.lt.s32.totalorder %v1855, 2
      %vm1857 = vcmp.eq.s32.totalorder %v1855, 0
      %v1858 = vxor.u32 %v1853, 2147483648
      %v1859 = vsel %vm1857, %v1845, %v1858
      %vm1860 = vcmp.eq.s32.totalorder %v1855, 2
      %v1861 = vxor.u32 %v1845, 2147483648
      %v1862 = vsel %vm1860, %v1861, %v1853
      %v1863 = vsel %vm1856, %v1859, %v1862
      %v1864 = vsel %vm1854, nan, %v1863
      %v1865 = vand.u32 2147483647, %v630
      %vm1866 = vcmp.le.f32.partialorder %v1865, 0.7853982
      %vm1867 = vcmp.lt.s32.totalorder %v630, 0
      %v1868 = vand.u32 %v630, 2139095040
      %v1869 = vshrl.u32 %v1868, 23
      %v1870 = vsub.s32 %v1869, 127
      %v1871 = vand.u32 2147483647, %v630
      %v1872 = vand.u32 %v1871, 8388607
      %v1873 = vor.u32 %v1872, 8388608
      %v1874 = vsub.s32 0, %v1873
      %v1875 = vadd.s32 %v1870, 1
      %vm1876 = vcmp.gt.s32.totalorder %v1875, 0
      %v1877 = vsel %vm1876, %v1875, 0
      %v1878 = vshrl.u32 %v1877, 5
      %v1879 = vand.u32 %v1877, 31
      %v1880 = vsub.s32 32, %v1879
      %v1881 = vshrl.u32 683565275, %v1880
      %v1882 = vshll.u32 683565275, %v1879
      %v1883 = vshrl.u32 2475754826, %v1880
      %v1884 = vor.u32 %v1882, %v1883
      %v1885 = vshll.u32 2475754826, %v1879
      %v1886 = vshrl.u32 2131351028, %v1880
      %v1887 = vor.u32 %v1885, %v1886
      %v1888 = vshll.u32 2131351028, %v1879
      %v1889 = vshrl.u32 2102212464, %v1880
      %v1890 = vor.u32 %v1888, %v1889
      %v1891 = vshll.u32 2102212464, %v1879
      %v1892 = vshrl.u32 920167782, %v1880
      %v1893 = vor.u32 %v1891, %v1892
      %v1894 = vshll.u32 920167782, %v1879
      %v1895 = vshrl.u32 1326507024, %v1880
      %v1896 = vor.u32 %v1894, %v1895
      %vm1897 = vcmp.lt.s32.totalorder %v1878, 1
      %vm1898 = vcmp.lt.s32.totalorder %v1878, 2
      %vm1899 = vcmp.lt.s32.totalorder %v1878, 3
      %vm1900 = vcmp.lt.s32.totalorder %v1878, 4
      %v1901 = vsel %vm1897, %v1881, %v1884
      %v1902 = vsel %vm1900, %v1890, 2102212464
      %v1903 = vsel %vm1899, %v1887, %v1902
      %v1904 = vsel %vm1898, %v1901, %v1903
      %v1905 = vsel %vm1897, %v1884, %v1887
      %v1906 = vsel %vm1900, %v1893, 920167782
      %v1907 = vsel %vm1899, %v1890, %v1906
      %v1908 = vsel %vm1898, %v1905, %v1907
      %v1909 = vsel %vm1897, %v1887, %v1890
      %v1910 = vsel %vm1900, %v1896, 1326507024
      %v1911 = vsel %vm1899, %v1893, %v1910
      %v1912 = vsel %vm1898, %v1909, %v1911
      %v1913 = vshll.u32 %v1873, 8
      %v1914 = vand.u32 %v1913, 65535
      %v1915 = vshrl.u32 %v1913, 16
      %v1916 = vand.u32 %v1912, 65535
      %v1917 = vshrl.u32 %v1912, 16
      %v1918 = vmul.u32 %v1914, %v1916
      %v1919 = vmul.u32 %v1914, %v1917
      %v1920 = vmul.u32 %v1915, %v1916
      %v1921 = vmul.u32 %v1915, %v1917
      %v1922 = vshll.u32 %v1919, 16
      %v1923 = vshrl.u32 %v1919, 16
      %v1924 = vshll.u32 %v1920, 16
      %v1925 = vshrl.u32 %v1920, 16
      %vm1926 = vc.u32 %v1918, %v1922
      %v1927 = vsel %vm1926, 1, 0
      %v1928 = vadd.s32 %v1918, %v1922
      %v1929 = vadd.s32 %v1921, %v1927
      %vm1930 = vc.u32 %v1928, %v1924
      %v1931 = vsel %vm1930, 1, 0
      %v1932 = vadd.s32 %v1928, %v1924
      %v1933 = vadd.s32 %v1929, %v1931
      %v1934 = vadd.s32 %v1933, %v1923
      %v1935 = vadd.s32 %v1934, %v1925
      %v1936 = vand.u32 %v1913, 65535
      %v1937 = vshrl.u32 %v1913, 16
      %v1938 = vand.u32 %v1908, 65535
      %v1939 = vshrl.u32 %v1908, 16
      %v1940 = vmul.u32 %v1936, %v1938
      %v1941 = vmul.u32 %v1936, %v1939
      %v1942 = vmul.u32 %v1937, %v1938
      %v1943 = vmul.u32 %v1937, %v1939
      %v1944 = vshll.u32 %v1941, 16
      %v1945 = vshrl.u32 %v1941, 16
      %v1946 = vshll.u32 %v1942, 16
      %v1947 = vshrl.u32 %v1942, 16
      %vm1948 = vc.u32 %v1940, %v1944
      %v1949 = vsel %vm1948, 1, 0
      %v1950 = vadd.s32 %v1940, %v1944
      %v1951 = vadd.s32 %v1943, %v1949
      %vm1952 = vc.u32 %v1950, %v1946
      %v1953 = vsel %vm1952, 1, 0
      %v1954 = vadd.s32 %v1950, %v1946
      %v1955 = vadd.s32 %v1951, %v1953
      %v1956 = vadd.s32 %v1955, %v1945
      %v1957 = vadd.s32 %v1956, %v1947
      %v1958 = vmul.u32 %v1913, %v1904
      %v1959 = vadd.s32 %v1935, %v1954
      %vm1960 = vc.u32 %v1935, %v1954
      %v1961 = vadd.s32 %v1957, 1
      %v1962 = vsel %vm1960, %v1961, %v1957
      %v1963 = vadd.s32 %v1958, %v1962
      %v1964 = vadd.s32 %v1963, 536870912
      %v1965 = vshrl.u32 %v1964, 30
      %v1966 = vshll.u32 %v1965, 30
      %v1967 = vsub.s32 %v1963, %v1966
      %vm1968 = vcmp.lt.s32.totalorder %v1967, 0
      %v1969 = vsub.s32 0, %v1967
      %v1970 = vsel %vm1968, %v1969, %v1967
      %v1971 = vclz %v1970
      %v1972 = vsub.s32 %v1971, 2
      %vm1973 = vcmp.gt.s32.totalorder 0, %v1972
      %v1974 = vsel %vm1973, 0, %v1972
      %v1975 = vsub.s32 32, %v1974
      %v1976 = vshll.u32 %v1967, %v1974
      %v1977 = vshrl.u32 %v1959, %v1975
      %v1978 = vor.u32 %v1976, %v1977
      %v1979 = vsub.s32 4294967266, %v1974
      %v1980 = vadd.s32 %v1979, 127
      %v1981 = vshll.u32 %v1980, 23
      %v1982 = vor.u32 4788187, %v1981
      %v1983 = vand.u32 2147483647, %v1982
      %v1985 = vcvt.s32.f32 %v1978
      %v1986 = vmul.f32 %v1985, %v1983
      %v1987 = vxor.u32 %v1986, 2147483648
      %v1988 = vsel %vm1867, %v1987, %v1986
      %v1989 = vsub.s32 4, %v1965
      %v1990 = vsel %vm1867, %v1989, %v1965
      %v1991 = vsel %vm1866, %v630, %v1988
      %v1992 = vsel %vm1866, 0, %v1990
      %v1993 = vmul.f32 %v1991, %v1991
      %v1994 = vmul.f32 %v1993, -0.001358992
      %v1995 = vadd.f32 %v1994, 0.041655596
      %v1996 = vmul.f32 %v1993, %v1995
      %v1997 = vadd.f32 %v1996, -0.4999988
      %v1998 = vmul.f32 %v1993, %v1997
      %v1999 = vadd.f32 1.0, %v1998
      %v2000 = vmul.f32 %v1991, %v1991
      %v2001 = vmul.f32 %v2000, -0.00019511016
      %v2002 = vadd.f32 %v2001, 0.008332121
      %v2003 = vmul.f32 %v2000, %v2002
      %v2004 = vadd.f32 %v2003, -0.16666654
      %v2005 = vmul.f32 %v2000, %v2004
      %v2006 = vadd.f32 %v2005, 1.0
      %v2007 = vmul.f32 %v2006, %v1991
      %vm2008 = vweird.f32 %v630
      %v2009 = vand.u32 %v1992, 3
      %vm2010 = vcmp.lt.s32.totalorder %v2009, 2
      %vm2011 = vcmp.eq.s32.totalorder %v2009, 0
      %v2012 = vxor.u32 %v2007, 2147483648
      %v2013 = vsel %vm2011, %v1999, %v2012
      %vm2014 = vcmp.eq.s32.totalorder %v2009, 2
      %v2015 = vxor.u32 %v1999, 2147483648
      %v2016 = vsel %vm2014, %v2015, %v2007
      %v2017 = vsel %vm2010, %v2013, %v2016
      %v2018 = vsel %vm2008, nan, %v2017
      %v2019 = vand.u32 2147483647, %v631
      %vm2020 = vcmp.le.f32.partialorder %v2019, 0.7853982
      %vm2021 = vcmp.lt.s32.totalorder %v631, 0
      %v2022 = vand.u32 %v631, 2139095040
      %v2023 = vshrl.u32 %v2022, 23
      %v2024 = vsub.s32 %v2023, 127
      %v2025 = vand.u32 2147483647, %v631
      %v2026 = vand.u32 %v2025, 8388607
      %v2027 = vor.u32 %v2026, 8388608
      %v2028 = vsub.s32 0, %v2027
      %v2029 = vadd.s32 %v2024, 1
      %vm2030 = vcmp.gt.s32.totalorder %v2029, 0
      %v2031 = vsel %vm2030, %v2029, 0
      %v2032 = vshrl.u32 %v2031, 5
      %v2033 = vand.u32 %v2031, 31
      %v2034 = vsub.s32 32, %v2033
      %v2035 = vshrl.u32 683565275, %v2034
      %v2036 = vshll.u32 683565275, %v2033
      %v2037 = vshrl.u32 2475754826, %v2034
      %v2038 = vor.u32 %v2036, %v2037
      %v2039 = vshll.u32 2475754826, %v2033
      %v2040 = vshrl.u32 2131351028, %v2034
      %v2041 = vor.u32 %v2039, %v2040
      %v2042 = vshll.u32 2131351028, %v2033
      %v2043 = vshrl.u32 2102212464, %v2034
      %v2044 = vor.u32 %v2042, %v2043
      %v2045 = vshll.u32 2102212464, %v2033
      %v2046 = vshrl.u32 920167782, %v2034
      %v2047 = vor.u32 %v2045, %v2046
      %v2048 = vshll.u32 920167782, %v2033
      %v2049 = vshrl.u32 1326507024, %v2034
      %v2050 = vor.u32 %v2048, %v2049
      %vm2051 = vcmp.lt.s32.totalorder %v2032, 1
      %vm2052 = vcmp.lt.s32.totalorder %v2032, 2
      %vm2053 = vcmp.lt.s32.totalorder %v2032, 3
      %vm2054 = vcmp.lt.s32.totalorder %v2032, 4
      %v2055 = vsel %vm2051, %v2035, %v2038
      %v2056 = vsel %vm2054, %v2044, 2102212464
      %v2057 = vsel %vm2053, %v2041, %v2056
      %v2058 = vsel %vm2052, %v2055, %v2057
      %v2059 = vsel %vm2051, %v2038, %v2041
      %v2060 = vsel %vm2054, %v2047, 920167782
      %v2061 = vsel %vm2053, %v2044, %v2060
      %v2062 = vsel %vm2052, %v2059, %v2061
      %v2063 = vsel %vm2051, %v2041, %v2044
      %v2064 = vsel %vm2054, %v2050, 1326507024
      %v2065 = vsel %vm2053, %v2047, %v2064
      %v2066 = vsel %vm2052, %v2063, %v2065
      %v2067 = vshll.u32 %v2027, 8
      %v2068 = vand.u32 %v2067, 65535
      %v2069 = vshrl.u32 %v2067, 16
      %v2070 = vand.u32 %v2066, 65535
      %v2071 = vshrl.u32 %v2066, 16
      %v2072 = vmul.u32 %v2068, %v2070
      %v2073 = vmul.u32 %v2068, %v2071
      %v2074 = vmul.u32 %v2069, %v2070
      %v2075 = vmul.u32 %v2069, %v2071
      %v2076 = vshll.u32 %v2073, 16
      %v2077 = vshrl.u32 %v2073, 16
      %v2078 = vshll.u32 %v2074, 16
      %v2079 = vshrl.u32 %v2074, 16
      %vm2080 = vc.u32 %v2072, %v2076
      %v2081 = vsel %vm2080, 1, 0
      %v2082 = vadd.s32 %v2072, %v2076
      %v2083 = vadd.s32 %v2075, %v2081
      %vm2084 = vc.u32 %v2082, %v2078
      %v2085 = vsel %vm2084, 1, 0
      %v2086 = vadd.s32 %v2082, %v2078
      %v2087 = vadd.s32 %v2083, %v2085
      %v2088 = vadd.s32 %v2087, %v2077
      %v2089 = vadd.s32 %v2088, %v2079
      %v2090 = vand.u32 %v2067, 65535
      %v2091 = vshrl.u32 %v2067, 16
      %v2092 = vand.u32 %v2062, 65535
      %v2093 = vshrl.u32 %v2062, 16
      %v2094 = vmul.u32 %v2090, %v2092
      %v2095 = vmul.u32 %v2090, %v2093
      %v2096 = vmul.u32 %v2091, %v2092
      %v2097 = vmul.u32 %v2091, %v2093
      %v2098 = vshll.u32 %v2095, 16
      %v2099 = vshrl.u32 %v2095, 16
      %v2100 = vshll.u32 %v2096, 16
      %v2101 = vshrl.u32 %v2096, 16
      %vm2102 = vc.u32 %v2094, %v2098
      %v2103 = vsel %vm2102, 1, 0
      %v2104 = vadd.s32 %v2094, %v2098
      %v2105 = vadd.s32 %v2097, %v2103
      %vm2106 = vc.u32 %v2104, %v2100
      %v2107 = vsel %vm2106, 1, 0
      %v2108 = vadd.s32 %v2104, %v2100
      %v2109 = vadd.s32 %v2105, %v2107
      %v2110 = vadd.s32 %v2109, %v2099
      %v2111 = vadd.s32 %v2110, %v2101
      %v2112 = vmul.u32 %v2067, %v2058
      %v2113 = vadd.s32 %v2089, %v2108
      %vm2114 = vc.u32 %v2089, %v2108
      %v2115 = vadd.s32 %v2111, 1
      %v2116 = vsel %vm2114, %v2115, %v2111
      %v2117 = vadd.s32 %v2112, %v2116
      %v2118 = vadd.s32 %v2117, 536870912
      %v2119 = vshrl.u32 %v2118, 30
      %v2120 = vshll.u32 %v2119, 30
      %v2121 = vsub.s32 %v2117, %v2120
      %vm2122 = vcmp.lt.s32.totalorder %v2121, 0
      %v2123 = vsub.s32 0, %v2121
      %v2124 = vsel %vm2122, %v2123, %v2121
      %v2125 = vclz %v2124
      %v2126 = vsub.s32 %v2125, 2
      %vm2127 = vcmp.gt.s32.totalorder 0, %v2126
      %v2128 = vsel %vm2127, 0, %v2126
      %v2129 = vsub.s32 32, %v2128
      %v2130 = vshll.u32 %v2121, %v2128
      %v2131 = vshrl.u32 %v2113, %v2129
      %v2132 = vor.u32 %v2130, %v2131
      %v2133 = vsub.s32 4294967266, %v2128
      %v2134 = vadd.s32 %v2133, 127
      %v2135 = vshll.u32 %v2134, 23
      %v2136 = vor.u32 4788187, %v2135
      %v2137 = vand.u32 2147483647, %v2136
      %v2139 = vcvt.s32.f32 %v2132
      %v2140 = vmul.f32 %v2139, %v2137
      %v2141 = vxor.u32 %v2140, 2147483648
      %v2142 = vsel %vm2021, %v2141, %v2140
      %v2143 = vsub.s32 4, %v2119
      %v2144 = vsel %vm2021, %v2143, %v2119
      %v2145 = vsel %vm2020, %v631, %v2142
      %v2146 = vsel %vm2020, 0, %v2144
      %v2147 = vmul.f32 %v2145, %v2145
      %v2148 = vmul.f32 %v2147, -0.001358992
      %v2149 = vadd.f32 %v2148, 0.041655596
      %v2150 = vmul.f32 %v2147, %v2149
      %v2151 = vadd.f32 %v2150, -0.4999988
      %v2152 = vmul.f32 %v2147, %v2151
      %v2153 = vadd.f32 1.0, %v2152
      %v2154 = vmul.f32 %v2145, %v2145
      %v2155 = vmul.f32 %v2154, -0.00019511016
      %v2156 = vadd.f32 %v2155, 0.008332121
      %v2157 = vmul.f32 %v2154, %v2156
      %v2158 = vadd.f32 %v2157, -0.16666654
      %v2159 = vmul.f32 %v2154, %v2158
      %v2160 = vadd.f32 %v2159, 1.0
      %v2161 = vmul.f32 %v2160, %v2145
      %vm2162 = vweird.f32 %v631
      %v2163 = vand.u32 %v2146, 3
      %vm2164 = vcmp.lt.s32.totalorder %v2163, 2
      %vm2165 = vcmp.eq.s32.totalorder %v2163, 0
      %v2166 = vxor.u32 %v2161, 2147483648
      %v2167 = vsel %vm2165, %v2153, %v2166
      %vm2168 = vcmp.eq.s32.totalorder %v2163, 2
      %v2169 = vxor.u32 %v2153, 2147483648
      %v2170 = vsel %vm2168, %v2169, %v2161
      %v2171 = vsel %vm2164, %v2167, %v2170
      %v2172 = vsel %vm2162, nan, %v2171
      %v2173 = vand.u32 2147483647, %v624
      %vm2174 = vcmp.le.f32.partialorder %v2173, 0.7853982
      %vm2175 = vcmp.lt.s32.totalorder %v624, 0
      %v2176 = vand.u32 %v624, 2139095040
      %v2177 = vshrl.u32 %v2176, 23
      %v2178 = vsub.s32 %v2177, 127
      %v2179 = vand.u32 2147483647, %v624
      %v2180 = vand.u32 %v2179, 8388607
      %v2181 = vor.u32 %v2180, 8388608
      %v2182 = vsub.s32 0, %v2181
      %v2183 = vadd.s32 %v2178, 1
      %vm2184 = vcmp.gt.s32.totalorder %v2183, 0
      %v2185 = vsel %vm2184, %v2183, 0
      %v2186 = vshrl.u32 %v2185, 5
      %v2187 = vand.u32 %v2185, 31
      %v2188 = vsub.s32 32, %v2187
      %v2189 = vshrl.u32 683565275, %v2188
      %v2190 = vshll.u32 683565275, %v2187
      %v2191 = vshrl.u32 2475754826, %v2188
      %v2192 = vor.u32 %v2190, %v2191
      %v2193 = vshll.u32 2475754826, %v2187
      %v2194 = vshrl.u32 2131351028, %v2188
      %v2195 = vor.u32 %v2193, %v2194
      %v2196 = vshll.u32 2131351028, %v2187
      %v2197 = vshrl.u32 2102212464, %v2188
      %v2198 = vor.u32 %v2196, %v2197
      %v2199 = vshll.u32 2102212464, %v2187
      %v2200 = vshrl.u32 920167782, %v2188
      %v2201 = vor.u32 %v2199, %v2200
      %v2202 = vshll.u32 920167782, %v2187
      %v2203 = vshrl.u32 1326507024, %v2188
      %v2204 = vor.u32 %v2202, %v2203
      %vm2205 = vcmp.lt.s32.totalorder %v2186, 1
      %vm2206 = vcmp.lt.s32.totalorder %v2186, 2
      %vm2207 = vcmp.lt.s32.totalorder %v2186, 3
      %vm2208 = vcmp.lt.s32.totalorder %v2186, 4
      %v2209 = vsel %vm2205, %v2189, %v2192
      %v2210 = vsel %vm2208, %v2198, 2102212464
      %v2211 = vsel %vm2207, %v2195, %v2210
      %v2212 = vsel %vm2206, %v2209, %v2211
      %v2213 = vsel %vm2205, %v2192, %v2195
      %v2214 = vsel %vm2208, %v2201, 920167782
      %v2215 = vsel %vm2207, %v2198, %v2214
      %v2216 = vsel %vm2206, %v2213, %v2215
      %v2217 = vsel %vm2205, %v2195, %v2198
      %v2218 = vsel %vm2208, %v2204, 1326507024
      %v2219 = vsel %vm2207, %v2201, %v2218
      %v2220 = vsel %vm2206, %v2217, %v2219
      %v2221 = vshll.u32 %v2181, 8
      %v2222 = vand.u32 %v2221, 65535
      %v2223 = vshrl.u32 %v2221, 16
      %v2224 = vand.u32 %v2220, 65535
      %v2225 = vshrl.u32 %v2220, 16
      %v2226 = vmul.u32 %v2222, %v2224
      %v2227 = vmul.u32 %v2222, %v2225
      %v2228 = vmul.u32 %v2223, %v2224
      %v2229 = vmul.u32 %v2223, %v2225
      %v2230 = vshll.u32 %v2227, 16
      %v2231 = vshrl.u32 %v2227, 16
      %v2232 = vshll.u32 %v2228, 16
      %v2233 = vshrl.u32 %v2228, 16
      %vm2234 = vc.u32 %v2226, %v2230
      %v2235 = vsel %vm2234, 1, 0
      %v2236 = vadd.s32 %v2226, %v2230
      %v2237 = vadd.s32 %v2229, %v2235
      %vm2238 = vc.u32 %v2236, %v2232
      %v2239 = vsel %vm2238, 1, 0
      %v2240 = vadd.s32 %v2236, %v2232
      %v2241 = vadd.s32 %v2237, %v2239
      %v2242 = vadd.s32 %v2241, %v2231
      %v2243 = vadd.s32 %v2242, %v2233
      %v2244 = vand.u32 %v2221, 65535
      %v2245 = vshrl.u32 %v2221, 16
      %v2246 = vand.u32 %v2216, 65535
      %v2247 = vshrl.u32 %v2216, 16
      %v2248 = vmul.u32 %v2244, %v2246
      %v2249 = vmul.u32 %v2244, %v2247
      %v2250 = vmul.u32 %v2245, %v2246
      %v2251 = vmul.u32 %v2245, %v2247
      %v2252 = vshll.u32 %v2249, 16
      %v2253 = vshrl.u32 %v2249, 16
      %v2254 = vshll.u32 %v2250, 16
      %v2255 = vshrl.u32 %v2250, 16
      %vm2256 = vc.u32 %v2248, %v2252
      %v2257 = vsel %vm2256, 1, 0
      %v2258 = vadd.s32 %v2248, %v2252
      %v2259 = vadd.s32 %v2251, %v2257
      %vm2260 = vc.u32 %v2258, %v2254
      %v2261 = vsel %vm2260, 1, 0
      %v2262 = vadd.s32 %v2258, %v2254
      %v2263 = vadd.s32 %v2259, %v2261
      %v2264 = vadd.s32 %v2263, %v2253
      %v2265 = vadd.s32 %v2264, %v2255
      %v2266 = vmul.u32 %v2221, %v2212
      %v2267 = vadd.s32 %v2243, %v2262
      %vm2268 = vc.u32 %v2243, %v2262
      %v2269 = vadd.s32 %v2265, 1
      %v2270 = vsel %vm2268, %v2269, %v2265
      %v2271 = vadd.s32 %v2266, %v2270
      %v2272 = vadd.s32 %v2271, 536870912
      %v2273 = vshrl.u32 %v2272, 30
      %v2274 = vshll.u32 %v2273, 30
      %v2275 = vsub.s32 %v2271, %v2274
      %vm2276 = vcmp.lt.s32.totalorder %v2275, 0
      %v2277 = vsub.s32 0, %v2275
      %v2278 = vsel %vm2276, %v2277, %v2275
      %v2279 = vclz %v2278
      %v2280 = vsub.s32 %v2279, 2
      %vm2281 = vcmp.gt.s32.totalorder 0, %v2280
      %v2282 = vsel %vm2281, 0, %v2280
      %v2283 = vsub.s32 32, %v2282
      %v2284 = vshll.u32 %v2275, %v2282
      %v2285 = vshrl.u32 %v2267, %v2283
      %v2286 = vor.u32 %v2284, %v2285
      %v2287 = vsub.s32 4294967266, %v2282
      %v2288 = vadd.s32 %v2287, 127
      %v2289 = vshll.u32 %v2288, 23
      %v2290 = vor.u32 4788187, %v2289
      %v2291 = vand.u32 2147483647, %v2290
      %v2293 = vcvt.s32.f32 %v2286
      %v2294 = vmul.f32 %v2293, %v2291
      %v2295 = vxor.u32 %v2294, 2147483648
      %v2296 = vsel %vm2175, %v2295, %v2294
      %v2297 = vsub.s32 4, %v2273
      %v2298 = vsel %vm2175, %v2297, %v2273
      %v2299 = vsel %vm2174, %v624, %v2296
      %v2300 = vsel %vm2174, 0, %v2298
      %v2301 = vmul.f32 %v2299, %v2299
      %v2302 = vmul.f32 %v2301, -0.001358992
      %v2303 = vadd.f32 %v2302, 0.041655596
      %v2304 = vmul.f32 %v2301, %v2303
      %v2305 = vadd.f32 %v2304, -0.4999988
      %v2306 = vmul.f32 %v2301, %v2305
      %v2307 = vadd.f32 1.0, %v2306
      %v2308 = vmul.f32 %v2299, %v2299
      %v2309 = vmul.f32 %v2308, -0.00019511016
      %v2310 = vadd.f32 %v2309, 0.008332121
      %v2311 = vmul.f32 %v2308, %v2310
      %v2312 = vadd.f32 %v2311, -0.16666654
      %v2313 = vmul.f32 %v2308, %v2312
      %v2314 = vadd.f32 %v2313, 1.0
      %v2315 = vmul.f32 %v2314, %v2299
      %vm2316 = vweird.f32 %v624
      %v2317 = vadd.s32 %v2300, 3
      %v2318 = vand.u32 %v2317, 3
      %vm2319 = vcmp.lt.s32.totalorder %v2318, 2
      %vm2320 = vcmp.eq.s32.totalorder %v2318, 0
      %v2321 = vxor.u32 %v2315, 2147483648
      %v2322 = vsel %vm2320, %v2307, %v2321
      %vm2323 = vcmp.eq.s32.totalorder %v2318, 2
      %v2324 = vxor.u32 %v2307, 2147483648
      %v2325 = vsel %vm2323, %v2324, %v2315
      %v2326 = vsel %vm2319, %v2322, %v2325
      %v2327 = vsel %vm2316, nan, %v2326
      %v2328 = vand.u32 2147483647, %v625
      %vm2329 = vcmp.le.f32.partialorder %v2328, 0.7853982
      %vm2330 = vcmp.lt.s32.totalorder %v625, 0
      %v2331 = vand.u32 %v625, 2139095040
      %v2332 = vshrl.u32 %v2331, 23
      %v2333 = vsub.s32 %v2332, 127
      %v2334 = vand.u32 2147483647, %v625
      %v2335 = vand.u32 %v2334, 8388607
      %v2336 = vor.u32 %v2335, 8388608
      %v2337 = vsub.s32 0, %v2336
      %v2338 = vadd.s32 %v2333, 1
      %vm2339 = vcmp.gt.s32.totalorder %v2338, 0
      %v2340 = vsel %vm2339, %v2338, 0
      %v2341 = vshrl.u32 %v2340, 5
      %v2342 = vand.u32 %v2340, 31
      %v2343 = vsub.s32 32, %v2342
      %v2344 = vshrl.u32 683565275, %v2343
      %v2345 = vshll.u32 683565275, %v2342
      %v2346 = vshrl.u32 2475754826, %v2343
      %v2347 = vor.u32 %v2345, %v2346
      %v2348 = vshll.u32 2475754826, %v2342
      %v2349 = vshrl.u32 2131351028, %v2343
      %v2350 = vor.u32 %v2348, %v2349
      %v2351 = vshll.u32 2131351028, %v2342
      %v2352 = vshrl.u32 2102212464, %v2343
      %v2353 = vor.u32 %v2351, %v2352
      %v2354 = vshll.u32 2102212464, %v2342
      %v2355 = vshrl.u32 920167782, %v2343
      %v2356 = vor.u32 %v2354, %v2355
      %v2357 = vshll.u32 920167782, %v2342
      %v2358 = vshrl.u32 1326507024, %v2343
      %v2359 = vor.u32 %v2357, %v2358
      %vm2360 = vcmp.lt.s32.totalorder %v2341, 1
      %vm2361 = vcmp.lt.s32.totalorder %v2341, 2
      %vm2362 = vcmp.lt.s32.totalorder %v2341, 3
      %vm2363 = vcmp.lt.s32.totalorder %v2341, 4
      %v2364 = vsel %vm2360, %v2344, %v2347
      %v2365 = vsel %vm2363, %v2353, 2102212464
      %v2366 = vsel %vm2362, %v2350, %v2365
      %v2367 = vsel %vm2361, %v2364, %v2366
      %v2368 = vsel %vm2360, %v2347, %v2350
      %v2369 = vsel %vm2363, %v2356, 920167782
      %v2370 = vsel %vm2362, %v2353, %v2369
      %v2371 = vsel %vm2361, %v2368, %v2370
      %v2372 = vsel %vm2360, %v2350, %v2353
      %v2373 = vsel %vm2363, %v2359, 1326507024
      %v2374 = vsel %vm2362, %v2356, %v2373
      %v2375 = vsel %vm2361, %v2372, %v2374
      %v2376 = vshll.u32 %v2336, 8
      %v2377 = vand.u32 %v2376, 65535
      %v2378 = vshrl.u32 %v2376, 16
      %v2379 = vand.u32 %v2375, 65535
      %v2380 = vshrl.u32 %v2375, 16
      %v2381 = vmul.u32 %v2377, %v2379
      %v2382 = vmul.u32 %v2377, %v2380
      %v2383 = vmul.u32 %v2378, %v2379
      %v2384 = vmul.u32 %v2378, %v2380
      %v2385 = vshll.u32 %v2382, 16
      %v2386 = vshrl.u32 %v2382, 16
      %v2387 = vshll.u32 %v2383, 16
      %v2388 = vshrl.u32 %v2383, 16
      %vm2389 = vc.u32 %v2381, %v2385
      %v2390 = vsel %vm2389, 1, 0
      %v2391 = vadd.s32 %v2381, %v2385
      %v2392 = vadd.s32 %v2384, %v2390
      %vm2393 = vc.u32 %v2391, %v2387
      %v2394 = vsel %vm2393, 1, 0
      %v2395 = vadd.s32 %v2391, %v2387
      %v2396 = vadd.s32 %v2392, %v2394
      %v2397 = vadd.s32 %v2396, %v2386
      %v2398 = vadd.s32 %v2397, %v2388
      %v2399 = vand.u32 %v2376, 65535
      %v2400 = vshrl.u32 %v2376, 16
      %v2401 = vand.u32 %v2371, 65535
      %v2402 = vshrl.u32 %v2371, 16
      %v2403 = vmul.u32 %v2399, %v2401
      %v2404 = vmul.u32 %v2399, %v2402
      %v2405 = vmul.u32 %v2400, %v2401
      %v2406 = vmul.u32 %v2400, %v2402
      %v2407 = vshll.u32 %v2404, 16
      %v2408 = vshrl.u32 %v2404, 16
      %v2409 = vshll.u32 %v2405, 16
      %v2410 = vshrl.u32 %v2405, 16
      %vm2411 = vc.u32 %v2403, %v2407
      %v2412 = vsel %vm2411, 1, 0
      %v2413 = vadd.s32 %v2403, %v2407
      %v2414 = vadd.s32 %v2406, %v2412
      %vm2415 = vc.u32 %v2413, %v2409
      %v2416 = vsel %vm2415, 1, 0
      %v2417 = vadd.s32 %v2413, %v2409
      %v2418 = vadd.s32 %v2414, %v2416
      %v2419 = vadd.s32 %v2418, %v2408
      %v2420 = vadd.s32 %v2419, %v2410
      %v2421 = vmul.u32 %v2376, %v2367
      %v2422 = vadd.s32 %v2398, %v2417
      %vm2423 = vc.u32 %v2398, %v2417
      %v2424 = vadd.s32 %v2420, 1
      %v2425 = vsel %vm2423, %v2424, %v2420
      %v2426 = vadd.s32 %v2421, %v2425
      %v2427 = vadd.s32 %v2426, 536870912
      %v2428 = vshrl.u32 %v2427, 30
      %v2429 = vshll.u32 %v2428, 30
      %v2430 = vsub.s32 %v2426, %v2429
      %vm2431 = vcmp.lt.s32.totalorder %v2430, 0
      %v2432 = vsub.s32 0, %v2430
      %v2433 = vsel %vm2431, %v2432, %v2430
      %v2434 = vclz %v2433
      %v2435 = vsub.s32 %v2434, 2
      %vm2436 = vcmp.gt.s32.totalorder 0, %v2435
      %v2437 = vsel %vm2436, 0, %v2435
      %v2438 = vsub.s32 32, %v2437
      %v2439 = vshll.u32 %v2430, %v2437
      %v2440 = vshrl.u32 %v2422, %v2438
      %v2441 = vor.u32 %v2439, %v2440
      %v2442 = vsub.s32 4294967266, %v2437
      %v2443 = vadd.s32 %v2442, 127
      %v2444 = vshll.u32 %v2443, 23
      %v2445 = vor.u32 4788187, %v2444
      %v2446 = vand.u32 2147483647, %v2445
      %v2448 = vcvt.s32.f32 %v2441
      %v2449 = vmul.f32 %v2448, %v2446
      %v2450 = vxor.u32 %v2449, 2147483648
      %v2451 = vsel %vm2330, %v2450, %v2449
      %v2452 = vsub.s32 4, %v2428
      %v2453 = vsel %vm2330, %v2452, %v2428
      %v2454 = vsel %vm2329, %v625, %v2451
      %v2455 = vsel %vm2329, 0, %v2453
      %v2456 = vmul.f32 %v2454, %v2454
      %v2457 = vmul.f32 %v2456, -0.001358992
      %v2458 = vadd.f32 %v2457, 0.041655596
      %v2459 = vmul.f32 %v2456, %v2458
      %v2460 = vadd.f32 %v2459, -0.4999988
      %v2461 = vmul.f32 %v2456, %v2460
      %v2462 = vadd.f32 1.0, %v2461
      %v2463 = vmul.f32 %v2454, %v2454
      %v2464 = vmul.f32 %v2463, -0.00019511016
      %v2465 = vadd.f32 %v2464, 0.008332121
      %v2466 = vmul.f32 %v2463, %v2465
      %v2467 = vadd.f32 %v2466, -0.16666654
      %v2468 = vmul.f32 %v2463, %v2467
      %v2469 = vadd.f32 %v2468, 1.0
      %v2470 = vmul.f32 %v2469, %v2454
      %vm2471 = vweird.f32 %v625
      %v2472 = vadd.s32 %v2455, 3
      %v2473 = vand.u32 %v2472, 3
      %vm2474 = vcmp.lt.s32.totalorder %v2473, 2
      %vm2475 = vcmp.eq.s32.totalorder %v2473, 0
      %v2476 = vxor.u32 %v2470, 2147483648
      %v2477 = vsel %vm2475, %v2462, %v2476
      %vm2478 = vcmp.eq.s32.totalorder %v2473, 2
      %v2479 = vxor.u32 %v2462, 2147483648
      %v2480 = vsel %vm2478, %v2479, %v2470
      %v2481 = vsel %vm2474, %v2477, %v2480
      %v2482 = vsel %vm2471, nan, %v2481
      %v2483 = vand.u32 2147483647, %v626
      %vm2484 = vcmp.le.f32.partialorder %v2483, 0.7853982
      %vm2485 = vcmp.lt.s32.totalorder %v626, 0
      %v2486 = vand.u32 %v626, 2139095040
      %v2487 = vshrl.u32 %v2486, 23
      %v2488 = vsub.s32 %v2487, 127
      %v2489 = vand.u32 2147483647, %v626
      %v2490 = vand.u32 %v2489, 8388607
      %v2491 = vor.u32 %v2490, 8388608
      %v2492 = vsub.s32 0, %v2491
      %v2493 = vadd.s32 %v2488, 1
      %vm2494 = vcmp.gt.s32.totalorder %v2493, 0
      %v2495 = vsel %vm2494, %v2493, 0
      %v2496 = vshrl.u32 %v2495, 5
      %v2497 = vand.u32 %v2495, 31
      %v2498 = vsub.s32 32, %v2497
      %v2499 = vshrl.u32 683565275, %v2498
      %v2500 = vshll.u32 683565275, %v2497
      %v2501 = vshrl.u32 2475754826, %v2498
      %v2502 = vor.u32 %v2500, %v2501
      %v2503 = vshll.u32 2475754826, %v2497
      %v2504 = vshrl.u32 2131351028, %v2498
      %v2505 = vor.u32 %v2503, %v2504
      %v2506 = vshll.u32 2131351028, %v2497
      %v2507 = vshrl.u32 2102212464, %v2498
      %v2508 = vor.u32 %v2506, %v2507
      %v2509 = vshll.u32 2102212464, %v2497
      %v2510 = vshrl.u32 920167782, %v2498
      %v2511 = vor.u32 %v2509, %v2510
      %v2512 = vshll.u32 920167782, %v2497
      %v2513 = vshrl.u32 1326507024, %v2498
      %v2514 = vor.u32 %v2512, %v2513
      %vm2515 = vcmp.lt.s32.totalorder %v2496, 1
      %vm2516 = vcmp.lt.s32.totalorder %v2496, 2
      %vm2517 = vcmp.lt.s32.totalorder %v2496, 3
      %vm2518 = vcmp.lt.s32.totalorder %v2496, 4
      %v2519 = vsel %vm2515, %v2499, %v2502
      %v2520 = vsel %vm2518, %v2508, 2102212464
      %v2521 = vsel %vm2517, %v2505, %v2520
      %v2522 = vsel %vm2516, %v2519, %v2521
      %v2523 = vsel %vm2515, %v2502, %v2505
      %v2524 = vsel %vm2518, %v2511, 920167782
      %v2525 = vsel %vm2517, %v2508, %v2524
      %v2526 = vsel %vm2516, %v2523, %v2525
      %v2527 = vsel %vm2515, %v2505, %v2508
      %v2528 = vsel %vm2518, %v2514, 1326507024
      %v2529 = vsel %vm2517, %v2511, %v2528
      %v2530 = vsel %vm2516, %v2527, %v2529
      %v2531 = vshll.u32 %v2491, 8
      %v2532 = vand.u32 %v2531, 65535
      %v2533 = vshrl.u32 %v2531, 16
      %v2534 = vand.u32 %v2530, 65535
      %v2535 = vshrl.u32 %v2530, 16
      %v2536 = vmul.u32 %v2532, %v2534
      %v2537 = vmul.u32 %v2532, %v2535
      %v2538 = vmul.u32 %v2533, %v2534
      %v2539 = vmul.u32 %v2533, %v2535
      %v2540 = vshll.u32 %v2537, 16
      %v2541 = vshrl.u32 %v2537, 16
      %v2542 = vshll.u32 %v2538, 16
      %v2543 = vshrl.u32 %v2538, 16
      %vm2544 = vc.u32 %v2536, %v2540
      %v2545 = vsel %vm2544, 1, 0
      %v2546 = vadd.s32 %v2536, %v2540
      %v2547 = vadd.s32 %v2539, %v2545
      %vm2548 = vc.u32 %v2546, %v2542
      %v2549 = vsel %vm2548, 1, 0
      %v2550 = vadd.s32 %v2546, %v2542
      %v2551 = vadd.s32 %v2547, %v2549
      %v2552 = vadd.s32 %v2551, %v2541
      %v2553 = vadd.s32 %v2552, %v2543
      %v2554 = vand.u32 %v2531, 65535
      %v2555 = vshrl.u32 %v2531, 16
      %v2556 = vand.u32 %v2526, 65535
      %v2557 = vshrl.u32 %v2526, 16
      %v2558 = vmul.u32 %v2554, %v2556
      %v2559 = vmul.u32 %v2554, %v2557
      %v2560 = vmul.u32 %v2555, %v2556
      %v2561 = vmul.u32 %v2555, %v2557
      %v2562 = vshll.u32 %v2559, 16
      %v2563 = vshrl.u32 %v2559, 16
      %v2564 = vshll.u32 %v2560, 16
      %v2565 = vshrl.u32 %v2560, 16
      %vm2566 = vc.u32 %v2558, %v2562
      %v2567 = vsel %vm2566, 1, 0
      %v2568 = vadd.s32 %v2558, %v2562
      %v2569 = vadd.s32 %v2561, %v2567
      %vm2570 = vc.u32 %v2568, %v2564
      %v2571 = vsel %vm2570, 1, 0
      %v2572 = vadd.s32 %v2568, %v2564
      %v2573 = vadd.s32 %v2569, %v2571
      %v2574 = vadd.s32 %v2573, %v2563
      %v2575 = vadd.s32 %v2574, %v2565
      %v2576 = vmul.u32 %v2531, %v2522
      %v2577 = vadd.s32 %v2553, %v2572
      %vm2578 = vc.u32 %v2553, %v2572
      %v2579 = vadd.s32 %v2575, 1
      %v2580 = vsel %vm2578, %v2579, %v2575
      %v2581 = vadd.s32 %v2576, %v2580
      %v2582 = vadd.s32 %v2581, 536870912
      %v2583 = vshrl.u32 %v2582, 30
      %v2584 = vshll.u32 %v2583, 30
      %v2585 = vsub.s32 %v2581, %v2584
      %vm2586 = vcmp.lt.s32.totalorder %v2585, 0
      %v2587 = vsub.s32 0, %v2585
      %v2588 = vsel %vm2586, %v2587, %v2585
      %v2589 = vclz %v2588
      %v2590 = vsub.s32 %v2589, 2
      %vm2591 = vcmp.gt.s32.totalorder 0, %v2590
      %v2592 = vsel %vm2591, 0, %v2590
      %v2593 = vsub.s32 32, %v2592
      %v2594 = vshll.u32 %v2585, %v2592
      %v2595 = vshrl.u32 %v2577, %v2593
      %v2596 = vor.u32 %v2594, %v2595
      %v2597 = vsub.s32 4294967266, %v2592
      %v2598 = vadd.s32 %v2597, 127
      %v2599 = vshll.u32 %v2598, 23
      %v2600 = vor.u32 4788187, %v2599
      %v2601 = vand.u32 2147483647, %v2600
      %v2603 = vcvt.s32.f32 %v2596
      %v2604 = vmul.f32 %v2603, %v2601
      %v2605 = vxor.u32 %v2604, 2147483648
      %v2606 = vsel %vm2485, %v2605, %v2604
      %v2607 = vsub.s32 4, %v2583
      %v2608 = vsel %vm2485, %v2607, %v2583
      %v2609 = vsel %vm2484, %v626, %v2606
      %v2610 = vsel %vm2484, 0, %v2608
      %v2611 = vmul.f32 %v2609, %v2609
      %v2612 = vmul.f32 %v2611, -0.001358992
      %v2613 = vadd.f32 %v2612, 0.041655596
      %v2614 = vmul.f32 %v2611, %v2613
      %v2615 = vadd.f32 %v2614, -0.4999988
      %v2616 = vmul.f32 %v2611, %v2615
      %v2617 = vadd.f32 1.0, %v2616
      %v2618 = vmul.f32 %v2609, %v2609
      %v2619 = vmul.f32 %v2618, -0.00019511016
      %v2620 = vadd.f32 %v2619, 0.008332121
      %v2621 = vmul.f32 %v2618, %v2620
      %v2622 = vadd.f32 %v2621, -0.16666654
      %v2623 = vmul.f32 %v2618, %v2622
      %v2624 = vadd.f32 %v2623, 1.0
      %v2625 = vmul.f32 %v2624, %v2609
      %vm2626 = vweird.f32 %v626
      %v2627 = vadd.s32 %v2610, 3
      %v2628 = vand.u32 %v2627, 3
      %vm2629 = vcmp.lt.s32.totalorder %v2628, 2
      %vm2630 = vcmp.eq.s32.totalorder %v2628, 0
      %v2631 = vxor.u32 %v2625, 2147483648
      %v2632 = vsel %vm2630, %v2617, %v2631
      %vm2633 = vcmp.eq.s32.totalorder %v2628, 2
      %v2634 = vxor.u32 %v2617, 2147483648
      %v2635 = vsel %vm2633, %v2634, %v2625
      %v2636 = vsel %vm2629, %v2632, %v2635
      %v2637 = vsel %vm2626, nan, %v2636
      %v2638 = vand.u32 2147483647, %v627
      %vm2639 = vcmp.le.f32.partialorder %v2638, 0.7853982
      %vm2640 = vcmp.lt.s32.totalorder %v627, 0
      %v2641 = vand.u32 %v627, 2139095040
      %v2642 = vshrl.u32 %v2641, 23
      %v2643 = vsub.s32 %v2642, 127
      %v2644 = vand.u32 2147483647, %v627
      %v2645 = vand.u32 %v2644, 8388607
      %v2646 = vor.u32 %v2645, 8388608
      %v2647 = vsub.s32 0, %v2646
      %v2648 = vadd.s32 %v2643, 1
      %vm2649 = vcmp.gt.s32.totalorder %v2648, 0
      %v2650 = vsel %vm2649, %v2648, 0
      %v2651 = vshrl.u32 %v2650, 5
      %v2652 = vand.u32 %v2650, 31
      %v2653 = vsub.s32 32, %v2652
      %v2654 = vshrl.u32 683565275, %v2653
      %v2655 = vshll.u32 683565275, %v2652
      %v2656 = vshrl.u32 2475754826, %v2653
      %v2657 = vor.u32 %v2655, %v2656
      %v2658 = vshll.u32 2475754826, %v2652
      %v2659 = vshrl.u32 2131351028, %v2653
      %v2660 = vor.u32 %v2658, %v2659
      %v2661 = vshll.u32 2131351028, %v2652
      %v2662 = vshrl.u32 2102212464, %v2653
      %v2663 = vor.u32 %v2661, %v2662
      %v2664 = vshll.u32 2102212464, %v2652
      %v2665 = vshrl.u32 920167782, %v2653
      %v2666 = vor.u32 %v2664, %v2665
      %v2667 = vshll.u32 920167782, %v2652
      %v2668 = vshrl.u32 1326507024, %v2653
      %v2669 = vor.u32 %v2667, %v2668
      %vm2670 = vcmp.lt.s32.totalorder %v2651, 1
      %vm2671 = vcmp.lt.s32.totalorder %v2651, 2
      %vm2672 = vcmp.lt.s32.totalorder %v2651, 3
      %vm2673 = vcmp.lt.s32.totalorder %v2651, 4
      %v2674 = vsel %vm2670, %v2654, %v2657
      %v2675 = vsel %vm2673, %v2663, 2102212464
      %v2676 = vsel %vm2672, %v2660, %v2675
      %v2677 = vsel %vm2671, %v2674, %v2676
      %v2678 = vsel %vm2670, %v2657, %v2660
      %v2679 = vsel %vm2673, %v2666, 920167782
      %v2680 = vsel %vm2672, %v2663, %v2679
      %v2681 = vsel %vm2671, %v2678, %v2680
      %v2682 = vsel %vm2670, %v2660, %v2663
      %v2683 = vsel %vm2673, %v2669, 1326507024
      %v2684 = vsel %vm2672, %v2666, %v2683
      %v2685 = vsel %vm2671, %v2682, %v2684
      %v2686 = vshll.u32 %v2646, 8
      %v2687 = vand.u32 %v2686, 65535
      %v2688 = vshrl.u32 %v2686, 16
      %v2689 = vand.u32 %v2685, 65535
      %v2690 = vshrl.u32 %v2685, 16
      %v2691 = vmul.u32 %v2687, %v2689
      %v2692 = vmul.u32 %v2687, %v2690
      %v2693 = vmul.u32 %v2688, %v2689
      %v2694 = vmul.u32 %v2688, %v2690
      %v2695 = vshll.u32 %v2692, 16
      %v2696 = vshrl.u32 %v2692, 16
      %v2697 = vshll.u32 %v2693, 16
      %v2698 = vshrl.u32 %v2693, 16
      %vm2699 = vc.u32 %v2691, %v2695
      %v2700 = vsel %vm2699, 1, 0
      %v2701 = vadd.s32 %v2691, %v2695
      %v2702 = vadd.s32 %v2694, %v2700
      %vm2703 = vc.u32 %v2701, %v2697
      %v2704 = vsel %vm2703, 1, 0
      %v2705 = vadd.s32 %v2701, %v2697
      %v2706 = vadd.s32 %v2702, %v2704
      %v2707 = vadd.s32 %v2706, %v2696
      %v2708 = vadd.s32 %v2707, %v2698
      %v2709 = vand.u32 %v2686, 65535
      %v2710 = vshrl.u32 %v2686, 16
      %v2711 = vand.u32 %v2681, 65535
      %v2712 = vshrl.u32 %v2681, 16
      %v2713 = vmul.u32 %v2709, %v2711
      %v2714 = vmul.u32 %v2709, %v2712
      %v2715 = vmul.u32 %v2710, %v2711
      %v2716 = vmul.u32 %v2710, %v2712
      %v2717 = vshll.u32 %v2714, 16
      %v2718 = vshrl.u32 %v2714, 16
      %v2719 = vshll.u32 %v2715, 16
      %v2720 = vshrl.u32 %v2715, 16
      %vm2721 = vc.u32 %v2713, %v2717
      %v2722 = vsel %vm2721, 1, 0
      %v2723 = vadd.s32 %v2713, %v2717
      %v2724 = vadd.s32 %v2716, %v2722
      %vm2725 = vc.u32 %v2723, %v2719
      %v2726 = vsel %vm2725, 1, 0
      %v2727 = vadd.s32 %v2723, %v2719
      %v2728 = vadd.s32 %v2724, %v2726
      %v2729 = vadd.s32 %v2728, %v2718
      %v2730 = vadd.s32 %v2729, %v2720
      %v2731 = vmul.u32 %v2686, %v2677
      %v2732 = vadd.s32 %v2708, %v2727
      %vm2733 = vc.u32 %v2708, %v2727
      %v2734 = vadd.s32 %v2730, 1
      %v2735 = vsel %vm2733, %v2734, %v2730
      %v2736 = vadd.s32 %v2731, %v2735
      %v2737 = vadd.s32 %v2736, 536870912
      %v2738 = vshrl.u32 %v2737, 30
      %v2739 = vshll.u32 %v2738, 30
      %v2740 = vsub.s32 %v2736, %v2739
      %vm2741 = vcmp.lt.s32.totalorder %v2740, 0
      %v2742 = vsub.s32 0, %v2740
      %v2743 = vsel %vm2741, %v2742, %v2740
      %v2744 = vclz %v2743
      %v2745 = vsub.s32 %v2744, 2
      %vm2746 = vcmp.gt.s32.totalorder 0, %v2745
      %v2747 = vsel %vm2746, 0, %v2745
      %v2748 = vsub.s32 32, %v2747
      %v2749 = vshll.u32 %v2740, %v2747
      %v2750 = vshrl.u32 %v2732, %v2748
      %v2751 = vor.u32 %v2749, %v2750
      %v2752 = vsub.s32 4294967266, %v2747
      %v2753 = vadd.s32 %v2752, 127
      %v2754 = vshll.u32 %v2753, 23
      %v2755 = vor.u32 4788187, %v2754
      %v2756 = vand.u32 2147483647, %v2755
      %v2758 = vcvt.s32.f32 %v2751
      %v2759 = vmul.f32 %v2758, %v2756
      %v2760 = vxor.u32 %v2759, 2147483648
      %v2761 = vsel %vm2640, %v2760, %v2759
      %v2762 = vsub.s32 4, %v2738
      %v2763 = vsel %vm2640, %v2762, %v2738
      %v2764 = vsel %vm2639, %v627, %v2761
      %v2765 = vsel %vm2639, 0, %v2763
      %v2766 = vmul.f32 %v2764, %v2764
      %v2767 = vmul.f32 %v2766, -0.001358992
      %v2768 = vadd.f32 %v2767, 0.041655596
      %v2769 = vmul.f32 %v2766, %v2768
      %v2770 = vadd.f32 %v2769, -0.4999988
      %v2771 = vmul.f32 %v2766, %v2770
      %v2772 = vadd.f32 1.0, %v2771
      %v2773 = vmul.f32 %v2764, %v2764
      %v2774 = vmul.f32 %v2773, -0.00019511016
      %v2775 = vadd.f32 %v2774, 0.008332121
      %v2776 = vmul.f32 %v2773, %v2775
      %v2777 = vadd.f32 %v2776, -0.16666654
      %v2778 = vmul.f32 %v2773, %v2777
      %v2779 = vadd.f32 %v2778, 1.0
      %v2780 = vmul.f32 %v2779, %v2764
      %vm2781 = vweird.f32 %v627
      %v2782 = vadd.s32 %v2765, 3
      %v2783 = vand.u32 %v2782, 3
      %vm2784 = vcmp.lt.s32.totalorder %v2783, 2
      %vm2785 = vcmp.eq.s32.totalorder %v2783, 0
      %v2786 = vxor.u32 %v2780, 2147483648
      %v2787 = vsel %vm2785, %v2772, %v2786
      %vm2788 = vcmp.eq.s32.totalorder %v2783, 2
      %v2789 = vxor.u32 %v2772, 2147483648
      %v2790 = vsel %vm2788, %v2789, %v2780
      %v2791 = vsel %vm2784, %v2787, %v2790
      %v2792 = vsel %vm2781, nan, %v2791
      %v2793 = vand.u32 2147483647, %v628
      %vm2794 = vcmp.le.f32.partialorder %v2793, 0.7853982
      %vm2795 = vcmp.lt.s32.totalorder %v628, 0
      %v2796 = vand.u32 %v628, 2139095040
      %v2797 = vshrl.u32 %v2796, 23
      %v2798 = vsub.s32 %v2797, 127
      %v2799 = vand.u32 2147483647, %v628
      %v2800 = vand.u32 %v2799, 8388607
      %v2801 = vor.u32 %v2800, 8388608
      %v2802 = vsub.s32 0, %v2801
      %v2803 = vadd.s32 %v2798, 1
      %vm2804 = vcmp.gt.s32.totalorder %v2803, 0
      %v2805 = vsel %vm2804, %v2803, 0
      %v2806 = vshrl.u32 %v2805, 5
      %v2807 = vand.u32 %v2805, 31
      %v2808 = vsub.s32 32, %v2807
      %v2809 = vshrl.u32 683565275, %v2808
      %v2810 = vshll.u32 683565275, %v2807
      %v2811 = vshrl.u32 2475754826, %v2808
      %v2812 = vor.u32 %v2810, %v2811
      %v2813 = vshll.u32 2475754826, %v2807
      %v2814 = vshrl.u32 2131351028, %v2808
      %v2815 = vor.u32 %v2813, %v2814
      %v2816 = vshll.u32 2131351028, %v2807
      %v2817 = vshrl.u32 2102212464, %v2808
      %v2818 = vor.u32 %v2816, %v2817
      %v2819 = vshll.u32 2102212464, %v2807
      %v2820 = vshrl.u32 920167782, %v2808
      %v2821 = vor.u32 %v2819, %v2820
      %v2822 = vshll.u32 920167782, %v2807
      %v2823 = vshrl.u32 1326507024, %v2808
      %v2824 = vor.u32 %v2822, %v2823
      %vm2825 = vcmp.lt.s32.totalorder %v2806, 1
      %vm2826 = vcmp.lt.s32.totalorder %v2806, 2
      %vm2827 = vcmp.lt.s32.totalorder %v2806, 3
      %vm2828 = vcmp.lt.s32.totalorder %v2806, 4
      %v2829 = vsel %vm2825, %v2809, %v2812
      %v2830 = vsel %vm2828, %v2818, 2102212464
      %v2831 = vsel %vm2827, %v2815, %v2830
      %v2832 = vsel %vm2826, %v2829, %v2831
      %v2833 = vsel %vm2825, %v2812, %v2815
      %v2834 = vsel %vm2828, %v2821, 920167782
      %v2835 = vsel %vm2827, %v2818, %v2834
      %v2836 = vsel %vm2826, %v2833, %v2835
      %v2837 = vsel %vm2825, %v2815, %v2818
      %v2838 = vsel %vm2828, %v2824, 1326507024
      %v2839 = vsel %vm2827, %v2821, %v2838
      %v2840 = vsel %vm2826, %v2837, %v2839
      %v2841 = vshll.u32 %v2801, 8
      %v2842 = vand.u32 %v2841, 65535
      %v2843 = vshrl.u32 %v2841, 16
      %v2844 = vand.u32 %v2840, 65535
      %v2845 = vshrl.u32 %v2840, 16
      %v2846 = vmul.u32 %v2842, %v2844
      %v2847 = vmul.u32 %v2842, %v2845
      %v2848 = vmul.u32 %v2843, %v2844
      %v2849 = vmul.u32 %v2843, %v2845
      %v2850 = vshll.u32 %v2847, 16
      %v2851 = vshrl.u32 %v2847, 16
      %v2852 = vshll.u32 %v2848, 16
      %v2853 = vshrl.u32 %v2848, 16
      %vm2854 = vc.u32 %v2846, %v2850
      %v2855 = vsel %vm2854, 1, 0
      %v2856 = vadd.s32 %v2846, %v2850
      %v2857 = vadd.s32 %v2849, %v2855
      %vm2858 = vc.u32 %v2856, %v2852
      %v2859 = vsel %vm2858, 1, 0
      %v2860 = vadd.s32 %v2856, %v2852
      %v2861 = vadd.s32 %v2857, %v2859
      %v2862 = vadd.s32 %v2861, %v2851
      %v2863 = vadd.s32 %v2862, %v2853
      %v2864 = vand.u32 %v2841, 65535
      %v2865 = vshrl.u32 %v2841, 16
      %v2866 = vand.u32 %v2836, 65535
      %v2867 = vshrl.u32 %v2836, 16
      %v2868 = vmul.u32 %v2864, %v2866
      %v2869 = vmul.u32 %v2864, %v2867
      %v2870 = vmul.u32 %v2865, %v2866
      %v2871 = vmul.u32 %v2865, %v2867
      %v2872 = vshll.u32 %v2869, 16
      %v2873 = vshrl.u32 %v2869, 16
      %v2874 = vshll.u32 %v2870, 16
      %v2875 = vshrl.u32 %v2870, 16
      %vm2876 = vc.u32 %v2868, %v2872
      %v2877 = vsel %vm2876, 1, 0
      %v2878 = vadd.s32 %v2868, %v2872
      %v2879 = vadd.s32 %v2871, %v2877
      %vm2880 = vc.u32 %v2878, %v2874
      %v2881 = vsel %vm2880, 1, 0
      %v2882 = vadd.s32 %v2878, %v2874
      %v2883 = vadd.s32 %v2879, %v2881
      %v2884 = vadd.s32 %v2883, %v2873
      %v2885 = vadd.s32 %v2884, %v2875
      %v2886 = vmul.u32 %v2841, %v2832
      %v2887 = vadd.s32 %v2863, %v2882
      %vm2888 = vc.u32 %v2863, %v2882
      %v2889 = vadd.s32 %v2885, 1
      %v2890 = vsel %vm2888, %v2889, %v2885
      %v2891 = vadd.s32 %v2886, %v2890
      %v2892 = vadd.s32 %v2891, 536870912
      %v2893 = vshrl.u32 %v2892, 30
      %v2894 = vshll.u32 %v2893, 30
      %v2895 = vsub.s32 %v2891, %v2894
      %vm2896 = vcmp.lt.s32.totalorder %v2895, 0
      %v2897 = vsub.s32 0, %v2895
      %v2898 = vsel %vm2896, %v2897, %v2895
      %v2899 = vclz %v2898
      %v2900 = vsub.s32 %v2899, 2
      %vm2901 = vcmp.gt.s32.totalorder 0, %v2900
      %v2902 = vsel %vm2901, 0, %v2900
      %v2903 = vsub.s32 32, %v2902
      %v2904 = vshll.u32 %v2895, %v2902
      %v2905 = vshrl.u32 %v2887, %v2903
      %v2906 = vor.u32 %v2904, %v2905
      %v2907 = vsub.s32 4294967266, %v2902
      %v2908 = vadd.s32 %v2907, 127
      %v2909 = vshll.u32 %v2908, 23
      %v2910 = vor.u32 4788187, %v2909
      %v2911 = vand.u32 2147483647, %v2910
      %v2913 = vcvt.s32.f32 %v2906
      %v2914 = vmul.f32 %v2913, %v2911
      %v2915 = vxor.u32 %v2914, 2147483648
      %v2916 = vsel %vm2795, %v2915, %v2914
      %v2917 = vsub.s32 4, %v2893
      %v2918 = vsel %vm2795, %v2917, %v2893
      %v2919 = vsel %vm2794, %v628, %v2916
      %v2920 = vsel %vm2794, 0, %v2918
      %v2921 = vmul.f32 %v2919, %v2919
      %v2922 = vmul.f32 %v2921, -0.001358992
      %v2923 = vadd.f32 %v2922, 0.041655596
      %v2924 = vmul.f32 %v2921, %v2923
      %v2925 = vadd.f32 %v2924, -0.4999988
      %v2926 = vmul.f32 %v2921, %v2925
      %v2927 = vadd.f32 1.0, %v2926
      %v2928 = vmul.f32 %v2919, %v2919
      %v2929 = vmul.f32 %v2928, -0.00019511016
      %v2930 = vadd.f32 %v2929, 0.008332121
      %v2931 = vmul.f32 %v2928, %v2930
      %v2932 = vadd.f32 %v2931, -0.16666654
      %v2933 = vmul.f32 %v2928, %v2932
      %v2934 = vadd.f32 %v2933, 1.0
      %v2935 = vmul.f32 %v2934, %v2919
      %vm2936 = vweird.f32 %v628
      %v2937 = vadd.s32 %v2920, 3
      %v2938 = vand.u32 %v2937, 3
      %vm2939 = vcmp.lt.s32.totalorder %v2938, 2
      %vm2940 = vcmp.eq.s32.totalorder %v2938, 0
      %v2941 = vxor.u32 %v2935, 2147483648
      %v2942 = vsel %vm2940, %v2927, %v2941
      %vm2943 = vcmp.eq.s32.totalorder %v2938, 2
      %v2944 = vxor.u32 %v2927, 2147483648
      %v2945 = vsel %vm2943, %v2944, %v2935
      %v2946 = vsel %vm2939, %v2942, %v2945
      %v2947 = vsel %vm2936, nan, %v2946
      %v2948 = vand.u32 2147483647, %v629
      %vm2949 = vcmp.le.f32.partialorder %v2948, 0.7853982
      %vm2950 = vcmp.lt.s32.totalorder %v629, 0
      %v2951 = vand.u32 %v629, 2139095040
      %v2952 = vshrl.u32 %v2951, 23
      %v2953 = vsub.s32 %v2952, 127
      %v2954 = vand.u32 2147483647, %v629
      %v2955 = vand.u32 %v2954, 8388607
      %v2956 = vor.u32 %v2955, 8388608
      %v2957 = vsub.s32 0, %v2956
      %v2958 = vadd.s32 %v2953, 1
      %vm2959 = vcmp.gt.s32.totalorder %v2958, 0
      %v2960 = vsel %vm2959, %v2958, 0
      %v2961 = vshrl.u32 %v2960, 5
      %v2962 = vand.u32 %v2960, 31
      %v2963 = vsub.s32 32, %v2962
      %v2964 = vshrl.u32 683565275, %v2963
      %v2965 = vshll.u32 683565275, %v2962
      %v2966 = vshrl.u32 2475754826, %v2963
      %v2967 = vor.u32 %v2965, %v2966
      %v2968 = vshll.u32 2475754826, %v2962
      %v2969 = vshrl.u32 2131351028, %v2963
      %v2970 = vor.u32 %v2968, %v2969
      %v2971 = vshll.u32 2131351028, %v2962
      %v2972 = vshrl.u32 2102212464, %v2963
      %v2973 = vor.u32 %v2971, %v2972
      %v2974 = vshll.u32 2102212464, %v2962
      %v2975 = vshrl.u32 920167782, %v2963
      %v2976 = vor.u32 %v2974, %v2975
      %v2977 = vshll.u32 920167782, %v2962
      %v2978 = vshrl.u32 1326507024, %v2963
      %v2979 = vor.u32 %v2977, %v2978
      %vm2980 = vcmp.lt.s32.totalorder %v2961, 1
      %vm2981 = vcmp.lt.s32.totalorder %v2961, 2
      %vm2982 = vcmp.lt.s32.totalorder %v2961, 3
      %vm2983 = vcmp.lt.s32.totalorder %v2961, 4
      %v2984 = vsel %vm2980, %v2964, %v2967
      %v2985 = vsel %vm2983, %v2973, 2102212464
      %v2986 = vsel %vm2982, %v2970, %v2985
      %v2987 = vsel %vm2981, %v2984, %v2986
      %v2988 = vsel %vm2980, %v2967, %v2970
      %v2989 = vsel %vm2983, %v2976, 920167782
      %v2990 = vsel %vm2982, %v2973, %v2989
      %v2991 = vsel %vm2981, %v2988, %v2990
      %v2992 = vsel %vm2980, %v2970, %v2973
      %v2993 = vsel %vm2983, %v2979, 1326507024
      %v2994 = vsel %vm2982, %v2976, %v2993
      %v2995 = vsel %vm2981, %v2992, %v2994
      %v2996 = vshll.u32 %v2956, 8
      %v2997 = vand.u32 %v2996, 65535
      %v2998 = vshrl.u32 %v2996, 16
      %v2999 = vand.u32 %v2995, 65535
      %v3000 = vshrl.u32 %v2995, 16
      %v3001 = vmul.u32 %v2997, %v2999
      %v3002 = vmul.u32 %v2997, %v3000
      %v3003 = vmul.u32 %v2998, %v2999
      %v3004 = vmul.u32 %v2998, %v3000
      %v3005 = vshll.u32 %v3002, 16
      %v3006 = vshrl.u32 %v3002, 16
      %v3007 = vshll.u32 %v3003, 16
      %v3008 = vshrl.u32 %v3003, 16
      %vm3009 = vc.u32 %v3001, %v3005
      %v3010 = vsel %vm3009, 1, 0
      %v3011 = vadd.s32 %v3001, %v3005
      %v3012 = vadd.s32 %v3004, %v3010
      %vm3013 = vc.u32 %v3011, %v3007
      %v3014 = vsel %vm3013, 1, 0
      %v3015 = vadd.s32 %v3011, %v3007
      %v3016 = vadd.s32 %v3012, %v3014
      %v3017 = vadd.s32 %v3016, %v3006
      %v3018 = vadd.s32 %v3017, %v3008
      %v3019 = vand.u32 %v2996, 65535
      %v3020 = vshrl.u32 %v2996, 16
      %v3021 = vand.u32 %v2991, 65535
      %v3022 = vshrl.u32 %v2991, 16
      %v3023 = vmul.u32 %v3019, %v3021
      %v3024 = vmul.u32 %v3019, %v3022
      %v3025 = vmul.u32 %v3020, %v3021
      %v3026 = vmul.u32 %v3020, %v3022
      %v3027 = vshll.u32 %v3024, 16
      %v3028 = vshrl.u32 %v3024, 16
      %v3029 = vshll.u32 %v3025, 16
      %v3030 = vshrl.u32 %v3025, 16
      %vm3031 = vc.u32 %v3023, %v3027
      %v3032 = vsel %vm3031, 1, 0
      %v3033 = vadd.s32 %v3023, %v3027
      %v3034 = vadd.s32 %v3026, %v3032
      %vm3035 = vc.u32 %v3033, %v3029
      %v3036 = vsel %vm3035, 1, 0
      %v3037 = vadd.s32 %v3033, %v3029
      %v3038 = vadd.s32 %v3034, %v3036
      %v3039 = vadd.s32 %v3038, %v3028
      %v3040 = vadd.s32 %v3039, %v3030
      %v3041 = vmul.u32 %v2996, %v2987
      %v3042 = vadd.s32 %v3018, %v3037
      %vm3043 = vc.u32 %v3018, %v3037
      %v3044 = vadd.s32 %v3040, 1
      %v3045 = vsel %vm3043, %v3044, %v3040
      %v3046 = vadd.s32 %v3041, %v3045
      %v3047 = vadd.s32 %v3046, 536870912
      %v3048 = vshrl.u32 %v3047, 30
      %v3049 = vshll.u32 %v3048, 30
      %v3050 = vsub.s32 %v3046, %v3049
      %vm3051 = vcmp.lt.s32.totalorder %v3050, 0
      %v3052 = vsub.s32 0, %v3050
      %v3053 = vsel %vm3051, %v3052, %v3050
      %v3054 = vclz %v3053
      %v3055 = vsub.s32 %v3054, 2
      %vm3056 = vcmp.gt.s32.totalorder 0, %v3055
      %v3057 = vsel %vm3056, 0, %v3055
      %v3058 = vsub.s32 32, %v3057
      %v3059 = vshll.u32 %v3050, %v3057
      %v3060 = vshrl.u32 %v3042, %v3058
      %v3061 = vor.u32 %v3059, %v3060
      %v3062 = vsub.s32 4294967266, %v3057
      %v3063 = vadd.s32 %v3062, 127
      %v3064 = vshll.u32 %v3063, 23
      %v3065 = vor.u32 4788187, %v3064
      %v3066 = vand.u32 2147483647, %v3065
      %v3068 = vcvt.s32.f32 %v3061
      %v3069 = vmul.f32 %v3068, %v3066
      %v3070 = vxor.u32 %v3069, 2147483648
      %v3071 = vsel %vm2950, %v3070, %v3069
      %v3072 = vsub.s32 4, %v3048
      %v3073 = vsel %vm2950, %v3072, %v3048
      %v3074 = vsel %vm2949, %v629, %v3071
      %v3075 = vsel %vm2949, 0, %v3073
      %v3076 = vmul.f32 %v3074, %v3074
      %v3077 = vmul.f32 %v3076, -0.001358992
      %v3078 = vadd.f32 %v3077, 0.041655596
      %v3079 = vmul.f32 %v3076, %v3078
      %v3080 = vadd.f32 %v3079, -0.4999988
      %v3081 = vmul.f32 %v3076, %v3080
      %v3082 = vadd.f32 1.0, %v3081
      %v3083 = vmul.f32 %v3074, %v3074
      %v3084 = vmul.f32 %v3083, -0.00019511016
      %v3085 = vadd.f32 %v3084, 0.008332121
      %v3086 = vmul.f32 %v3083, %v3085
      %v3087 = vadd.f32 %v3086, -0.16666654
      %v3088 = vmul.f32 %v3083, %v3087
      %v3089 = vadd.f32 %v3088, 1.0
      %v3090 = vmul.f32 %v3089, %v3074
      %vm3091 = vweird.f32 %v629
      %v3092 = vadd.s32 %v3075, 3
      %v3093 = vand.u32 %v3092, 3
      %vm3094 = vcmp.lt.s32.totalorder %v3093, 2
      %vm3095 = vcmp.eq.s32.totalorder %v3093, 0
      %v3096 = vxor.u32 %v3090, 2147483648
      %v3097 = vsel %vm3095, %v3082, %v3096
      %vm3098 = vcmp.eq.s32.totalorder %v3093, 2
      %v3099 = vxor.u32 %v3082, 2147483648
      %v3100 = vsel %vm3098, %v3099, %v3090
      %v3101 = vsel %vm3094, %v3097, %v3100
      %v3102 = vsel %vm3091, nan, %v3101
      %v3103 = vand.u32 2147483647, %v630
      %vm3104 = vcmp.le.f32.partialorder %v3103, 0.7853982
      %vm3105 = vcmp.lt.s32.totalorder %v630, 0
      %v3106 = vand.u32 %v630, 2139095040
      %v3107 = vshrl.u32 %v3106, 23
      %v3108 = vsub.s32 %v3107, 127
      %v3109 = vand.u32 2147483647, %v630
      %v3110 = vand.u32 %v3109, 8388607
      %v3111 = vor.u32 %v3110, 8388608
      %v3112 = vsub.s32 0, %v3111
      %v3113 = vadd.s32 %v3108, 1
      %vm3114 = vcmp.gt.s32.totalorder %v3113, 0
      %v3115 = vsel %vm3114, %v3113, 0
      %v3116 = vshrl.u32 %v3115, 5
      %v3117 = vand.u32 %v3115, 31
      %v3118 = vsub.s32 32, %v3117
      %v3119 = vshrl.u32 683565275, %v3118
      %v3120 = vshll.u32 683565275, %v3117
      %v3121 = vshrl.u32 2475754826, %v3118
      %v3122 = vor.u32 %v3120, %v3121
      %v3123 = vshll.u32 2475754826, %v3117
      %v3124 = vshrl.u32 2131351028, %v3118
      %v3125 = vor.u32 %v3123, %v3124
      %v3126 = vshll.u32 2131351028, %v3117
      %v3127 = vshrl.u32 2102212464, %v3118
      %v3128 = vor.u32 %v3126, %v3127
      %v3129 = vshll.u32 2102212464, %v3117
      %v3130 = vshrl.u32 920167782, %v3118
      %v3131 = vor.u32 %v3129, %v3130
      %v3132 = vshll.u32 920167782, %v3117
      %v3133 = vshrl.u32 1326507024, %v3118
      %v3134 = vor.u32 %v3132, %v3133
      %vm3135 = vcmp.lt.s32.totalorder %v3116, 1
      %vm3136 = vcmp.lt.s32.totalorder %v3116, 2
      %vm3137 = vcmp.lt.s32.totalorder %v3116, 3
      %vm3138 = vcmp.lt.s32.totalorder %v3116, 4
      %v3139 = vsel %vm3135, %v3119, %v3122
      %v3140 = vsel %vm3138, %v3128, 2102212464
      %v3141 = vsel %vm3137, %v3125, %v3140
      %v3142 = vsel %vm3136, %v3139, %v3141
      %v3143 = vsel %vm3135, %v3122, %v3125
      %v3144 = vsel %vm3138, %v3131, 920167782
      %v3145 = vsel %vm3137, %v3128, %v3144
      %v3146 = vsel %vm3136, %v3143, %v3145
      %v3147 = vsel %vm3135, %v3125, %v3128
      %v3148 = vsel %vm3138, %v3134, 1326507024
      %v3149 = vsel %vm3137, %v3131, %v3148
      %v3150 = vsel %vm3136, %v3147, %v3149
      %v3151 = vshll.u32 %v3111, 8
      %v3152 = vand.u32 %v3151, 65535
      %v3153 = vshrl.u32 %v3151, 16
      %v3154 = vand.u32 %v3150, 65535
      %v3155 = vshrl.u32 %v3150, 16
      %v3156 = vmul.u32 %v3152, %v3154
      %v3157 = vmul.u32 %v3152, %v3155
      %v3158 = vmul.u32 %v3153, %v3154
      %v3159 = vmul.u32 %v3153, %v3155
      %v3160 = vshll.u32 %v3157, 16
      %v3161 = vshrl.u32 %v3157, 16
      %v3162 = vshll.u32 %v3158, 16
      %v3163 = vshrl.u32 %v3158, 16
      %vm3164 = vc.u32 %v3156, %v3160
      %v3165 = vsel %vm3164, 1, 0
      %v3166 = vadd.s32 %v3156, %v3160
      %v3167 = vadd.s32 %v3159, %v3165
      %vm3168 = vc.u32 %v3166, %v3162
      %v3169 = vsel %vm3168, 1, 0
      %v3170 = vadd.s32 %v3166, %v3162
      %v3171 = vadd.s32 %v3167, %v3169
      %v3172 = vadd.s32 %v3171, %v3161
      %v3173 = vadd.s32 %v3172, %v3163
      %v3174 = vand.u32 %v3151, 65535
      %v3175 = vshrl.u32 %v3151, 16
      %v3176 = vand.u32 %v3146, 65535
      %v3177 = vshrl.u32 %v3146, 16
      %v3178 = vmul.u32 %v3174, %v3176
      %v3179 = vmul.u32 %v3174, %v3177
      %v3180 = vmul.u32 %v3175, %v3176
      %v3181 = vmul.u32 %v3175, %v3177
      %v3182 = vshll.u32 %v3179, 16
      %v3183 = vshrl.u32 %v3179, 16
      %v3184 = vshll.u32 %v3180, 16
      %v3185 = vshrl.u32 %v3180, 16
      %vm3186 = vc.u32 %v3178, %v3182
      %v3187 = vsel %vm3186, 1, 0
      %v3188 = vadd.s32 %v3178, %v3182
      %v3189 = vadd.s32 %v3181, %v3187
      %vm3190 = vc.u32 %v3188, %v3184
      %v3191 = vsel %vm3190, 1, 0
      %v3192 = vadd.s32 %v3188, %v3184
      %v3193 = vadd.s32 %v3189, %v3191
      %v3194 = vadd.s32 %v3193, %v3183
      %v3195 = vadd.s32 %v3194, %v3185
      %v3196 = vmul.u32 %v3151, %v3142
      %v3197 = vadd.s32 %v3173, %v3192
      %vm3198 = vc.u32 %v3173, %v3192
      %v3199 = vadd.s32 %v3195, 1
      %v3200 = vsel %vm3198, %v3199, %v3195
      %v3201 = vadd.s32 %v3196, %v3200
      %v3202 = vadd.s32 %v3201, 536870912
      %v3203 = vshrl.u32 %v3202, 30
      %v3204 = vshll.u32 %v3203, 30
      %v3205 = vsub.s32 %v3201, %v3204
      %vm3206 = vcmp.lt.s32.totalorder %v3205, 0
      %v3207 = vsub.s32 0, %v3205
      %v3208 = vsel %vm3206, %v3207, %v3205
      %v3209 = vclz %v3208
      %v3210 = vsub.s32 %v3209, 2
      %vm3211 = vcmp.gt.s32.totalorder 0, %v3210
      %v3212 = vsel %vm3211, 0, %v3210
      %v3213 = vsub.s32 32, %v3212
      %v3214 = vshll.u32 %v3205, %v3212
      %v3215 = vshrl.u32 %v3197, %v3213
      %v3216 = vor.u32 %v3214, %v3215
      %v3217 = vsub.s32 4294967266, %v3212
      %v3218 = vadd.s32 %v3217, 127
      %v3219 = vshll.u32 %v3218, 23
      %v3220 = vor.u32 4788187, %v3219
      %v3221 = vand.u32 2147483647, %v3220
      %v3223 = vcvt.s32.f32 %v3216
      %v3224 = vmul.f32 %v3223, %v3221
      %v3225 = vxor.u32 %v3224, 2147483648
      %v3226 = vsel %vm3105, %v3225, %v3224
      %v3227 = vsub.s32 4, %v3203
      %v3228 = vsel %vm3105, %v3227, %v3203
      %v3229 = vsel %vm3104, %v630, %v3226
      %v3230 = vsel %vm3104, 0, %v3228
      %v3231 = vmul.f32 %v3229, %v3229
      %v3232 = vmul.f32 %v3231, -0.001358992
      %v3233 = vadd.f32 %v3232, 0.041655596
      %v3234 = vmul.f32 %v3231, %v3233
      %v3235 = vadd.f32 %v3234, -0.4999988
      %v3236 = vmul.f32 %v3231, %v3235
      %v3237 = vadd.f32 1.0, %v3236
      %v3238 = vmul.f32 %v3229, %v3229
      %v3239 = vmul.f32 %v3238, -0.00019511016
      %v3240 = vadd.f32 %v3239, 0.008332121
      %v3241 = vmul.f32 %v3238, %v3240
      %v3242 = vadd.f32 %v3241, -0.16666654
      %v3243 = vmul.f32 %v3238, %v3242
      %v3244 = vadd.f32 %v3243, 1.0
      %v3245 = vmul.f32 %v3244, %v3229
      %vm3246 = vweird.f32 %v630
      %v3247 = vadd.s32 %v3230, 3
      %v3248 = vand.u32 %v3247, 3
      %vm3249 = vcmp.lt.s32.totalorder %v3248, 2
      %vm3250 = vcmp.eq.s32.totalorder %v3248, 0
      %v3251 = vxor.u32 %v3245, 2147483648
      %v3252 = vsel %vm3250, %v3237, %v3251
      %vm3253 = vcmp.eq.s32.totalorder %v3248, 2
      %v3254 = vxor.u32 %v3237, 2147483648
      %v3255 = vsel %vm3253, %v3254, %v3245
      %v3256 = vsel %vm3249, %v3252, %v3255
      %v3257 = vsel %vm3246, nan, %v3256
      %v3258 = vand.u32 2147483647, %v631
      %vm3259 = vcmp.le.f32.partialorder %v3258, 0.7853982
      %vm3260 = vcmp.lt.s32.totalorder %v631, 0
      %v3261 = vand.u32 %v631, 2139095040
      %v3262 = vshrl.u32 %v3261, 23
      %v3263 = vsub.s32 %v3262, 127
      %v3264 = vand.u32 2147483647, %v631
      %v3265 = vand.u32 %v3264, 8388607
      %v3266 = vor.u32 %v3265, 8388608
      %v3267 = vsub.s32 0, %v3266
      %v3268 = vadd.s32 %v3263, 1
      %vm3269 = vcmp.gt.s32.totalorder %v3268, 0
      %v3270 = vsel %vm3269, %v3268, 0
      %v3271 = vshrl.u32 %v3270, 5
      %v3272 = vand.u32 %v3270, 31
      %v3273 = vsub.s32 32, %v3272
      %v3274 = vshrl.u32 683565275, %v3273
      %v3275 = vshll.u32 683565275, %v3272
      %v3276 = vshrl.u32 2475754826, %v3273
      %v3277 = vor.u32 %v3275, %v3276
      %v3278 = vshll.u32 2475754826, %v3272
      %v3279 = vshrl.u32 2131351028, %v3273
      %v3280 = vor.u32 %v3278, %v3279
      %v3281 = vshll.u32 2131351028, %v3272
      %v3282 = vshrl.u32 2102212464, %v3273
      %v3283 = vor.u32 %v3281, %v3282
      %v3284 = vshll.u32 2102212464, %v3272
      %v3285 = vshrl.u32 920167782, %v3273
      %v3286 = vor.u32 %v3284, %v3285
      %v3287 = vshll.u32 920167782, %v3272
      %v3288 = vshrl.u32 1326507024, %v3273
      %v3289 = vor.u32 %v3287, %v3288
      %vm3290 = vcmp.lt.s32.totalorder %v3271, 1
      %vm3291 = vcmp.lt.s32.totalorder %v3271, 2
      %vm3292 = vcmp.lt.s32.totalorder %v3271, 3
      %vm3293 = vcmp.lt.s32.totalorder %v3271, 4
      %v3294 = vsel %vm3290, %v3274, %v3277
      %v3295 = vsel %vm3293, %v3283, 2102212464
      %v3296 = vsel %vm3292, %v3280, %v3295
      %v3297 = vsel %vm3291, %v3294, %v3296
      %v3298 = vsel %vm3290, %v3277, %v3280
      %v3299 = vsel %vm3293, %v3286, 920167782
      %v3300 = vsel %vm3292, %v3283, %v3299
      %v3301 = vsel %vm3291, %v3298, %v3300
      %v3302 = vsel %vm3290, %v3280, %v3283
      %v3303 = vsel %vm3293, %v3289, 1326507024
      %v3304 = vsel %vm3292, %v3286, %v3303
      %v3305 = vsel %vm3291, %v3302, %v3304
      %v3306 = vshll.u32 %v3266, 8
      %v3307 = vand.u32 %v3306, 65535
      %v3308 = vshrl.u32 %v3306, 16
      %v3309 = vand.u32 %v3305, 65535
      %v3310 = vshrl.u32 %v3305, 16
      %v3311 = vmul.u32 %v3307, %v3309
      %v3312 = vmul.u32 %v3307, %v3310
      %v3313 = vmul.u32 %v3308, %v3309
      %v3314 = vmul.u32 %v3308, %v3310
      %v3315 = vshll.u32 %v3312, 16
      %v3316 = vshrl.u32 %v3312, 16
      %v3317 = vshll.u32 %v3313, 16
      %v3318 = vshrl.u32 %v3313, 16
      %vm3319 = vc.u32 %v3311, %v3315
      %v3320 = vsel %vm3319, 1, 0
      %v3321 = vadd.s32 %v3311, %v3315
      %v3322 = vadd.s32 %v3314, %v3320
      %vm3323 = vc.u32 %v3321, %v3317
      %v3324 = vsel %vm3323, 1, 0
      %v3325 = vadd.s32 %v3321, %v3317
      %v3326 = vadd.s32 %v3322, %v3324
      %v3327 = vadd.s32 %v3326, %v3316
      %v3328 = vadd.s32 %v3327, %v3318
      %v3329 = vand.u32 %v3306, 65535
      %v3330 = vshrl.u32 %v3306, 16
      %v3331 = vand.u32 %v3301, 65535
      %v3332 = vshrl.u32 %v3301, 16
      %v3333 = vmul.u32 %v3329, %v3331
      %v3334 = vmul.u32 %v3329, %v3332
      %v3335 = vmul.u32 %v3330, %v3331
      %v3336 = vmul.u32 %v3330, %v3332
      %v3337 = vshll.u32 %v3334, 16
      %v3338 = vshrl.u32 %v3334, 16
      %v3339 = vshll.u32 %v3335, 16
      %v3340 = vshrl.u32 %v3335, 16
      %vm3341 = vc.u32 %v3333, %v3337
      %v3342 = vsel %vm3341, 1, 0
      %v3343 = vadd.s32 %v3333, %v3337
      %v3344 = vadd.s32 %v3336, %v3342
      %vm3345 = vc.u32 %v3343, %v3339
      %v3346 = vsel %vm3345, 1, 0
      %v3347 = vadd.s32 %v3343, %v3339
      %v3348 = vadd.s32 %v3344, %v3346
      %v3349 = vadd.s32 %v3348, %v3338
      %v3350 = vadd.s32 %v3349, %v3340
      %v3351 = vmul.u32 %v3306, %v3297
      %v3352 = vadd.s32 %v3328, %v3347
      %vm3353 = vc.u32 %v3328, %v3347
      %v3354 = vadd.s32 %v3350, 1
      %v3355 = vsel %vm3353, %v3354, %v3350
      %v3356 = vadd.s32 %v3351, %v3355
      %v3357 = vadd.s32 %v3356, 536870912
      %v3358 = vshrl.u32 %v3357, 30
      %v3359 = vshll.u32 %v3358, 30
      %v3360 = vsub.s32 %v3356, %v3359
      %vm3361 = vcmp.lt.s32.totalorder %v3360, 0
      %v3362 = vsub.s32 0, %v3360
      %v3363 = vsel %vm3361, %v3362, %v3360
      %v3364 = vclz %v3363
      %v3365 = vsub.s32 %v3364, 2
      %vm3366 = vcmp.gt.s32.totalorder 0, %v3365
      %v3367 = vsel %vm3366, 0, %v3365
      %v3368 = vsub.s32 32, %v3367
      %v3369 = vshll.u32 %v3360, %v3367
      %v3370 = vshrl.u32 %v3352, %v3368
      %v3371 = vor.u32 %v3369, %v3370
      %v3372 = vsub.s32 4294967266, %v3367
      %v3373 = vadd.s32 %v3372, 127
      %v3374 = vshll.u32 %v3373, 23
      %v3375 = vor.u32 4788187, %v3374
      %v3376 = vand.u32 2147483647, %v3375
      %v3378 = vcvt.s32.f32 %v3371
      %v3379 = vmul.f32 %v3378, %v3376
      %v3380 = vxor.u32 %v3379, 2147483648
      %v3381 = vsel %vm3260, %v3380, %v3379
      %v3382 = vsub.s32 4, %v3358
      %v3383 = vsel %vm3260, %v3382, %v3358
      %v3384 = vsel %vm3259, %v631, %v3381
      %v3385 = vsel %vm3259, 0, %v3383
      %v3386 = vmul.f32 %v3384, %v3384
      %v3387 = vmul.f32 %v3386, -0.001358992
      %v3388 = vadd.f32 %v3387, 0.041655596
      %v3389 = vmul.f32 %v3386, %v3388
      %v3390 = vadd.f32 %v3389, -0.4999988
      %v3391 = vmul.f32 %v3386, %v3390
      %v3392 = vadd.f32 1.0, %v3391
      %v3393 = vmul.f32 %v3384, %v3384
      %v3394 = vmul.f32 %v3393, -0.00019511016
      %v3395 = vadd.f32 %v3394, 0.008332121
      %v3396 = vmul.f32 %v3393, %v3395
      %v3397 = vadd.f32 %v3396, -0.16666654
      %v3398 = vmul.f32 %v3393, %v3397
      %v3399 = vadd.f32 %v3398, 1.0
      %v3400 = vmul.f32 %v3399, %v3384
      %vm3401 = vweird.f32 %v631
      %v3402 = vadd.s32 %v3385, 3
      %v3403 = vand.u32 %v3402, 3
      %vm3404 = vcmp.lt.s32.totalorder %v3403, 2
      %vm3405 = vcmp.eq.s32.totalorder %v3403, 0
      %v3406 = vxor.u32 %v3400, 2147483648
      %v3407 = vsel %vm3405, %v3392, %v3406
      %vm3408 = vcmp.eq.s32.totalorder %v3403, 2
      %v3409 = vxor.u32 %v3392, 2147483648
      %v3410 = vsel %vm3408, %v3409, %v3400
      %v3411 = vsel %vm3404, %v3407, %v3410
      %v3412 = vsel %vm3401, nan, %v3411
      %v3413 = vlaneseq
      %v3414 = vand.u32 %v3413, 127
      %vm3415 = vcmp.lt.s32.totalorder %v3414, 7
      %v3416 = vsel %vm3415, 0.0, -1e+30
      %v3417 = vld [vmem:[%s584] sm:$0xff]
      %v3418 = vld [vmem:[%s4] sm:$0x1]
      %v3419 = vld [vmem:[%s5] sm:$0x1]
      %v3420 = vld [vmem:[%s11] sm:$0x1]
      %v3421 = vld [vmem:[%s12] sm:$0x1]
      %v3422 = vld [vmem:[%s10] sm:$0x1]
      %v3423 = vld [vmem:[%s14] sm:$0x1]
      %v3424 = vld [vmem:[%s16] sm:$0x1]
      %v3425 = vld [vmem:[%s6] sm:$0xf]
      %v3426 = vld [vmem:[%s6 + $0x4] sm:$0xf]
      %v3427 = vld [vmem:[%s6 + $0x8] sm:$0xf]
      %v3428 = vld [vmem:[%s6 + $0xc] sm:$0xf]
      %v3429 = vld [vmem:[%s7] sm:$0xf]
      %v3430 = vld [vmem:[%s7 + $0x4] sm:$0xf]
      %v3431 = vld [vmem:[%s7 + $0x8] sm:$0xf]
      %v3432 = vld [vmem:[%s7 + $0xc] sm:$0xf]
      %v3433 = vld [vmem:[%s8] sm:$0xf]
      %v3434 = vld [vmem:[%s8 + $0x4] sm:$0xf]
      %v3435 = vld [vmem:[%s8 + $0x8] sm:$0xf]
      %v3436 = vld [vmem:[%s8 + $0xc] sm:$0xf]
      %v3437 = vld [vmem:[%s9] sm:$0xf]
      %v3438 = vld [vmem:[%s9 + $0x4] sm:$0xf]
      %v3439 = vld [vmem:[%s9 + $0x8] sm:$0xf]
      %v3440 = vld [vmem:[%s9 + $0xc] sm:$0xf]
      %v3441 = vld [vmem:[%s13] sm:$0xf]
      %v3442 = vld [vmem:[%s13 + $0x4] sm:$0xf]
      %v3443 = vld [vmem:[%s13 + $0x8] sm:$0xf]
      %v3444 = vld [vmem:[%s13 + $0xc] sm:$0xf]
      %v3445 = vld [vmem:[%s15] sm:$0xf]
      %v3446 = vld [vmem:[%s15 + $0x4] sm:$0xf]
      %v3447 = vld [vmem:[%s15 + $0x8] sm:$0xf]
      %v3448 = vld [vmem:[%s15 + $0xc] sm:$0xf]
      %v3449 = vld [vmem:[%s15 + $0x10] sm:$0xf]
      %v3450 = vld [vmem:[%s15 + $0x14] sm:$0xf]
      %v3451 = vld [vmem:[%s15 + $0x18] sm:$0xf]
      %v3452 = vld [vmem:[%s15 + $0x1c] sm:$0xf]
      %v3453 = vld [vmem:[%s15 + $0x20] sm:$0xf]
      %v3454 = vld [vmem:[%s15 + $0x24] sm:$0xf]
      %v3455 = vld [vmem:[%s15 + $0x28] sm:$0xf]
      %v3456 = vld [vmem:[%s15 + $0x2c] sm:$0xf]
      %v3457 = vld [vmem:[%s15 + $0x30] sm:$0xf]
      %v3458 = vld [vmem:[%s15 + $0x34] sm:$0xf]
      %v3459 = vld [vmem:[%s15 + $0x38] sm:$0xf]
      %v3460 = vld [vmem:[%s15 + $0x3c] sm:$0xf]
      %vm3461 = vcmask 261120
      %v3462 = vsel %vm3461, %v3417, 0.0
      %3463 = vadd.xlane.f32.xlu0 %v3462
      %v3464 = vpop.xlane.xlu0 %3463
      %v3465 = vrcp.pop 32.0
      %v3466 = vmul.f32 32.0, %v3465
      %v3467 = vsub.f32 1.0, %v3466
      %v3468 = vmul.f32 %v3465, %v3467
      %v3469 = vadd.f32 %v3465, %v3468
      %vm3470 = vweird.f32 %v3465
      %v3471 = vsel %vm3470, %v3465, %v3469
      %v3472 = vmul.f32 %v3464, %v3471
      %v3473 = vsub.f32 %v3417, %v3472
      %v3474 = vmul.f32 %v3473, %v3473
      %v3475 = vsel %vm3461, %v3474, 0.0
      %3476 = vadd.xlane.f32.xlu0 %v3475
      %v3477 = vpop.xlane.xlu0 %3476
      %v3478 = vmul.f32 %v3477, %v3471
      %v3479 = vadd.f32 %v3478, 1e-05
      %v3480 = vrsqrt.pop %v3479
      %v3481 = vmul.f32 %v3480, %v3479
      %v3482 = vmul.f32 %v3481, %v3480
      %v3483 = vmul.f32 0.5, %v3482
      %v3484 = vsub.f32 1.5, %v3483
      %v3485 = vmul.f32 %v3480, %v3484
      %vm3486 = vweird.f32 %v3479
      %vm3487 = vweird.f32 %v3480
      %vm3488 = vmor %vm3486, %vm3487
      %v3489 = vsel %vm3488, %v3480, %v3485
      %v3490 = vmul.f32 %v3473, %v3489
      %v3492 = vperm.slane %v3418, 0
      %v3494 = vmul.f32 %v3490, %v3492
      %v3496 = vperm.slane %v3419, 0
      %v3498 = vadd.f32 %v3494, %v3496
      %v3499 = vpack.c.bf16 %v3417, %v3417
      %v3500 = vpack.c.bf16 %v3498, %v3498
      %v3505 = vunpack.c.l.b16 %v3425
      %v3506 = vunpack.c.l.b16 %v3426
      %v3507 = vunpack.c.l.b16 %v3427
      %v3508 = vunpack.c.l.b16 %v3428
      %v3509 = vpack.c.b16 %v3506, %v3505
      %v3510 = vpack.c.b16 %v3508, %v3507
      %v3514 = vsel %vm3461, %v3500, 0
      %3516 = vmatpush.bf16.msra.mxu0 0
      %3517 = vmatpush.bf16.msra.mxu0 0
      %3518 = vmatpush.bf16.msra.mxu0 0
      %3519 = vmatpush.bf16.msra.mxu0 0
      %3520 = vmatpush.bf16.msra.mxu0 0
      %3521 = vmatpush.bf16.msra.mxu0 0
      %3522 = vmatpush.bf16.msra.mxu0 %v3510
      %3523 = vmatpush.bf16.msra.mxu0 %v3509
      %3524 = vmatmul.bf16.gmra.mxu0 %v3514
      %v3525 = vpop.f32.mrf.mxu0
      %v3526 = vadd.f32 0.0, %v3525
      %v3527 = vpop.f32.mrf.mxu0
      %3528 = vdwg.mxu0
      %v3529 = vmul.f32 %v3526, %v785
      %3531 = vrot.lane.b32.xlu0 %v940, 16
      %v3532 = vpop.permute.xlu0 %3531
      %v3534 = vmul.f32 %v3526, %v3532
      %3536 = vrot.lane.b32.xlu0 %v3534, 112
      %v3537 = vpop.permute.xlu0 %3536
      %v3539 = vsub.f32 %v3529, %v3537
      %3541 = vrot.lane.b32.xlu0 %v785, 16
      %v3542 = vpop.permute.xlu0 %3541
      %v3544 = vmul.f32 %v3526, %v3542
      %v3545 = vmul.f32 %v3526, %v940
      %3547 = vrot.lane.b32.xlu0 %v3545, 16
      %v3548 = vpop.permute.xlu0 %3547
      %v3550 = vadd.f32 %v3544, %v3548
      %vm3551 = vcmask 130048
      %v3552 = vsel %vm3551, %v3539, %v3550
      %v3557 = vunpack.c.l.b16 %v3429
      %v3558 = vunpack.c.l.b16 %v3430
      %v3559 = vunpack.c.l.b16 %v3431
      %v3560 = vunpack.c.l.b16 %v3432
      %v3561 = vpack.c.b16 %v3558, %v3557
      %v3562 = vpack.c.b16 %v3560, %v3559
      %v3566 = vsel %vm3461, %v3499, 0
      %3568 = vmatpush.bf16.msra.mxu0 0
      %3569 = vmatpush.bf16.msra.mxu0 0
      %3570 = vmatpush.bf16.msra.mxu0 0
      %3571 = vmatpush.bf16.msra.mxu0 0
      %3572 = vmatpush.bf16.msra.mxu0 0
      %3573 = vmatpush.bf16.msra.mxu0 0
      %3574 = vmatpush.bf16.msra.mxu0 %v3562
      %3575 = vmatpush.bf16.msra.mxu0 %v3561
      %3576 = vmatmul.bf16.gmra.mxu0 %v3566
      %v3577 = vpop.f32.mrf.mxu0
      %v3578 = vadd.f32 0.0, %v3577
      %v3579 = vpop.f32.mrf.mxu0
      %3580 = vdwg.mxu0
      %v3581 = vmul.f32 %v3578, %v785
      %v3582 = vmul.f32 %v3578, %v3532
      %3584 = vrot.lane.b32.xlu0 %v3582, 112
      %v3585 = vpop.permute.xlu0 %3584
      %v3587 = vsub.f32 %v3581, %v3585
      %v3588 = vmul.f32 %v3578, %v3542
      %v3589 = vmul.f32 %v3578, %v940
      %3591 = vrot.lane.b32.xlu0 %v3589, 16
      %v3592 = vpop.permute.xlu0 %3591
      %v3594 = vadd.f32 %v3588, %v3592
      %v3595 = vsel %vm3551, %v3587, %v3594
      %v3600 = vunpack.c.l.b16 %v3433
      %v3601 = vunpack.c.l.b16 %v3434
      %v3602 = vunpack.c.l.b16 %v3435
      %v3603 = vunpack.c.l.b16 %v3436
      %v3604 = vpack.c.b16 %v3601, %v3600
      %v3605 = vpack.c.b16 %v3603, %v3602
      %3608 = vmatpush.bf16.msra.mxu0 0
      %3609 = vmatpush.bf16.msra.mxu0 0
      %3610 = vmatpush.bf16.msra.mxu0 0
      %3611 = vmatpush.bf16.msra.mxu0 0
      %3612 = vmatpush.bf16.msra.mxu0 0
      %3613 = vmatpush.bf16.msra.mxu0 0
      %3614 = vmatpush.bf16.msra.mxu0 %v3605
      %3615 = vmatpush.bf16.msra.mxu0 %v3604
      %3616 = vmatmul.bf16.gmra.mxu0 %v3566
      %v3617 = vpop.f32.mrf.mxu0
      %v3618 = vadd.f32 0.0, %v3617
      %v3619 = vpop.f32.mrf.mxu0
      %3620 = vdwg.mxu0
      %v3629 = vunpack.c.l.b16 %v606
      %v3630 = vunpack.c.l.b16 %v607
      %v3631 = vunpack.c.l.b16 %v608
      %v3632 = vunpack.c.l.b16 %v609
      %v3633 = vunpack.c.l.b16 %v610
      %v3634 = vunpack.c.l.b16 %v611
      %v3635 = vunpack.c.l.b16 %v612
      %v3636 = vunpack.c.l.b16 %v613
      %v3637 = vpack.c.b16 %v3630, %v3629
      %v3638 = vpack.c.b16 %v3632, %v3631
      %v3639 = vpack.c.b16 %v3634, %v3633
      %v3640 = vpack.c.b16 %v3636, %v3635
      %v3642 = vsel %vm3461, %v3637, 0
      %v3645 = vsel %vm3461, %v3638, 0
      %v3648 = vsel %vm3461, %v3639, 0
      %v3651 = vsel %vm3461, %v3640, 0
      %3653 = vmatpush.bf16.msra.mxu0 0
      %3654 = vmatpush.bf16.msra.mxu0 0
      %3655 = vmatpush.bf16.msra.mxu0 0
      %3656 = vmatpush.bf16.msra.mxu0 0
      %3657 = vmatpush.bf16.msra.mxu0 0
      %3658 = vmatpush.bf16.msra.mxu0 0
      %3659 = vmatpush.bf16.msra.mxu0 %v3562
      %3660 = vmatpush.bf16.msra.mxu0 %v3561
      %3661 = vmatmul.bf16.gmra.mxu0 %v3642
      %v3662 = vpop.f32.mrf.mxu0
      %v3663 = vadd.f32 0.0, %v3662
      %v3664 = vpop.f32.mrf.mxu0
      %v3665 = vadd.f32 0.0, %v3664
      %3666 = vmatmul.bf16.gmra.mxu0 %v3645
      %v3667 = vpop.f32.mrf.mxu0
      %v3668 = vadd.f32 0.0, %v3667
      %v3669 = vpop.f32.mrf.mxu0
      %v3670 = vadd.f32 0.0, %v3669
      %3671 = vmatmul.bf16.gmra.mxu0 %v3648
      %v3672 = vpop.f32.mrf.mxu0
      %v3673 = vadd.f32 0.0, %v3672
      %v3674 = vpop.f32.mrf.mxu0
      %v3675 = vadd.f32 0.0, %v3674
      %3676 = vmatmul.bf16.gmra.mxu0 %v3651
      %v3677 = vpop.f32.mrf.mxu0
      %v3678 = vadd.f32 0.0, %v3677
      %v3679 = vpop.f32.mrf.mxu0
      %v3680 = vadd.f32 0.0, %v3679
      %3681 = vdwg.mxu0
      %v3682 = vmul.f32 %v3663, %v1094
      %v3683 = vmul.f32 %v3665, %v1248
      %v3684 = vmul.f32 %v3668, %v1402
      %v3685 = vmul.f32 %v3670, %v1556
      %v3686 = vmul.f32 %v3673, %v1710
      %v3687 = vmul.f32 %v3675, %v1864
      %v3688 = vmul.f32 %v3678, %v2018
      %v3689 = vmul.f32 %v3680, %v2172
      %3698 = vrot.lane.b32.xlu0 %v2327, 16
      %v3699 = vpop.permute.xlu0 %3698
      %3700 = vrot.lane.b32.xlu0 %v2482, 16
      %v3701 = vpop.permute.xlu0 %3700
      %3702 = vrot.lane.b32.xlu0 %v2637, 16
      %v3703 = vpop.permute.xlu0 %3702
      %3704 = vrot.lane.b32.xlu0 %v2792, 16
      %v3705 = vpop.permute.xlu0 %3704
      %3706 = vrot.lane.b32.xlu0 %v2947, 16
      %v3707 = vpop.permute.xlu0 %3706
      %3708 = vrot.lane.b32.xlu0 %v3102, 16
      %v3709 = vpop.permute.xlu0 %3708
      %3710 = vrot.lane.b32.xlu0 %v3257, 16
      %v3711 = vpop.permute.xlu0 %3710
      %3712 = vrot.lane.b32.xlu0 %v3412, 16
      %v3713 = vpop.permute.xlu0 %3712
      %v3722 = vmul.f32 %v3663, %v3699
      %v3723 = vmul.f32 %v3665, %v3701
      %v3724 = vmul.f32 %v3668, %v3703
      %v3725 = vmul.f32 %v3670, %v3705
      %v3726 = vmul.f32 %v3673, %v3707
      %v3727 = vmul.f32 %v3675, %v3709
      %v3728 = vmul.f32 %v3678, %v3711
      %v3729 = vmul.f32 %v3680, %v3713
      %3738 = vrot.lane.b32.xlu0 %v3722, 112
      %v3739 = vpop.permute.xlu0 %3738
      %3740 = vrot.lane.b32.xlu0 %v3723, 112
      %v3741 = vpop.permute.xlu0 %3740
      %3742 = vrot.lane.b32.xlu0 %v3724, 112
      %v3743 = vpop.permute.xlu0 %3742
      %3744 = vrot.lane.b32.xlu0 %v3725, 112
      %v3745 = vpop.permute.xlu0 %3744
      %3746 = vrot.lane.b32.xlu0 %v3726, 112
      %v3747 = vpop.permute.xlu0 %3746
      %3748 = vrot.lane.b32.xlu0 %v3727, 112
      %v3749 = vpop.permute.xlu0 %3748
      %3750 = vrot.lane.b32.xlu0 %v3728, 112
      %v3751 = vpop.permute.xlu0 %3750
      %3752 = vrot.lane.b32.xlu0 %v3729, 112
      %v3753 = vpop.permute.xlu0 %3752
      %v3762 = vsub.f32 %v3682, %v3739
      %v3763 = vsub.f32 %v3683, %v3741
      %v3764 = vsub.f32 %v3684, %v3743
      %v3765 = vsub.f32 %v3685, %v3745
      %v3766 = vsub.f32 %v3686, %v3747
      %v3767 = vsub.f32 %v3687, %v3749
      %v3768 = vsub.f32 %v3688, %v3751
      %v3769 = vsub.f32 %v3689, %v3753
      %3778 = vrot.lane.b32.xlu0 %v1094, 16
      %v3779 = vpop.permute.xlu0 %3778
      %3780 = vrot.lane.b32.xlu0 %v1248, 16
      %v3781 = vpop.permute.xlu0 %3780
      %3782 = vrot.lane.b32.xlu0 %v1402, 16
      %v3783 = vpop.permute.xlu0 %3782
      %3784 = vrot.lane.b32.xlu0 %v1556, 16
      %v3785 = vpop.permute.xlu0 %3784
      %3786 = vrot.lane.b32.xlu0 %v1710, 16
      %v3787 = vpop.permute.xlu0 %3786
      %3788 = vrot.lane.b32.xlu0 %v1864, 16
      %v3789 = vpop.permute.xlu0 %3788
      %3790 = vrot.lane.b32.xlu0 %v2018, 16
      %v3791 = vpop.permute.xlu0 %3790
      %3792 = vrot.lane.b32.xlu0 %v2172, 16
      %v3793 = vpop.permute.xlu0 %3792
      %v3802 = vmul.f32 %v3663, %v3779
      %v3803 = vmul.f32 %v3665, %v3781
      %v3804 = vmul.f32 %v3668, %v3783
      %v3805 = vmul.f32 %v3670, %v3785
      %v3806 = vmul.f32 %v3673, %v3787
      %v3807 = vmul.f32 %v3675, %v3789
      %v3808 = vmul.f32 %v3678, %v3791
      %v3809 = vmul.f32 %v3680, %v3793
      %v3810 = vmul.f32 %v3663, %v2327
      %v3811 = vmul.f32 %v3665, %v2482
      %v3812 = vmul.f32 %v3668, %v2637
      %v3813 = vmul.f32 %v3670, %v2792
      %v3814 = vmul.f32 %v3673, %v2947
      %v3815 = vmul.f32 %v3675, %v3102
      %v3816 = vmul.f32 %v3678, %v3257
      %v3817 = vmul.f32 %v3680, %v3412
      %3826 = vrot.lane.b32.xlu0 %v3810, 16
      %v3827 = vpop.permute.xlu0 %3826
      %3828 = vrot.lane.b32.xlu0 %v3811, 16
      %v3829 = vpop.permute.xlu0 %3828
      %3830 = vrot.lane.b32.xlu0 %v3812, 16
      %v3831 = vpop.permute.xlu0 %3830
      %3832 = vrot.lane.b32.xlu0 %v3813, 16
      %v3833 = vpop.permute.xlu0 %3832
      %3834 = vrot.lane.b32.xlu0 %v3814, 16
      %v3835 = vpop.permute.xlu0 %3834
      %3836 = vrot.lane.b32.xlu0 %v3815, 16
      %v3837 = vpop.permute.xlu0 %3836
      %3838 = vrot.lane.b32.xlu0 %v3816, 16
      %v3839 = vpop.permute.xlu0 %3838
      %3840 = vrot.lane.b32.xlu0 %v3817, 16
      %v3841 = vpop.permute.xlu0 %3840
      %v3850 = vadd.f32 %v3802, %v3827
      %v3851 = vadd.f32 %v3803, %v3829
      %v3852 = vadd.f32 %v3804, %v3831
      %v3853 = vadd.f32 %v3805, %v3833
      %v3854 = vadd.f32 %v3806, %v3835
      %v3855 = vadd.f32 %v3807, %v3837
      %v3856 = vadd.f32 %v3808, %v3839
      %v3857 = vadd.f32 %v3809, %v3841
      %v3858 = vsel %vm3551, %v3762, %v3850
      %v3859 = vsel %vm3551, %v3763, %v3851
      %v3860 = vsel %vm3551, %v3764, %v3852
      %v3861 = vsel %vm3551, %v3765, %v3853
      %v3862 = vsel %vm3551, %v3766, %v3854
      %v3863 = vsel %vm3551, %v3767, %v3855
      %v3864 = vsel %vm3551, %v3768, %v3856
      %v3865 = vsel %vm3551, %v3769, %v3857
      %3866 = vmatpush.bf16.msra.mxu0 0
      %3867 = vmatpush.bf16.msra.mxu0 0
      %3868 = vmatpush.bf16.msra.mxu0 0
      %3869 = vmatpush.bf16.msra.mxu0 0
      %3870 = vmatpush.bf16.msra.mxu0 0
      %3871 = vmatpush.bf16.msra.mxu0 0
      %3872 = vmatpush.bf16.msra.mxu0 %v3605
      %3873 = vmatpush.bf16.msra.mxu0 %v3604
      %3874 = vmatmul.bf16.gmra.mxu0 %v3642
      %v3875 = vpop.f32.mrf.mxu0
      %v3876 = vadd.f32 0.0, %v3875
      %v3877 = vpop.f32.mrf.mxu0
      %v3878 = vadd.f32 0.0, %v3877
      %3879 = vmatmul.bf16.gmra.mxu0 %v3645
      %v3880 = vpop.f32.mrf.mxu0
      %v3881 = vadd.f32 0.0, %v3880
      %v3882 = vpop.f32.mrf.mxu0
      %v3883 = vadd.f32 0.0, %v3882
      %3884 = vmatmul.bf16.gmra.mxu0 %v3648
      %v3885 = vpop.f32.mrf.mxu0
      %v3886 = vadd.f32 0.0, %v3885
      %v3887 = vpop.f32.mrf.mxu0
      %v3888 = vadd.f32 0.0, %v3887
      %3889 = vmatmul.bf16.gmra.mxu0 %v3651
      %v3890 = vpop.f32.mrf.mxu0
      %v3891 = vadd.f32 0.0, %v3890
      %v3892 = vpop.f32.mrf.mxu0
      %v3893 = vadd.f32 0.0, %v3892
      %3894 = vdwg.mxu0
      %v3895 = vmul.f32 %v3552, %v3595
      %v3896 = vsel %vm3551, %v3895, 0.0
      %3897 = vadd.xlane.f32.xlu0 %v3896
      %v3898 = vpop.xlane.xlu0 %3897
      %v3899 = vmul.f32 %v3898, 0.25
      %v3901 = vrot.slane %v3552, 1
      %v3902 = vrot.slane %v3552, 2
      %v3903 = vrot.slane %v3552, 3
      %v3904 = vrot.slane %v3552, 4
      %v3905 = vrot.slane %v3552, 5
      %v3906 = vrot.slane %v3552, 6
      %v3907 = vrot.slane %v3552, 7
      %v3908 = vperm.slane %v3552, 0
      %v3909 = vperm.slane %v3901, 0
      %v3910 = vperm.slane %v3902, 0
      %v3911 = vperm.slane %v3903, 0
      %v3912 = vperm.slane %v3904, 0
      %v3913 = vperm.slane %v3905, 0
      %v3914 = vperm.slane %v3906, 0
      %v3915 = vperm.slane %v3907, 0
      %v3924 = vmul.f32 %v3908, %v3858
      %v3925 = vmul.f32 %v3909, %v3859
      %v3926 = vmul.f32 %v3910, %v3860
      %v3927 = vmul.f32 %v3911, %v3861
      %v3928 = vmul.f32 %v3912, %v3862
      %v3929 = vmul.f32 %v3913, %v3863
      %v3930 = vmul.f32 %v3914, %v3864
      %v3931 = vmul.f32 %v3915, %v3865
      %v3932 = vsel %vm3551, %v3924, 0.0
      %3933 = vadd.xlane.f32.xlu0 %v3932
      %v3934 = vpop.xlane.xlu0 %3933
      %v3935 = vsel %vm3551, %v3925, 0.0
      %3936 = vadd.xlane.f32.xlu0 %v3935
      %v3937 = vpop.xlane.xlu0 %3936
      %v3938 = vsel %vm3551, %v3926, 0.0
      %3939 = vadd.xlane.f32.xlu0 %v3938
      %v3940 = vpop.xlane.xlu0 %3939
      %v3941 = vsel %vm3551, %v3927, 0.0
      %3942 = vadd.xlane.f32.xlu0 %v3941
      %v3943 = vpop.xlane.xlu0 %3942
      %v3944 = vsel %vm3551, %v3928, 0.0
      %3945 = vadd.xlane.f32.xlu0 %v3944
      %v3946 = vpop.xlane.xlu0 %3945
      %v3947 = vsel %vm3551, %v3929, 0.0
      %3948 = vadd.xlane.f32.xlu0 %v3947
      %v3949 = vpop.xlane.xlu0 %3948
      %v3950 = vsel %vm3551, %v3930, 0.0
      %3951 = vadd.xlane.f32.xlu0 %v3950
      %v3952 = vpop.xlane.xlu0 %3951
      %v3953 = vsel %vm3551, %v3931, 0.0
      %3954 = vadd.xlane.f32.xlu0 %v3953
      %v3955 = vpop.xlane.xlu0 %3954
      %v3956 = vmul.f32 %v3934, 0.25
      %v3957 = vmul.f32 %v3937, 0.25
      %v3958 = vmul.f32 %v3940, 0.25
      %v3959 = vmul.f32 %v3943, 0.25
      %v3960 = vmul.f32 %v3946, 0.25
      %v3961 = vmul.f32 %v3949, 0.25
      %v3962 = vmul.f32 %v3952, 0.25
      %v3963 = vmul.f32 %v3955, 0.25
      %v3965 = vlaneseq
      %v3966 = vshrl.u32 %v3965, 7
      %3968 = vset.pattern.permute.xlu0 %v3966
      %3969 = vperm.xlu0 %3968, %v3416
      %v3970 = vpop.permute.xlu0 %3969
      %v3972 = vadd.f32 %v3956, %v3970
      %v3973 = vadd.f32 %v3957, %v3970
      %v3974 = vadd.f32 %v3958, %v3970
      %v3975 = vadd.f32 %v3959, %v3970
      %v3976 = vadd.f32 %v3960, %v3970
      %v3977 = vadd.f32 %v3961, %v3970
      %v3978 = vadd.f32 %v3962, %v3970
      %v3979 = vadd.f32 %v3963, %v3970
      %3988 = vset.pattern.permute.xlu0 0
      %3989 = vperm.xlu0 %3988, %v3972
      %v3990 = vpop.permute.xlu0 %3989
      %3991 = vset.pattern.permute.xlu0 0
      %3992 = vperm.xlu0 %3991, %v3973
      %v3993 = vpop.permute.xlu0 %3992
      %3994 = vset.pattern.permute.xlu0 0
      %3995 = vperm.xlu0 %3994, %v3974
      %v3996 = vpop.permute.xlu0 %3995
      %3997 = vset.pattern.permute.xlu0 0
      %3998 = vperm.xlu0 %3997, %v3975
      %v3999 = vpop.permute.xlu0 %3998
      %4000 = vset.pattern.permute.xlu0 0
      %4001 = vperm.xlu0 %4000, %v3976
      %v4002 = vpop.permute.xlu0 %4001
      %4003 = vset.pattern.permute.xlu0 0
      %4004 = vperm.xlu0 %4003, %v3977
      %v4005 = vpop.permute.xlu0 %4004
      %4006 = vset.pattern.permute.xlu0 0
      %4007 = vperm.xlu0 %4006, %v3978
      %v4008 = vpop.permute.xlu0 %4007
      %4009 = vset.pattern.permute.xlu0 0
      %4010 = vperm.xlu0 %4009, %v3979
      %v4011 = vpop.permute.xlu0 %4010
      %v4012 = vperm.slane %v3990, %v3414
      %v4013 = vperm.slane %v3993, %v3414
      %v4014 = vperm.slane %v3996, %v3414
      %v4015 = vperm.slane %v3999, %v3414
      %v4016 = vperm.slane %v4002, %v3414
      %v4017 = vperm.slane %v4005, %v3414
      %v4018 = vperm.slane %v4008, %v3414
      %v4019 = vperm.slane %v4011, %v3414
      %vm4020 = vcmask 1041409
      %v4021 = vsel %vm4020, %v4013, %v4012
      %vm4022 = vcmask 1042434
      %v4023 = vsel %vm4022, %v4014, %v4021
      %vm4024 = vcmask 1043459
      %v4025 = vsel %vm4024, %v4015, %v4023
      %vm4026 = vcmask 1044484
      %v4027 = vsel %vm4026, %v4016, %v4025
      %vm4028 = vcmask 1045509
      %v4029 = vsel %vm4028, %v4017, %v4027
      %vm4030 = vcmask 1046534
      %v4031 = vsel %vm4030, %v4018, %v4029
      %vm4032 = vcmask 1047559
      %v4033 = vsel %vm4032, %v4019, %v4031
      %vm4035 = vcmask 64512
      %v4036 = vsel %vm4035, %v4033, -inf
      %4037 = vmax.xlane.f32.xlu0 %v4036
      %v4038 = vpop.xlane.xlu0 %4037
      %v4039 = vmax.f32 %v4038, %v3899
      %v4040 = vsub.f32 %v3899, %v4039
      %v4041 = vmul.f32 %v4040, 1.442695
      %v4042 = vpow.pop %v4041
      %v4044 = vperm.slane %v4039, 0
      %v4045 = vperm.slane %v4039, 1
      %v4046 = vperm.slane %v4039, 2
      %v4047 = vperm.slane %v4039, 3
      %v4048 = vperm.slane %v4039, 4
      %v4049 = vperm.slane %v4039, 5
      %v4050 = vperm.slane %v4039, 6
      %v4051 = vperm.slane %v4039, 7
      %v4060 = vsub.f32 %v3972, %v4044
      %v4061 = vsub.f32 %v3973, %v4045
      %v4062 = vsub.f32 %v3974, %v4046
      %v4063 = vsub.f32 %v3975, %v4047
      %v4064 = vsub.f32 %v3976, %v4048
      %v4065 = vsub.f32 %v3977, %v4049
      %v4066 = vsub.f32 %v3978, %v4050
      %v4067 = vsub.f32 %v3979, %v4051
      %v4068 = vmul.f32 %v4060, 1.442695
      %v4069 = vpow.pop %v4068
      %v4070 = vmul.f32 %v4061, 1.442695
      %v4071 = vpow.pop %v4070
      %v4072 = vmul.f32 %v4062, 1.442695
      %v4073 = vpow.pop %v4072
      %v4074 = vmul.f32 %v4063, 1.442695
      %v4075 = vpow.pop %v4074
      %v4076 = vmul.f32 %v4064, 1.442695
      %v4077 = vpow.pop %v4076
      %v4078 = vmul.f32 %v4065, 1.442695
      %v4079 = vpow.pop %v4078
      %v4080 = vmul.f32 %v4066, 1.442695
      %v4081 = vpow.pop %v4080
      %v4082 = vmul.f32 %v4067, 1.442695
      %v4083 = vpow.pop %v4082
      %4092 = vset.pattern.permute.xlu0 0
      %4093 = vperm.xlu0 %4092, %v4069
      %v4094 = vpop.permute.xlu0 %4093
      %4095 = vset.pattern.permute.xlu0 0
      %4096 = vperm.xlu0 %4095, %v4071
      %v4097 = vpop.permute.xlu0 %4096
      %4098 = vset.pattern.permute.xlu0 0
      %4099 = vperm.xlu0 %4098, %v4073
      %v4100 = vpop.permute.xlu0 %4099
      %4101 = vset.pattern.permute.xlu0 0
      %4102 = vperm.xlu0 %4101, %v4075
      %v4103 = vpop.permute.xlu0 %4102
      %4104 = vset.pattern.permute.xlu0 0
      %4105 = vperm.xlu0 %4104, %v4077
      %v4106 = vpop.permute.xlu0 %4105
      %4107 = vset.pattern.permute.xlu0 0
      %4108 = vperm.xlu0 %4107, %v4079
      %v4109 = vpop.permute.xlu0 %4108
      %4110 = vset.pattern.permute.xlu0 0
      %4111 = vperm.xlu0 %4110, %v4081
      %v4112 = vpop.permute.xlu0 %4111
      %4113 = vset.pattern.permute.xlu0 0
      %4114 = vperm.xlu0 %4113, %v4083
      %v4115 = vpop.permute.xlu0 %4114
      %v4116 = vperm.slane %v4094, %v3414
      %v4117 = vperm.slane %v4097, %v3414
      %v4118 = vperm.slane %v4100, %v3414
      %v4119 = vperm.slane %v4103, %v3414
      %v4120 = vperm.slane %v4106, %v3414
      %v4121 = vperm.slane %v4109, %v3414
      %v4122 = vperm.slane %v4112, %v3414
      %v4123 = vperm.slane %v4115, %v3414
      %v4124 = vsel %vm4020, %v4117, %v4116
      %v4125 = vsel %vm4022, %v4118, %v4124
      %v4126 = vsel %vm4024, %v4119, %v4125
      %v4127 = vsel %vm4026, %v4120, %v4126
      %v4128 = vsel %vm4028, %v4121, %v4127
      %v4129 = vsel %vm4030, %v4122, %v4128
      %v4130 = vsel %vm4032, %v4123, %v4129
      %v4132 = vsel %vm4035, %v4130, 0.0
      %4133 = vadd.xlane.f32.xlu0 %v4132
      %v4134 = vpop.xlane.xlu0 %4133
      %v4135 = vadd.f32 %v4042, %v4134
      %v4136 = vrcp.pop %v4135
      %v4137 = vmul.f32 %v4042, %v3618
      %v4146 = vmul.f32 %v4094, %v3876
      %v4147 = vmul.f32 %v4097, %v3878
      %v4148 = vmul.f32 %v4100, %v3881
      %v4149 = vmul.f32 %v4103, %v3883
      %v4150 = vmul.f32 %v4106, %v3886
      %v4151 = vmul.f32 %v4109, %v3888
      %v4152 = vmul.f32 %v4112, %v3891
      %v4153 = vmul.f32 %v4115, %v3893
      %v4154 = vsel %vm3551, %v4146, 0.0
      %v4155 = vrot.slane %v4154, 4
      %v4156 = vadd.f32 %v4154, %v4155
      %v4157 = vrot.slane %v4156, 2
      %v4158 = vadd.f32 %v4156, %v4157
      %v4159 = vrot.slane %v4158, 1
      %v4160 = vadd.f32 %v4158, %v4159
      %v4161 = vsel %vm3551, %v4147, 0.0
      %v4162 = vrot.slane %v4161, 4
      %v4163 = vadd.f32 %v4161, %v4162
      %v4164 = vrot.slane %v4163, 2
      %v4165 = vadd.f32 %v4163, %v4164
      %v4166 = vrot.slane %v4165, 1
      %v4167 = vadd.f32 %v4165, %v4166
      %v4168 = vsel %vm3551, %v4148, 0.0
      %v4169 = vrot.slane %v4168, 4
      %v4170 = vadd.f32 %v4168, %v4169
      %v4171 = vrot.slane %v4170, 2
      %v4172 = vadd.f32 %v4170, %v4171
      %v4173 = vrot.slane %v4172, 1
      %v4174 = vadd.f32 %v4172, %v4173
      %v4175 = vsel %vm3551, %v4149, 0.0
      %v4176 = vrot.slane %v4175, 4
      %v4177 = vadd.f32 %v4175, %v4176
      %v4178 = vrot.slane %v4177, 2
      %v4179 = vadd.f32 %v4177, %v4178
      %v4180 = vrot.slane %v4179, 1
      %v4181 = vadd.f32 %v4179, %v4180
      %v4182 = vsel %vm3551, %v4150, 0.0
      %v4183 = vrot.slane %v4182, 4
      %v4184 = vadd.f32 %v4182, %v4183
      %v4185 = vrot.slane %v4184, 2
      %v4186 = vadd.f32 %v4184, %v4185
      %v4187 = vrot.slane %v4186, 1
      %v4188 = vadd.f32 %v4186, %v4187
      %v4189 = vsel %vm3551, %v4151, 0.0
      %v4190 = vrot.slane %v4189, 4
      %v4191 = vadd.f32 %v4189, %v4190
      %v4192 = vrot.slane %v4191, 2
      %v4193 = vadd.f32 %v4191, %v4192
      %v4194 = vrot.slane %v4193, 1
      %v4195 = vadd.f32 %v4193, %v4194
      %v4196 = vsel %vm3551, %v4152, 0.0
      %v4197 = vrot.slane %v4196, 4
      %v4198 = vadd.f32 %v4196, %v4197
      %v4199 = vrot.slane %v4198, 2
      %v4200 = vadd.f32 %v4198, %v4199
      %v4201 = vrot.slane %v4200, 1
      %v4202 = vadd.f32 %v4200, %v4201
      %v4203 = vsel %vm3551, %v4153, 0.0
      %v4204 = vrot.slane %v4203, 4
      %v4205 = vadd.f32 %v4203, %v4204
      %v4206 = vrot.slane %v4205, 2
      %v4207 = vadd.f32 %v4205, %v4206
      %v4208 = vrot.slane %v4207, 1
      %v4209 = vadd.f32 %v4207, %v4208
      %v4218 = vsel %vm4020, %v4167, %v4160
      %v4219 = vsel %vm4022, %v4174, %v4218
      %v4220 = vsel %vm4024, %v4181, %v4219
      %v4221 = vsel %vm4026, %v4188, %v4220
      %v4222 = vsel %vm4028, %v4195, %v4221
      %v4223 = vsel %vm4030, %v4202, %v4222
      %v4224 = vsel %vm4032, %v4209, %v4223
      %v4226 = vadd.f32 %v4137, %v4224
      %v4227 = vmul.f32 %v4226, %v4136
      %4229 = vrot.lane.b32.xlu0 %v3895, 112
      %v4230 = vpop.permute.xlu0 %4229
      %v4232 = vsel %vm3551, %v4230, 0.0
      %4233 = vadd.xlane.f32.xlu0 %v4232
      %v4234 = vpop.xlane.xlu0 %4233
      %v4235 = vmul.f32 %v4234, 0.25
      %4244 = vrot.lane.b32.xlu0 %v3924, 112
      %v4245 = vpop.permute.xlu0 %4244
      %4246 = vrot.lane.b32.xlu0 %v3925, 112
      %v4247 = vpop.permute.xlu0 %4246
      %4248 = vrot.lane.b32.xlu0 %v3926, 112
      %v4249 = vpop.permute.xlu0 %4248
      %4250 = vrot.lane.b32.xlu0 %v3927, 112
      %v4251 = vpop.permute.xlu0 %4250
      %4252 = vrot.lane.b32.xlu0 %v3928, 112
      %v4253 = vpop.permute.xlu0 %4252
      %4254 = vrot.lane.b32.xlu0 %v3929, 112
      %v4255 = vpop.permute.xlu0 %4254
      %4256 = vrot.lane.b32.xlu0 %v3930, 112
      %v4257 = vpop.permute.xlu0 %4256
      %4258 = vrot.lane.b32.xlu0 %v3931, 112
      %v4259 = vpop.permute.xlu0 %4258
      %v4268 = vsel %vm3551, %v4245, 0.0
      %4269 = vadd.xlane.f32.xlu0 %v4268
      %v4270 = vpop.xlane.xlu0 %4269
      %v4271 = vsel %vm3551, %v4247, 0.0
      %4272 = vadd.xlane.f32.xlu0 %v4271
      %v4273 = vpop.xlane.xlu0 %4272
      %v4274 = vsel %vm3551, %v4249, 0.0
      %4275 = vadd.xlane.f32.xlu0 %v4274
      %v4276 = vpop.xlane.xlu0 %4275
      %v4277 = vsel %vm3551, %v4251, 0.0
      %4278 = vadd.xlane.f32.xlu0 %v4277
      %v4279 = vpop.xlane.xlu0 %4278
      %v4280 = vsel %vm3551, %v4253, 0.0
      %4281 = vadd.xlane.f32.xlu0 %v4280
      %v4282 = vpop.xlane.xlu0 %4281
      %v4283 = vsel %vm3551, %v4255, 0.0
      %4284 = vadd.xlane.f32.xlu0 %v4283
      %v4285 = vpop.xlane.xlu0 %4284
      %v4286 = vsel %vm3551, %v4257, 0.0
      %4287 = vadd.xlane.f32.xlu0 %v4286
      %v4288 = vpop.xlane.xlu0 %4287
      %v4289 = vsel %vm3551, %v4259, 0.0
      %4290 = vadd.xlane.f32.xlu0 %v4289
      %v4291 = vpop.xlane.xlu0 %4290
      %v4292 = vmul.f32 %v4270, 0.25
      %v4293 = vmul.f32 %v4273, 0.25
      %v4294 = vmul.f32 %v4276, 0.25
      %v4295 = vmul.f32 %v4279, 0.25
      %v4296 = vmul.f32 %v4282, 0.25
      %v4297 = vmul.f32 %v4285, 0.25
      %v4298 = vmul.f32 %v4288, 0.25
      %v4299 = vmul.f32 %v4291, 0.25
      %v4300 = vadd.f32 %v4292, %v3970
      %v4301 = vadd.f32 %v4293, %v3970
      %v4302 = vadd.f32 %v4294, %v3970
      %v4303 = vadd.f32 %v4295, %v3970
      %v4304 = vadd.f32 %v4296, %v3970
      %v4305 = vadd.f32 %v4297, %v3970
      %v4306 = vadd.f32 %v4298, %v3970
      %v4307 = vadd.f32 %v4299, %v3970
      %4316 = vset.pattern.permute.xlu0 0
      %4317 = vperm.xlu0 %4316, %v4300
      %v4318 = vpop.permute.xlu0 %4317
      %4319 = vset.pattern.permute.xlu0 0
      %4320 = vperm.xlu0 %4319, %v4301
      %v4321 = vpop.permute.xlu0 %4320
      %4322 = vset.pattern.permute.xlu0 0
      %4323 = vperm.xlu0 %4322, %v4302
      %v4324 = vpop.permute.xlu0 %4323
      %4325 = vset.pattern.permute.xlu0 0
      %4326 = vperm.xlu0 %4325, %v4303
      %v4327 = vpop.permute.xlu0 %4326
      %4328 = vset.pattern.permute.xlu0 0
      %4329 = vperm.xlu0 %4328, %v4304
      %v4330 = vpop.permute.xlu0 %4329
      %4331 = vset.pattern.permute.xlu0 0
      %4332 = vperm.xlu0 %4331, %v4305
      %v4333 = vpop.permute.xlu0 %4332
      %4334 = vset.pattern.permute.xlu0 0
      %4335 = vperm.xlu0 %4334, %v4306
      %v4336 = vpop.permute.xlu0 %4335
      %4337 = vset.pattern.permute.xlu0 0
      %4338 = vperm.xlu0 %4337, %v4307
      %v4339 = vpop.permute.xlu0 %4338
      %v4340 = vperm.slane %v4318, %v3414
      %v4341 = vperm.slane %v4321, %v3414
      %v4342 = vperm.slane %v4324, %v3414
      %v4343 = vperm.slane %v4327, %v3414
      %v4344 = vperm.slane %v4330, %v3414
      %v4345 = vperm.slane %v4333, %v3414
      %v4346 = vperm.slane %v4336, %v3414
      %v4347 = vperm.slane %v4339, %v3414
      %v4348 = vsel %vm4020, %v4341, %v4340
      %v4349 = vsel %vm4022, %v4342, %v4348
      %v4350 = vsel %vm4024, %v4343, %v4349
      %v4351 = vsel %vm4026, %v4344, %v4350
      %v4352 = vsel %vm4028, %v4345, %v4351
      %v4353 = vsel %vm4030, %v4346, %v4352
      %v4354 = vsel %vm4032, %v4347, %v4353
      %v4356 = vsel %vm4035, %v4354, -inf
      %4357 = vmax.xlane.f32.xlu0 %v4356
      %v4358 = vpop.xlane.xlu0 %4357
      %v4359 = vmax.f32 %v4358, %v4235
      %v4360 = vsub.f32 %v4235, %v4359
      %v4361 = vmul.f32 %v4360, 1.442695
      %v4362 = vpow.pop %v4361
      %v4364 = vperm.slane %v4359, 0
      %v4365 = vperm.slane %v4359, 1
      %v4366 = vperm.slane %v4359, 2
      %v4367 = vperm.slane %v4359, 3
      %v4368 = vperm.slane %v4359, 4
      %v4369 = vperm.slane %v4359, 5
      %v4370 = vperm.slane %v4359, 6
      %v4371 = vperm.slane %v4359, 7
      %v4380 = vsub.f32 %v4300, %v4364
      %v4381 = vsub.f32 %v4301, %v4365
      %v4382 = vsub.f32 %v4302, %v4366
      %v4383 = vsub.f32 %v4303, %v4367
      %v4384 = vsub.f32 %v4304, %v4368
      %v4385 = vsub.f32 %v4305, %v4369
      %v4386 = vsub.f32 %v4306, %v4370
      %v4387 = vsub.f32 %v4307, %v4371
      %v4388 = vmul.f32 %v4380, 1.442695
      %v4389 = vpow.pop %v4388
      %v4390 = vmul.f32 %v4381, 1.442695
      %v4391 = vpow.pop %v4390
      %v4392 = vmul.f32 %v4382, 1.442695
      %v4393 = vpow.pop %v4392
      %v4394 = vmul.f32 %v4383, 1.442695
      %v4395 = vpow.pop %v4394
      %v4396 = vmul.f32 %v4384, 1.442695
      %v4397 = vpow.pop %v4396
      %v4398 = vmul.f32 %v4385, 1.442695
      %v4399 = vpow.pop %v4398
      %v4400 = vmul.f32 %v4386, 1.442695
      %v4401 = vpow.pop %v4400
      %v4402 = vmul.f32 %v4387, 1.442695
      %v4403 = vpow.pop %v4402
      %4412 = vset.pattern.permute.xlu0 0
      %4413 = vperm.xlu0 %4412, %v4389
      %v4414 = vpop.permute.xlu0 %4413
      %4415 = vset.pattern.permute.xlu0 0
      %4416 = vperm.xlu0 %4415, %v4391
      %v4417 = vpop.permute.xlu0 %4416
      %4418 = vset.pattern.permute.xlu0 0
      %4419 = vperm.xlu0 %4418, %v4393
      %v4420 = vpop.permute.xlu0 %4419
      %4421 = vset.pattern.permute.xlu0 0
      %4422 = vperm.xlu0 %4421, %v4395
      %v4423 = vpop.permute.xlu0 %4422
      %4424 = vset.pattern.permute.xlu0 0
      %4425 = vperm.xlu0 %4424, %v4397
      %v4426 = vpop.permute.xlu0 %4425
      %4427 = vset.pattern.permute.xlu0 0
      %4428 = vperm.xlu0 %4427, %v4399
      %v4429 = vpop.permute.xlu0 %4428
      %4430 = vset.pattern.permute.xlu0 0
      %4431 = vperm.xlu0 %4430, %v4401
      %v4432 = vpop.permute.xlu0 %4431
      %4433 = vset.pattern.permute.xlu0 0
      %4434 = vperm.xlu0 %4433, %v4403
      %v4435 = vpop.permute.xlu0 %4434
      %v4436 = vperm.slane %v4414, %v3414
      %v4437 = vperm.slane %v4417, %v3414
      %v4438 = vperm.slane %v4420, %v3414
      %v4439 = vperm.slane %v4423, %v3414
      %v4440 = vperm.slane %v4426, %v3414
      %v4441 = vperm.slane %v4429, %v3414
      %v4442 = vperm.slane %v4432, %v3414
      %v4443 = vperm.slane %v4435, %v3414
      %v4444 = vsel %vm4020, %v4437, %v4436
      %v4445 = vsel %vm4022, %v4438, %v4444
      %v4446 = vsel %vm4024, %v4439, %v4445
      %v4447 = vsel %vm4026, %v4440, %v4446
      %v4448 = vsel %vm4028, %v4441, %v4447
      %v4449 = vsel %vm4030, %v4442, %v4448
      %v4450 = vsel %vm4032, %v4443, %v4449
      %v4452 = vsel %vm4035, %v4450, 0.0
      %4453 = vadd.xlane.f32.xlu0 %v4452
      %v4454 = vpop.xlane.xlu0 %4453
      %v4455 = vadd.f32 %v4362, %v4454
      %v4456 = vrcp.pop %v4455
      %v4457 = vmul.f32 %v4362, %v3618
      %v4466 = vmul.f32 %v4414, %v3876
      %v4467 = vmul.f32 %v4417, %v3878
      %v4468 = vmul.f32 %v4420, %v3881
      %v4469 = vmul.f32 %v4423, %v3883
      %v4470 = vmul.f32 %v4426, %v3886
      %v4471 = vmul.f32 %v4429, %v3888
      %v4472 = vmul.f32 %v4432, %v3891
      %v4473 = vmul.f32 %v4435, %v3893
      %vm4474 = vcmask 261248
      %v4475 = vsel %vm4474, %v4466, 0.0
      %v4476 = vrot.slane %v4475, 4
      %v4477 = vadd.f32 %v4475, %v4476
      %v4478 = vrot.slane %v4477, 2
      %v4479 = vadd.f32 %v4477, %v4478
      %v4480 = vrot.slane %v4479, 1
      %v4481 = vadd.f32 %v4479, %v4480
      %v4482 = vsel %vm4474, %v4467, 0.0
      %v4483 = vrot.slane %v4482, 4
      %v4484 = vadd.f32 %v4482, %v4483
      %v4485 = vrot.slane %v4484, 2
      %v4486 = vadd.f32 %v4484, %v4485
      %v4487 = vrot.slane %v4486, 1
      %v4488 = vadd.f32 %v4486, %v4487
      %v4489 = vsel %vm4474, %v4468, 0.0
      %v4490 = vrot.slane %v4489, 4
      %v4491 = vadd.f32 %v4489, %v4490
      %v4492 = vrot.slane %v4491, 2
      %v4493 = vadd.f32 %v4491, %v4492
      %v4494 = vrot.slane %v4493, 1
      %v4495 = vadd.f32 %v4493, %v4494
      %v4496 = vsel %vm4474, %v4469, 0.0
      %v4497 = vrot.slane %v4496, 4
      %v4498 = vadd.f32 %v4496, %v4497
      %v4499 = vrot.slane %v4498, 2
      %v4500 = vadd.f32 %v4498, %v4499
      %v4501 = vrot.slane %v4500, 1
      %v4502 = vadd.f32 %v4500, %v4501
      %v4503 = vsel %vm4474, %v4470, 0.0
      %v4504 = vrot.slane %v4503, 4
      %v4505 = vadd.f32 %v4503, %v4504
      %v4506 = vrot.slane %v4505, 2
      %v4507 = vadd.f32 %v4505, %v4506
      %v4508 = vrot.slane %v4507, 1
      %v4509 = vadd.f32 %v4507, %v4508
      %v4510 = vsel %vm4474, %v4471, 0.0
      %v4511 = vrot.slane %v4510, 4
      %v4512 = vadd.f32 %v4510, %v4511
      %v4513 = vrot.slane %v4512, 2
      %v4514 = vadd.f32 %v4512, %v4513
      %v4515 = vrot.slane %v4514, 1
      %v4516 = vadd.f32 %v4514, %v4515
      %v4517 = vsel %vm4474, %v4472, 0.0
      %v4518 = vrot.slane %v4517, 4
      %v4519 = vadd.f32 %v4517, %v4518
      %v4520 = vrot.slane %v4519, 2
      %v4521 = vadd.f32 %v4519, %v4520
      %v4522 = vrot.slane %v4521, 1
      %v4523 = vadd.f32 %v4521, %v4522
      %v4524 = vsel %vm4474, %v4473, 0.0
      %v4525 = vrot.slane %v4524, 4
      %v4526 = vadd.f32 %v4524, %v4525
      %v4527 = vrot.slane %v4526, 2
      %v4528 = vadd.f32 %v4526, %v4527
      %v4529 = vrot.slane %v4528, 1
      %v4530 = vadd.f32 %v4528, %v4529
      %v4539 = vsel %vm4020, %v4488, %v4481
      %v4540 = vsel %vm4022, %v4495, %v4539
      %v4541 = vsel %vm4024, %v4502, %v4540
      %v4542 = vsel %vm4026, %v4509, %v4541
      %v4543 = vsel %vm4028, %v4516, %v4542
      %v4544 = vsel %vm4030, %v4523, %v4543
      %v4545 = vsel %vm4032, %v4530, %v4544
      %v4547 = vadd.f32 %v4457, %v4545
      %v4548 = vmul.f32 %v4547, %v4456
      %v4549 = vsel %vm3551, %v4227, %v4548
      %v4550 = vpack.c.bf16 %v4549, %v4549
      %v4555 = vunpack.c.l.b16 %v3437
      %v4556 = vunpack.c.l.b16 %v3438
      %v4557 = vunpack.c.l.b16 %v3439
      %v4558 = vunpack.c.l.b16 %v3440
      %v4559 = vpack.c.b16 %v4556, %v4555
      %v4560 = vpack.c.b16 %v4558, %v4557
      %v4564 = vsel %vm3461, %v4550, 0
      %4566 = vmatpush.bf16.msra.mxu0 0
      %4567 = vmatpush.bf16.msra.mxu0 0
      %4568 = vmatpush.bf16.msra.mxu0 0
      %4569 = vmatpush.bf16.msra.mxu0 0
      %4570 = vmatpush.bf16.msra.mxu0 0
      %4571 = vmatpush.bf16.msra.mxu0 0
      %4572 = vmatpush.bf16.msra.mxu0 %v4560
      %4573 = vmatpush.bf16.msra.mxu0 %v4559
      %4574 = vmatmul.bf16.gmra.mxu0 %v4564
      %v4575 = vpop.f32.mrf.mxu0
      %v4576 = vadd.f32 0.0, %v4575
      %v4577 = vpop.f32.mrf.mxu0
      %4578 = vdwg.mxu0
      %v4579 = vadd.f32 %v3417, %v4576
      %v4581 = vperm.slane %v3422, 0
      %v4583 = vadd.f32 %v4579, %v4581
      %v4584 = vsel %vm3461, %v4583, 0.0
      %4585 = vadd.xlane.f32.xlu0 %v4584
      %v4586 = vpop.xlane.xlu0 %4585
      %v4587 = vmul.f32 %v4586, %v3471
      %v4588 = vsub.f32 %v4583, %v4587
      %v4589 = vmul.f32 %v4588, %v4588
      %v4590 = vsel %vm3461, %v4589, 0.0
      %4591 = vadd.xlane.f32.xlu0 %v4590
      %v4592 = vpop.xlane.xlu0 %4591
      %v4593 = vmul.f32 %v4592, %v3471
      %v4594 = vadd.f32 %v4593, 1e-05
      %v4595 = vrsqrt.pop %v4594
      %v4596 = vmul.f32 %v4595, %v4594
      %v4597 = vmul.f32 %v4596, %v4595
      %v4598 = vmul.f32 0.5, %v4597
      %v4599 = vsub.f32 1.5, %v4598
      %v4600 = vmul.f32 %v4595, %v4599
      %vm4601 = vweird.f32 %v4594
      %vm4602 = vweird.f32 %v4595
      %vm4603 = vmor %vm4601, %vm4602
      %v4604 = vsel %vm4603, %v4595, %v4600
      %v4605 = vmul.f32 %v4588, %v4604
      %v4607 = vperm.slane %v3420, 0
      %v4609 = vmul.f32 %v4605, %v4607
      %v4611 = vperm.slane %v3421, 0
      %v4613 = vadd.f32 %v4609, %v4611
      %v4614 = vpack.c.bf16 %v4613, %v4613
      %v4616 = vperm.slane %v3423, 0
      %v4622 = vunpack.c.l.b16 %v3441
      %v4623 = vunpack.c.l.b16 %v3442
      %v4624 = vunpack.c.l.b16 %v3443
      %v4625 = vunpack.c.l.b16 %v3444
      %v4626 = vpack.c.b16 %v4623, %v4622
      %v4627 = vpack.c.b16 %v4625, %v4624
      %v4631 = vsel %vm3461, %v4614, 0
      %4633 = vmatpush.bf16.msra.mxu0 0
      %4634 = vmatpush.bf16.msra.mxu0 0
      %4635 = vmatpush.bf16.msra.mxu0 0
      %4636 = vmatpush.bf16.msra.mxu0 0
      %4637 = vmatpush.bf16.msra.mxu0 0
      %4638 = vmatpush.bf16.msra.mxu0 0
      %4639 = vmatpush.bf16.msra.mxu0 %v4627
      %4640 = vmatpush.bf16.msra.mxu0 %v4626
      %4641 = vmatmul.bf16.gmra.mxu0 %v4631
      %v4642 = vpop.f32.mrf.mxu0
      %v4643 = vadd.f32 %v4616, %v4642
      %v4644 = vpop.f32.mrf.mxu0
      %4645 = vdwg.mxu0
      %v4646 = vmax.f32 %v4643, 0.0
      %v4647 = vpack.c.bf16 %v4646, %v4646
      %v4664 = vunpack.c.l.b16 %v3445
      %v4665 = vunpack.c.l.b16 %v3446
      %v4666 = vunpack.c.l.b16 %v3447
      %v4667 = vunpack.c.l.b16 %v3448
      %v4668 = vunpack.c.l.b16 %v3449
      %v4669 = vunpack.c.l.b16 %v3450
      %v4670 = vunpack.c.l.b16 %v3451
      %v4671 = vunpack.c.l.b16 %v3452
      %v4672 = vunpack.c.l.b16 %v3453
      %v4673 = vunpack.c.l.b16 %v3454
      %v4674 = vunpack.c.l.b16 %v3455
      %v4675 = vunpack.c.l.b16 %v3456
      %v4676 = vunpack.c.l.b16 %v3457
      %v4677 = vunpack.c.l.b16 %v3458
      %v4678 = vunpack.c.l.b16 %v3459
      %v4679 = vunpack.c.l.b16 %v3460
      %v4680 = vpack.c.b16 %v4665, %v4664
      %v4681 = vpack.c.b16 %v4667, %v4666
      %v4682 = vpack.c.b16 %v4669, %v4668
      %v4683 = vpack.c.b16 %v4671, %v4670
      %v4684 = vpack.c.b16 %v4673, %v4672
      %v4685 = vpack.c.b16 %v4675, %v4674
      %v4686 = vpack.c.b16 %v4677, %v4676
      %v4687 = vpack.c.b16 %v4679, %v4678
      %4696 = vmatpush.bf16.msra.mxu0 %v4687
      %4697 = vmatpush.bf16.msra.mxu0 %v4686
      %4698 = vmatpush.bf16.msra.mxu0 %v4685
      %4699 = vmatpush.bf16.msra.mxu0 %v4684
      %4700 = vmatpush.bf16.msra.mxu0 %v4683
      %4701 = vmatpush.bf16.msra.mxu0 %v4682
      %4702 = vmatpush.bf16.msra.mxu0 %v4681
      %4703 = vmatpush.bf16.msra.mxu0 %v4680
      %4704 = vmatmul.bf16.gmra.mxu0 %v4647
      %v4705 = vpop.f32.mrf.mxu0
      %v4706 = vadd.f32 0.0, %v4705
      %v4707 = vpop.f32.mrf.mxu0
      %4708 = vdwg.mxu0
      %v4709 = vadd.f32 %v4583, %v4706
      %v4711 = vperm.slane %v3424, 0
      %v4713 = vadd.f32 %v4709, %v4711
      %s4714 = scalar_lea.vmem %s4, 1
      %v4715 = vld [vmem:[%s4714] sm:$0x1]
      %s4716 = scalar_lea.vmem %s5, 1
      %v4717 = vld [vmem:[%s4716] sm:$0x1]
      %s4718 = scalar_lea.vmem %s11, 1
      %v4719 = vld [vmem:[%s4718] sm:$0x1]
      %s4720 = scalar_lea.vmem %s12, 1
      %v4721 = vld [vmem:[%s4720] sm:$0x1]
      %s4722 = scalar_lea.vmem %s10, 1
      %v4723 = vld [vmem:[%s4722] sm:$0x1]
      %s4724 = scalar_lea.vmem %s14, 1
      %v4725 = vld [vmem:[%s4724] sm:$0x1]
      %s4726 = scalar_lea.vmem %s16, 1
      %v4727 = vld [vmem:[%s4726] sm:$0x1]
      %s4728 = scalar_lea.vmem %s6, 16
      %v4729 = vld [vmem:[%s4728] sm:$0xf]
      %v4730 = vld [vmem:[%s4728 + $0x4] sm:$0xf]
      %v4731 = vld [vmem:[%s4728 + $0x8] sm:$0xf]
      %v4732 = vld [vmem:[%s4728 + $0xc] sm:$0xf]
      %s4733 = scalar_lea.vmem %s7, 16
      %v4734 = vld [vmem:[%s4733] sm:$0xf]
      %v4735 = vld [vmem:[%s4733 + $0x4] sm:$0xf]
      %v4736 = vld [vmem:[%s4733 + $0x8] sm:$0xf]
      %v4737 = vld [vmem:[%s4733 + $0xc] sm:$0xf]
      %s4738 = scalar_lea.vmem %s8, 16
      %v4739 = vld [vmem:[%s4738] sm:$0xf]
      %v4740 = vld [vmem:[%s4738 + $0x4] sm:$0xf]
      %v4741 = vld [vmem:[%s4738 + $0x8] sm:$0xf]
      %v4742 = vld [vmem:[%s4738 + $0xc] sm:$0xf]
      %s4743 = scalar_lea.vmem %s9, 16
      %v4744 = vld [vmem:[%s4743] sm:$0xf]
      %v4745 = vld [vmem:[%s4743 + $0x4] sm:$0xf]
      %v4746 = vld [vmem:[%s4743 + $0x8] sm:$0xf]
      %v4747 = vld [vmem:[%s4743 + $0xc] sm:$0xf]
      %s4748 = scalar_lea.vmem %s13, 16
      %v4749 = vld [vmem:[%s4748] sm:$0xf]
      %v4750 = vld [vmem:[%s4748 + $0x4] sm:$0xf]
      %v4751 = vld [vmem:[%s4748 + $0x8] sm:$0xf]
      %v4752 = vld [vmem:[%s4748 + $0xc] sm:$0xf]
      %s4753 = scalar_lea.vmem %s15, 64
      %v4754 = vld [vmem:[%s4753] sm:$0xf]
      %v4755 = vld [vmem:[%s4753 + $0x4] sm:$0xf]
      %v4756 = vld [vmem:[%s4753 + $0x8] sm:$0xf]
      %v4757 = vld [vmem:[%s4753 + $0xc] sm:$0xf]
      %v4758 = vld [vmem:[%s4753 + $0x10] sm:$0xf]
      %v4759 = vld [vmem:[%s4753 + $0x14] sm:$0xf]
      %v4760 = vld [vmem:[%s4753 + $0x18] sm:$0xf]
      %v4761 = vld [vmem:[%s4753 + $0x1c] sm:$0xf]
      %v4762 = vld [vmem:[%s4753 + $0x20] sm:$0xf]
      %v4763 = vld [vmem:[%s4753 + $0x24] sm:$0xf]
      %v4764 = vld [vmem:[%s4753 + $0x28] sm:$0xf]
      %v4765 = vld [vmem:[%s4753 + $0x2c] sm:$0xf]
      %v4766 = vld [vmem:[%s4753 + $0x30] sm:$0xf]
      %v4767 = vld [vmem:[%s4753 + $0x34] sm:$0xf]
      %v4768 = vld [vmem:[%s4753 + $0x38] sm:$0xf]
      %v4769 = vld [vmem:[%s4753 + $0x3c] sm:$0xf]
      %v4770 = vsel %vm3461, %v4713, 0.0
      %4771 = vadd.xlane.f32.xlu0 %v4770
      %v4772 = vpop.xlane.xlu0 %4771
      %v4773 = vmul.f32 %v4772, %v3471
      %v4774 = vsub.f32 %v4713, %v4773
      %v4775 = vmul.f32 %v4774, %v4774
      %v4776 = vsel %vm3461, %v4775, 0.0
      %4777 = vadd.xlane.f32.xlu0 %v4776
      %v4778 = vpop.xlane.xlu0 %4777
      %v4779 = vmul.f32 %v4778, %v3471
      %v4780 = vadd.f32 %v4779, 1e-05
      %v4781 = vrsqrt.pop %v4780
      %v4782 = vmul.f32 %v4781, %v4780
      %v4783 = vmul.f32 %v4782, %v4781
      %v4784 = vmul.f32 0.5, %v4783
      %v4785 = vsub.f32 1.5, %v4784
      %v4786 = vmul.f32 %v4781, %v4785
      %vm4787 = vweird.f32 %v4780
      %vm4788 = vweird.f32 %v4781
      %vm4789 = vmor %vm4787, %vm4788
      %v4790 = vsel %vm4789, %v4781, %v4786
      %v4791 = vmul.f32 %v4774, %v4790
      %v4793 = vperm.slane %v4715, 0
      %v4795 = vmul.f32 %v4791, %v4793
      %v4797 = vperm.slane %v4717, 0
      %v4799 = vadd.f32 %v4795, %v4797
      %v4800 = vpack.c.bf16 %v4713, %v4713
      %v4801 = vpack.c.bf16 %v4799, %v4799
      %v4806 = vunpack.c.l.b16 %v4729
      %v4807 = vunpack.c.l.b16 %v4730
      %v4808 = vunpack.c.l.b16 %v4731
      %v4809 = vunpack.c.l.b16 %v4732
      %v4810 = vpack.c.b16 %v4807, %v4806
      %v4811 = vpack.c.b16 %v4809, %v4808
      %v4815 = vsel %vm3461, %v4801, 0
      %4817 = vmatpush.bf16.msra.mxu0 0
      %4818 = vmatpush.bf16.msra.mxu0 0
      %4819 = vmatpush.bf16.msra.mxu0 0
      %4820 = vmatpush.bf16.msra.mxu0 0
      %4821 = vmatpush.bf16.msra.mxu0 0
      %4822 = vmatpush.bf16.msra.mxu0 0
      %4823 = vmatpush.bf16.msra.mxu0 %v4811
      %4824 = vmatpush.bf16.msra.mxu0 %v4810
      %4825 = vmatmul.bf16.gmra.mxu0 %v4815
      %v4826 = vpop.f32.mrf.mxu0
      %v4827 = vadd.f32 0.0, %v4826
      %v4828 = vpop.f32.mrf.mxu0
      %4829 = vdwg.mxu0
      %v4830 = vmul.f32 %v4827, %v785
      %v4831 = vmul.f32 %v4827, %v3532
      %4833 = vrot.lane.b32.xlu0 %v4831, 112
      %v4834 = vpop.permute.xlu0 %4833
      %v4836 = vsub.f32 %v4830, %v4834
      %v4837 = vmul.f32 %v4827, %v3542
      %v4838 = vmul.f32 %v4827, %v940
      %4840 = vrot.lane.b32.xlu0 %v4838, 16
      %v4841 = vpop.permute.xlu0 %4840
      %v4843 = vadd.f32 %v4837, %v4841
      %v4844 = vsel %vm3551, %v4836, %v4843
      %v4849 = vunpack.c.l.b16 %v4734
      %v4850 = vunpack.c.l.b16 %v4735
      %v4851 = vunpack.c.l.b16 %v4736
      %v4852 = vunpack.c.l.b16 %v4737
      %v4853 = vpack.c.b16 %v4850, %v4849
      %v4854 = vpack.c.b16 %v4852, %v4851
      %v4858 = vsel %vm3461, %v4800, 0
      %4860 = vmatpush.bf16.msra.mxu0 0
      %4861 = vmatpush.bf16.msra.mxu0 0
      %4862 = vmatpush.bf16.msra.mxu0 0
      %4863 = vmatpush.bf16.msra.mxu0 0
      %4864 = vmatpush.bf16.msra.mxu0 0
      %4865 = vmatpush.bf16.msra.mxu0 0
      %4866 = vmatpush.bf16.msra.mxu0 %v4854
      %4867 = vmatpush.bf16.msra.mxu0 %v4853
      %4868 = vmatmul.bf16.gmra.mxu0 %v4858
      %v4869 = vpop.f32.mrf.mxu0
      %v4870 = vadd.f32 0.0, %v4869
      %v4871 = vpop.f32.mrf.mxu0
      %4872 = vdwg.mxu0
      %v4873 = vmul.f32 %v4870, %v785
      %v4874 = vmul.f32 %v4870, %v3532
      %4876 = vrot.lane.b32.xlu0 %v4874, 112
      %v4877 = vpop.permute.xlu0 %4876
      %v4879 = vsub.f32 %v4873, %v4877
      %v4880 = vmul.f32 %v4870, %v3542
      %v4881 = vmul.f32 %v4870, %v940
      %4883 = vrot.lane.b32.xlu0 %v4881, 16
      %v4884 = vpop.permute.xlu0 %4883
      %v4886 = vadd.f32 %v4880, %v4884
      %v4887 = vsel %vm3551, %v4879, %v4886
      %v4892 = vunpack.c.l.b16 %v4739
      %v4893 = vunpack.c.l.b16 %v4740
      %v4894 = vunpack.c.l.b16 %v4741
      %v4895 = vunpack.c.l.b16 %v4742
      %v4896 = vpack.c.b16 %v4893, %v4892
      %v4897 = vpack.c.b16 %v4895, %v4894
      %4900 = vmatpush.bf16.msra.mxu0 0
      %4901 = vmatpush.bf16.msra.mxu0 0
      %4902 = vmatpush.bf16.msra.mxu0 0
      %4903 = vmatpush.bf16.msra.mxu0 0
      %4904 = vmatpush.bf16.msra.mxu0 0
      %4905 = vmatpush.bf16.msra.mxu0 0
      %4906 = vmatpush.bf16.msra.mxu0 %v4897
      %4907 = vmatpush.bf16.msra.mxu0 %v4896
      %4908 = vmatmul.bf16.gmra.mxu0 %v4858
      %v4909 = vpop.f32.mrf.mxu0
      %v4910 = vadd.f32 0.0, %v4909
      %v4911 = vpop.f32.mrf.mxu0
      %4912 = vdwg.mxu0
      %4913 = vmatpush.bf16.msra.mxu0 0
      %4914 = vmatpush.bf16.msra.mxu0 0
      %4915 = vmatpush.bf16.msra.mxu0 0
      %4916 = vmatpush.bf16.msra.mxu0 0
      %4917 = vmatpush.bf16.msra.mxu0 0
      %4918 = vmatpush.bf16.msra.mxu0 0
      %4919 = vmatpush.bf16.msra.mxu0 %v4854
      %4920 = vmatpush.bf16.msra.mxu0 %v4853
      %4921 = vmatmul.bf16.gmra.mxu0 %v3642
      %v4922 = vpop.f32.mrf.mxu0
      %v4923 = vadd.f32 0.0, %v4922
      %v4924 = vpop.f32.mrf.mxu0
      %v4925 = vadd.f32 0.0, %v4924
      %4926 = vmatmul.bf16.gmra.mxu0 %v3645
      %v4927 = vpop.f32.mrf.mxu0
      %v4928 = vadd.f32 0.0, %v4927
      %v4929 = vpop.f32.mrf.mxu0
      %v4930 = vadd.f32 0.0, %v4929
      %4931 = vmatmul.bf16.gmra.mxu0 %v3648
      %v4932 = vpop.f32.mrf.mxu0
      %v4933 = vadd.f32 0.0, %v4932
      %v4934 = vpop.f32.mrf.mxu0
      %v4935 = vadd.f32 0.0, %v4934
      %4936 = vmatmul.bf16.gmra.mxu0 %v3651
      %v4937 = vpop.f32.mrf.mxu0
      %v4938 = vadd.f32 0.0, %v4937
      %v4939 = vpop.f32.mrf.mxu0
      %v4940 = vadd.f32 0.0, %v4939
      %4941 = vdwg.mxu0
      %v4942 = vmul.f32 %v4923, %v1094
      %v4943 = vmul.f32 %v4925, %v1248
      %v4944 = vmul.f32 %v4928, %v1402
      %v4945 = vmul.f32 %v4930, %v1556
      %v4946 = vmul.f32 %v4933, %v1710
      %v4947 = vmul.f32 %v4935, %v1864
      %v4948 = vmul.f32 %v4938, %v2018
      %v4949 = vmul.f32 %v4940, %v2172
      %v4950 = vmul.f32 %v4923, %v3699
      %v4951 = vmul.f32 %v4925, %v3701
      %v4952 = vmul.f32 %v4928, %v3703
      %v4953 = vmul.f32 %v4930, %v3705
      %v4954 = vmul.f32 %v4933, %v3707
      %v4955 = vmul.f32 %v4935, %v3709
      %v4956 = vmul.f32 %v4938, %v3711
      %v4957 = vmul.f32 %v4940, %v3713
      %4966 = vrot.lane.b32.xlu0 %v4950, 112
      %v4967 = vpop.permute.xlu0 %4966
      %4968 = vrot.lane.b32.xlu0 %v4951, 112
      %v4969 = vpop.permute.xlu0 %4968
      %4970 = vrot.lane.b32.xlu0 %v4952, 112
      %v4971 = vpop.permute.xlu0 %4970
      %4972 = vrot.lane.b32.xlu0 %v4953, 112
      %v4973 = vpop.permute.xlu0 %4972
      %4974 = vrot.lane.b32.xlu0 %v4954, 112
      %v4975 = vpop.permute.xlu0 %4974
      %4976 = vrot.lane.b32.xlu0 %v4955, 112
      %v4977 = vpop.permute.xlu0 %4976
      %4978 = vrot.lane.b32.xlu0 %v4956, 112
      %v4979 = vpop.permute.xlu0 %4978
      %4980 = vrot.lane.b32.xlu0 %v4957, 112
      %v4981 = vpop.permute.xlu0 %4980
      %v4990 = vsub.f32 %v4942, %v4967
      %v4991 = vsub.f32 %v4943, %v4969
      %v4992 = vsub.f32 %v4944, %v4971
      %v4993 = vsub.f32 %v4945, %v4973
      %v4994 = vsub.f32 %v4946, %v4975
      %v4995 = vsub.f32 %v4947, %v4977
      %v4996 = vsub.f32 %v4948, %v4979
      %v4997 = vsub.f32 %v4949, %v4981
      %v4998 = vmul.f32 %v4923, %v3779
      %v4999 = vmul.f32 %v4925, %v3781
      %v5000 = vmul.f32 %v4928, %v3783
      %v5001 = vmul.f32 %v4930, %v3785
      %v5002 = vmul.f32 %v4933, %v3787
      %v5003 = vmul.f32 %v4935, %v3789
      %v5004 = vmul.f32 %v4938, %v3791
      %v5005 = vmul.f32 %v4940, %v3793
      %v5006 = vmul.f32 %v4923, %v2327
      %v5007 = vmul.f32 %v4925, %v2482
      %v5008 = vmul.f32 %v4928, %v2637
      %v5009 = vmul.f32 %v4930, %v2792
      %v5010 = vmul.f32 %v4933, %v2947
      %v5011 = vmul.f32 %v4935, %v3102
      %v5012 = vmul.f32 %v4938, %v3257
      %v5013 = vmul.f32 %v4940, %v3412
      %5022 = vrot.lane.b32.xlu0 %v5006, 16
      %v5023 = vpop.permute.xlu0 %5022
      %5024 = vrot.lane.b32.xlu0 %v5007, 16
      %v5025 = vpop.permute.xlu0 %5024
      %5026 = vrot.lane.b32.xlu0 %v5008, 16
      %v5027 = vpop.permute.xlu0 %5026
      %5028 = vrot.lane.b32.xlu0 %v5009, 16
      %v5029 = vpop.permute.xlu0 %5028
      %5030 = vrot.lane.b32.xlu0 %v5010, 16
      %v5031 = vpop.permute.xlu0 %5030
      %5032 = vrot.lane.b32.xlu0 %v5011, 16
      %v5033 = vpop.permute.xlu0 %5032
      %5034 = vrot.lane.b32.xlu0 %v5012, 16
      %v5035 = vpop.permute.xlu0 %5034
      %5036 = vrot.lane.b32.xlu0 %v5013, 16
      %v5037 = vpop.permute.xlu0 %5036
      %v5046 = vadd.f32 %v4998, %v5023
      %v5047 = vadd.f32 %v4999, %v5025
      %v5048 = vadd.f32 %v5000, %v5027
      %v5049 = vadd.f32 %v5001, %v5029
      %v5050 = vadd.f32 %v5002, %v5031
      %v5051 = vadd.f32 %v5003, %v5033
      %v5052 = vadd.f32 %v5004, %v5035
      %v5053 = vadd.f32 %v5005, %v5037
      %v5054 = vsel %vm3551, %v4990, %v5046
      %v5055 = vsel %vm3551, %v4991, %v5047
      %v5056 = vsel %vm3551, %v4992, %v5048
      %v5057 = vsel %vm3551, %v4993, %v5049
      %v5058 = vsel %vm3551, %v4994, %v5050
      %v5059 = vsel %vm3551, %v4995, %v5051
      %v5060 = vsel %vm3551, %v4996, %v5052
      %v5061 = vsel %vm3551, %v4997, %v5053
      %5062 = vmatpush.bf16.msra.mxu0 0
      %5063 = vmatpush.bf16.msra.mxu0 0
      %5064 = vmatpush.bf16.msra.mxu0 0
      %5065 = vmatpush.bf16.msra.mxu0 0
      %5066 = vmatpush.bf16.msra.mxu0 0
      %5067 = vmatpush.bf16.msra.mxu0 0
      %5068 = vmatpush.bf16.msra.mxu0 %v4897
      %5069 = vmatpush.bf16.msra.mxu0 %v4896
      %5070 = vmatmul.bf16.gmra.mxu0 %v3642
      %v5071 = vpop.f32.mrf.mxu0
      %v5072 = vadd.f32 0.0, %v5071
      %v5073 = vpop.f32.mrf.mxu0
      %v5074 = vadd.f32 0.0, %v5073
      %5075 = vmatmul.bf16.gmra.mxu0 %v3645
      %v5076 = vpop.f32.mrf.mxu0
      %v5077 = vadd.f32 0.0, %v5076
      %v5078 = vpop.f32.mrf.mxu0
      %v5079 = vadd.f32 0.0, %v5078
      %5080 = vmatmul.bf16.gmra.mxu0 %v3648
      %v5081 = vpop.f32.mrf.mxu0
      %v5082 = vadd.f32 0.0, %v5081
      %v5083 = vpop.f32.mrf.mxu0
      %v5084 = vadd.f32 0.0, %v5083
      %5085 = vmatmul.bf16.gmra.mxu0 %v3651
      %v5086 = vpop.f32.mrf.mxu0
      %v5087 = vadd.f32 0.0, %v5086
      %v5088 = vpop.f32.mrf.mxu0
      %v5089 = vadd.f32 0.0, %v5088
      %5090 = vdwg.mxu0
      %v5091 = vmul.f32 %v4844, %v4887
      %v5092 = vsel %vm3551, %v5091, 0.0
      %5093 = vadd.xlane.f32.xlu0 %v5092
      %v5094 = vpop.xlane.xlu0 %5093
      %v5095 = vmul.f32 %v5094, 0.25
      %v5097 = vrot.slane %v4844, 1
      %v5098 = vrot.slane %v4844, 2
      %v5099 = vrot.slane %v4844, 3
      %v5100 = vrot.slane %v4844, 4
      %v5101 = vrot.slane %v4844, 5
      %v5102 = vrot.slane %v4844, 6
      %v5103 = vrot.slane %v4844, 7
      %v5104 = vperm.slane %v4844, 0
      %v5105 = vperm.slane %v5097, 0
      %v5106 = vperm.slane %v5098, 0
      %v5107 = vperm.slane %v5099, 0
      %v5108 = vperm.slane %v5100, 0
      %v5109 = vperm.slane %v5101, 0
      %v5110 = vperm.slane %v5102, 0
      %v5111 = vperm.slane %v5103, 0
      %v5120 = vmul.f32 %v5104, %v5054
      %v5121 = vmul.f32 %v5105, %v5055
      %v5122 = vmul.f32 %v5106, %v5056
      %v5123 = vmul.f32 %v5107, %v5057
      %v5124 = vmul.f32 %v5108, %v5058
      %v5125 = vmul.f32 %v5109, %v5059
      %v5126 = vmul.f32 %v5110, %v5060
      %v5127 = vmul.f32 %v5111, %v5061
      %v5128 = vsel %vm3551, %v5120, 0.0
      %5129 = vadd.xlane.f32.xlu0 %v5128
      %v5130 = vpop.xlane.xlu0 %5129
      %v5131 = vsel %vm3551, %v5121, 0.0
      %5132 = vadd.xlane.f32.xlu0 %v5131
      %v5133 = vpop.xlane.xlu0 %5132
      %v5134 = vsel %vm3551, %v5122, 0.0
      %5135 = vadd.xlane.f32.xlu0 %v5134
      %v5136 = vpop.xlane.xlu0 %5135
      %v5137 = vsel %vm3551, %v5123, 0.0
      %5138 = vadd.xlane.f32.xlu0 %v5137
      %v5139 = vpop.xlane.xlu0 %5138
      %v5140 = vsel %vm3551, %v5124, 0.0
      %5141 = vadd.xlane.f32.xlu0 %v5140
      %v5142 = vpop.xlane.xlu0 %5141
      %v5143 = vsel %vm3551, %v5125, 0.0
      %5144 = vadd.xlane.f32.xlu0 %v5143
      %v5145 = vpop.xlane.xlu0 %5144
      %v5146 = vsel %vm3551, %v5126, 0.0
      %5147 = vadd.xlane.f32.xlu0 %v5146
      %v5148 = vpop.xlane.xlu0 %5147
      %v5149 = vsel %vm3551, %v5127, 0.0
      %5150 = vadd.xlane.f32.xlu0 %v5149
      %v5151 = vpop.xlane.xlu0 %5150
      %v5152 = vmul.f32 %v5130, 0.25
      %v5153 = vmul.f32 %v5133, 0.25
      %v5154 = vmul.f32 %v5136, 0.25
      %v5155 = vmul.f32 %v5139, 0.25
      %v5156 = vmul.f32 %v5142, 0.25
      %v5157 = vmul.f32 %v5145, 0.25
      %v5158 = vmul.f32 %v5148, 0.25
      %v5159 = vmul.f32 %v5151, 0.25
      %v5160 = vadd.f32 %v5152, %v3970
      %v5161 = vadd.f32 %v5153, %v3970
      %v5162 = vadd.f32 %v5154, %v3970
      %v5163 = vadd.f32 %v5155, %v3970
      %v5164 = vadd.f32 %v5156, %v3970
      %v5165 = vadd.f32 %v5157, %v3970
      %v5166 = vadd.f32 %v5158, %v3970
      %v5167 = vadd.f32 %v5159, %v3970
      %5176 = vset.pattern.permute.xlu0 0
      %5177 = vperm.xlu0 %5176, %v5160
      %v5178 = vpop.permute.xlu0 %5177
      %5179 = vset.pattern.permute.xlu0 0
      %5180 = vperm.xlu0 %5179, %v5161
      %v5181 = vpop.permute.xlu0 %5180
      %5182 = vset.pattern.permute.xlu0 0
      %5183 = vperm.xlu0 %5182, %v5162
      %v5184 = vpop.permute.xlu0 %5183
      %5185 = vset.pattern.permute.xlu0 0
      %5186 = vperm.xlu0 %5185, %v5163
      %v5187 = vpop.permute.xlu0 %5186
      %5188 = vset.pattern.permute.xlu0 0
      %5189 = vperm.xlu0 %5188, %v5164
      %v5190 = vpop.permute.xlu0 %5189
      %5191 = vset.pattern.permute.xlu0 0
      %5192 = vperm.xlu0 %5191, %v5165
      %v5193 = vpop.permute.xlu0 %5192
      %5194 = vset.pattern.permute.xlu0 0
      %5195 = vperm.xlu0 %5194, %v5166
      %v5196 = vpop.permute.xlu0 %5195
      %5197 = vset.pattern.permute.xlu0 0
      %5198 = vperm.xlu0 %5197, %v5167
      %v5199 = vpop.permute.xlu0 %5198
      %v5200 = vperm.slane %v5178, %v3414
      %v5201 = vperm.slane %v5181, %v3414
      %v5202 = vperm.slane %v5184, %v3414
      %v5203 = vperm.slane %v5187, %v3414
      %v5204 = vperm.slane %v5190, %v3414
      %v5205 = vperm.slane %v5193, %v3414
      %v5206 = vperm.slane %v5196, %v3414
      %v5207 = vperm.slane %v5199, %v3414
      %v5208 = vsel %vm4020, %v5201, %v5200
      %v5209 = vsel %vm4022, %v5202, %v5208
      %v5210 = vsel %vm4024, %v5203, %v5209
      %v5211 = vsel %vm4026, %v5204, %v5210
      %v5212 = vsel %vm4028, %v5205, %v5211
      %v5213 = vsel %vm4030, %v5206, %v5212
      %v5214 = vsel %vm4032, %v5207, %v5213
      %v5216 = vsel %vm4035, %v5214, -inf
      %5217 = vmax.xlane.f32.xlu0 %v5216
      %v5218 = vpop.xlane.xlu0 %5217
      %v5219 = vmax.f32 %v5218, %v5095
      %v5220 = vsub.f32 %v5095, %v5219
      %v5221 = vmul.f32 %v5220, 1.442695
      %v5222 = vpow.pop %v5221
      %v5224 = vperm.slane %v5219, 0
      %v5225 = vperm.slane %v5219, 1
      %v5226 = vperm.slane %v5219, 2
      %v5227 = vperm.slane %v5219, 3
      %v5228 = vperm.slane %v5219, 4
      %v5229 = vperm.slane %v5219, 5
      %v5230 = vperm.slane %v5219, 6
      %v5231 = vperm.slane %v5219, 7
      %v5240 = vsub.f32 %v5160, %v5224
      %v5241 = vsub.f32 %v5161, %v5225
      %v5242 = vsub.f32 %v5162, %v5226
      %v5243 = vsub.f32 %v5163, %v5227
      %v5244 = vsub.f32 %v5164, %v5228
      %v5245 = vsub.f32 %v5165, %v5229
      %v5246 = vsub.f32 %v5166, %v5230
      %v5247 = vsub.f32 %v5167, %v5231
      %v5248 = vmul.f32 %v5240, 1.442695
      %v5249 = vpow.pop %v5248
      %v5250 = vmul.f32 %v5241, 1.442695
      %v5251 = vpow.pop %v5250
      %v5252 = vmul.f32 %v5242, 1.442695
      %v5253 = vpow.pop %v5252
      %v5254 = vmul.f32 %v5243, 1.442695
      %v5255 = vpow.pop %v5254
      %v5256 = vmul.f32 %v5244, 1.442695
      %v5257 = vpow.pop %v5256
      %v5258 = vmul.f32 %v5245, 1.442695
      %v5259 = vpow.pop %v5258
      %v5260 = vmul.f32 %v5246, 1.442695
      %v5261 = vpow.pop %v5260
      %v5262 = vmul.f32 %v5247, 1.442695
      %v5263 = vpow.pop %v5262
      %5272 = vset.pattern.permute.xlu0 0
      %5273 = vperm.xlu0 %5272, %v5249
      %v5274 = vpop.permute.xlu0 %5273
      %5275 = vset.pattern.permute.xlu0 0
      %5276 = vperm.xlu0 %5275, %v5251
      %v5277 = vpop.permute.xlu0 %5276
      %5278 = vset.pattern.permute.xlu0 0
      %5279 = vperm.xlu0 %5278, %v5253
      %v5280 = vpop.permute.xlu0 %5279
      %5281 = vset.pattern.permute.xlu0 0
      %5282 = vperm.xlu0 %5281, %v5255
      %v5283 = vpop.permute.xlu0 %5282
      %5284 = vset.pattern.permute.xlu0 0
      %5285 = vperm.xlu0 %5284, %v5257
      %v5286 = vpop.permute.xlu0 %5285
      %5287 = vset.pattern.permute.xlu0 0
      %5288 = vperm.xlu0 %5287, %v5259
      %v5289 = vpop.permute.xlu0 %5288
      %5290 = vset.pattern.permute.xlu0 0
      %5291 = vperm.xlu0 %5290, %v5261
      %v5292 = vpop.permute.xlu0 %5291
      %5293 = vset.pattern.permute.xlu0 0
      %5294 = vperm.xlu0 %5293, %v5263
      %v5295 = vpop.permute.xlu0 %5294
      %v5296 = vperm.slane %v5274, %v3414
      %v5297 = vperm.slane %v5277, %v3414
      %v5298 = vperm.slane %v5280, %v3414
      %v5299 = vperm.slane %v5283, %v3414
      %v5300 = vperm.slane %v5286, %v3414
      %v5301 = vperm.slane %v5289, %v3414
      %v5302 = vperm.slane %v5292, %v3414
      %v5303 = vperm.slane %v5295, %v3414
      %v5304 = vsel %vm4020, %v5297, %v5296
      %v5305 = vsel %vm4022, %v5298, %v5304
      %v5306 = vsel %vm4024, %v5299, %v5305
      %v5307 = vsel %vm4026, %v5300, %v5306
      %v5308 = vsel %vm4028, %v5301, %v5307
      %v5309 = vsel %vm4030, %v5302, %v5308
      %v5310 = vsel %vm4032, %v5303, %v5309
      %v5312 = vsel %vm4035, %v5310, 0.0
      %5313 = vadd.xlane.f32.xlu0 %v5312
      %v5314 = vpop.xlane.xlu0 %5313
      %v5315 = vadd.f32 %v5222, %v5314
      %v5316 = vrcp.pop %v5315
      %v5317 = vmul.f32 %v5222, %v4910
      %v5326 = vmul.f32 %v5274, %v5072
      %v5327 = vmul.f32 %v5277, %v5074
      %v5328 = vmul.f32 %v5280, %v5077
      %v5329 = vmul.f32 %v5283, %v5079
      %v5330 = vmul.f32 %v5286, %v5082
      %v5331 = vmul.f32 %v5289, %v5084
      %v5332 = vmul.f32 %v5292, %v5087
      %v5333 = vmul.f32 %v5295, %v5089
      %v5334 = vsel %vm3551, %v5326, 0.0
      %v5335 = vrot.slane %v5334, 4
      %v5336 = vadd.f32 %v5334, %v5335
      %v5337 = vrot.slane %v5336, 2
      %v5338 = vadd.f32 %v5336, %v5337
      %v5339 = vrot.slane %v5338, 1
      %v5340 = vadd.f32 %v5338, %v5339
      %v5341 = vsel %vm3551, %v5327, 0.0
      %v5342 = vrot.slane %v5341, 4
      %v5343 = vadd.f32 %v5341, %v5342
      %v5344 = vrot.slane %v5343, 2
      %v5345 = vadd.f32 %v5343, %v5344
      %v5346 = vrot.slane %v5345, 1
      %v5347 = vadd.f32 %v5345, %v5346
      %v5348 = vsel %vm3551, %v5328, 0.0
      %v5349 = vrot.slane %v5348, 4
      %v5350 = vadd.f32 %v5348, %v5349
      %v5351 = vrot.slane %v5350, 2
      %v5352 = vadd.f32 %v5350, %v5351
      %v5353 = vrot.slane %v5352, 1
      %v5354 = vadd.f32 %v5352, %v5353
      %v5355 = vsel %vm3551, %v5329, 0.0
      %v5356 = vrot.slane %v5355, 4
      %v5357 = vadd.f32 %v5355, %v5356
      %v5358 = vrot.slane %v5357, 2
      %v5359 = vadd.f32 %v5357, %v5358
      %v5360 = vrot.slane %v5359, 1
      %v5361 = vadd.f32 %v5359, %v5360
      %v5362 = vsel %vm3551, %v5330, 0.0
      %v5363 = vrot.slane %v5362, 4
      %v5364 = vadd.f32 %v5362, %v5363
      %v5365 = vrot.slane %v5364, 2
      %v5366 = vadd.f32 %v5364, %v5365
      %v5367 = vrot.slane %v5366, 1
      %v5368 = vadd.f32 %v5366, %v5367
      %v5369 = vsel %vm3551, %v5331, 0.0
      %v5370 = vrot.slane %v5369, 4
      %v5371 = vadd.f32 %v5369, %v5370
      %v5372 = vrot.slane %v5371, 2
      %v5373 = vadd.f32 %v5371, %v5372
      %v5374 = vrot.slane %v5373, 1
      %v5375 = vadd.f32 %v5373, %v5374
      %v5376 = vsel %vm3551, %v5332, 0.0
      %v5377 = vrot.slane %v5376, 4
      %v5378 = vadd.f32 %v5376, %v5377
      %v5379 = vrot.slane %v5378, 2
      %v5380 = vadd.f32 %v5378, %v5379
      %v5381 = vrot.slane %v5380, 1
      %v5382 = vadd.f32 %v5380, %v5381
      %v5383 = vsel %vm3551, %v5333, 0.0
      %v5384 = vrot.slane %v5383, 4
      %v5385 = vadd.f32 %v5383, %v5384
      %v5386 = vrot.slane %v5385, 2
      %v5387 = vadd.f32 %v5385, %v5386
      %v5388 = vrot.slane %v5387, 1
      %v5389 = vadd.f32 %v5387, %v5388
      %v5398 = vsel %vm4020, %v5347, %v5340
      %v5399 = vsel %vm4022, %v5354, %v5398
      %v5400 = vsel %vm4024, %v5361, %v5399
      %v5401 = vsel %vm4026, %v5368, %v5400
      %v5402 = vsel %vm4028, %v5375, %v5401
      %v5403 = vsel %vm4030, %v5382, %v5402
      %v5404 = vsel %vm4032, %v5389, %v5403
      %v5406 = vadd.f32 %v5317, %v5404
      %v5407 = vmul.f32 %v5406, %v5316
      %5409 = vrot.lane.b32.xlu0 %v5091, 112
      %v5410 = vpop.permute.xlu0 %5409
      %v5412 = vsel %vm3551, %v5410, 0.0
      %5413 = vadd.xlane.f32.xlu0 %v5412
      %v5414 = vpop.xlane.xlu0 %5413
      %v5415 = vmul.f32 %v5414, 0.25
      %5424 = vrot.lane.b32.xlu0 %v5120, 112
      %v5425 = vpop.permute.xlu0 %5424
      %5426 = vrot.lane.b32.xlu0 %v5121, 112
      %v5427 = vpop.permute.xlu0 %5426
      %5428 = vrot.lane.b32.xlu0 %v5122, 112
      %v5429 = vpop.permute.xlu0 %5428
      %5430 = vrot.lane.b32.xlu0 %v5123, 112
      %v5431 = vpop.permute.xlu0 %5430
      %5432 = vrot.lane.b32.xlu0 %v5124, 112
      %v5433 = vpop.permute.xlu0 %5432
      %5434 = vrot.lane.b32.xlu0 %v5125, 112
      %v5435 = vpop.permute.xlu0 %5434
      %5436 = vrot.lane.b32.xlu0 %v5126, 112
      %v5437 = vpop.permute.xlu0 %5436
      %5438 = vrot.lane.b32.xlu0 %v5127, 112
      %v5439 = vpop.permute.xlu0 %5438
      %v5448 = vsel %vm3551, %v5425, 0.0
      %5449 = vadd.xlane.f32.xlu0 %v5448
      %v5450 = vpop.xlane.xlu0 %5449
      %v5451 = vsel %vm3551, %v5427, 0.0
      %5452 = vadd.xlane.f32.xlu0 %v5451
      %v5453 = vpop.xlane.xlu0 %5452
      %v5454 = vsel %vm3551, %v5429, 0.0
      %5455 = vadd.xlane.f32.xlu0 %v5454
      %v5456 = vpop.xlane.xlu0 %5455
      %v5457 = vsel %vm3551, %v5431, 0.0
      %5458 = vadd.xlane.f32.xlu0 %v5457
      %v5459 = vpop.xlane.xlu0 %5458
      %v5460 = vsel %vm3551, %v5433, 0.0
      %5461 = vadd.xlane.f32.xlu0 %v5460
      %v5462 = vpop.xlane.xlu0 %5461
      %v5463 = vsel %vm3551, %v5435, 0.0
      %5464 = vadd.xlane.f32.xlu0 %v5463
      %v5465 = vpop.xlane.xlu0 %5464
      %v5466 = vsel %vm3551, %v5437, 0.0
      %5467 = vadd.xlane.f32.xlu0 %v5466
      %v5468 = vpop.xlane.xlu0 %5467
      %v5469 = vsel %vm3551, %v5439, 0.0
      %5470 = vadd.xlane.f32.xlu0 %v5469
      %v5471 = vpop.xlane.xlu0 %5470
      %v5472 = vmul.f32 %v5450, 0.25
      %v5473 = vmul.f32 %v5453, 0.25
      %v5474 = vmul.f32 %v5456, 0.25
      %v5475 = vmul.f32 %v5459, 0.25
      %v5476 = vmul.f32 %v5462, 0.25
      %v5477 = vmul.f32 %v5465, 0.25
      %v5478 = vmul.f32 %v5468, 0.25
      %v5479 = vmul.f32 %v5471, 0.25
      %v5480 = vadd.f32 %v5472, %v3970
      %v5481 = vadd.f32 %v5473, %v3970
      %v5482 = vadd.f32 %v5474, %v3970
      %v5483 = vadd.f32 %v5475, %v3970
      %v5484 = vadd.f32 %v5476, %v3970
      %v5485 = vadd.f32 %v5477, %v3970
      %v5486 = vadd.f32 %v5478, %v3970
      %v5487 = vadd.f32 %v5479, %v3970
      %5496 = vset.pattern.permute.xlu0 0
      %5497 = vperm.xlu0 %5496, %v5480
      %v5498 = vpop.permute.xlu0 %5497
      %5499 = vset.pattern.permute.xlu0 0
      %5500 = vperm.xlu0 %5499, %v5481
      %v5501 = vpop.permute.xlu0 %5500
      %5502 = vset.pattern.permute.xlu0 0
      %5503 = vperm.xlu0 %5502, %v5482
      %v5504 = vpop.permute.xlu0 %5503
      %5505 = vset.pattern.permute.xlu0 0
      %5506 = vperm.xlu0 %5505, %v5483
      %v5507 = vpop.permute.xlu0 %5506
      %5508 = vset.pattern.permute.xlu0 0
      %5509 = vperm.xlu0 %5508, %v5484
      %v5510 = vpop.permute.xlu0 %5509
      %5511 = vset.pattern.permute.xlu0 0
      %5512 = vperm.xlu0 %5511, %v5485
      %v5513 = vpop.permute.xlu0 %5512
      %5514 = vset.pattern.permute.xlu0 0
      %5515 = vperm.xlu0 %5514, %v5486
      %v5516 = vpop.permute.xlu0 %5515
      %5517 = vset.pattern.permute.xlu0 0
      %5518 = vperm.xlu0 %5517, %v5487
      %v5519 = vpop.permute.xlu0 %5518
      %v5520 = vperm.slane %v5498, %v3414
      %v5521 = vperm.slane %v5501, %v3414
      %v5522 = vperm.slane %v5504, %v3414
      %v5523 = vperm.slane %v5507, %v3414
      %v5524 = vperm.slane %v5510, %v3414
      %v5525 = vperm.slane %v5513, %v3414
      %v5526 = vperm.slane %v5516, %v3414
      %v5527 = vperm.slane %v5519, %v3414
      %v5528 = vsel %vm4020, %v5521, %v5520
      %v5529 = vsel %vm4022, %v5522, %v5528
      %v5530 = vsel %vm4024, %v5523, %v5529
      %v5531 = vsel %vm4026, %v5524, %v5530
      %v5532 = vsel %vm4028, %v5525, %v5531
      %v5533 = vsel %vm4030, %v5526, %v5532
      %v5534 = vsel %vm4032, %v5527, %v5533
      %v5536 = vsel %vm4035, %v5534, -inf
      %5537 = vmax.xlane.f32.xlu0 %v5536
      %v5538 = vpop.xlane.xlu0 %5537
      %v5539 = vmax.f32 %v5538, %v5415
      %v5540 = vsub.f32 %v5415, %v5539
      %v5541 = vmul.f32 %v5540, 1.442695
      %v5542 = vpow.pop %v5541
      %v5544 = vperm.slane %v5539, 0
      %v5545 = vperm.slane %v5539, 1
      %v5546 = vperm.slane %v5539, 2
      %v5547 = vperm.slane %v5539, 3
      %v5548 = vperm.slane %v5539, 4
      %v5549 = vperm.slane %v5539, 5
      %v5550 = vperm.slane %v5539, 6
      %v5551 = vperm.slane %v5539, 7
      %v5560 = vsub.f32 %v5480, %v5544
      %v5561 = vsub.f32 %v5481, %v5545
      %v5562 = vsub.f32 %v5482, %v5546
      %v5563 = vsub.f32 %v5483, %v5547
      %v5564 = vsub.f32 %v5484, %v5548
      %v5565 = vsub.f32 %v5485, %v5549
      %v5566 = vsub.f32 %v5486, %v5550
      %v5567 = vsub.f32 %v5487, %v5551
      %v5568 = vmul.f32 %v5560, 1.442695
      %v5569 = vpow.pop %v5568
      %v5570 = vmul.f32 %v5561, 1.442695
      %v5571 = vpow.pop %v5570
      %v5572 = vmul.f32 %v5562, 1.442695
      %v5573 = vpow.pop %v5572
      %v5574 = vmul.f32 %v5563, 1.442695
      %v5575 = vpow.pop %v5574
      %v5576 = vmul.f32 %v5564, 1.442695
      %v5577 = vpow.pop %v5576
      %v5578 = vmul.f32 %v5565, 1.442695
      %v5579 = vpow.pop %v5578
      %v5580 = vmul.f32 %v5566, 1.442695
      %v5581 = vpow.pop %v5580
      %v5582 = vmul.f32 %v5567, 1.442695
      %v5583 = vpow.pop %v5582
      %5592 = vset.pattern.permute.xlu0 0
      %5593 = vperm.xlu0 %5592, %v5569
      %v5594 = vpop.permute.xlu0 %5593
      %5595 = vset.pattern.permute.xlu0 0
      %5596 = vperm.xlu0 %5595, %v5571
      %v5597 = vpop.permute.xlu0 %5596
      %5598 = vset.pattern.permute.xlu0 0
      %5599 = vperm.xlu0 %5598, %v5573
      %v5600 = vpop.permute.xlu0 %5599
      %5601 = vset.pattern.permute.xlu0 0
      %5602 = vperm.xlu0 %5601, %v5575
      %v5603 = vpop.permute.xlu0 %5602
      %5604 = vset.pattern.permute.xlu0 0
      %5605 = vperm.xlu0 %5604, %v5577
      %v5606 = vpop.permute.xlu0 %5605
      %5607 = vset.pattern.permute.xlu0 0
      %5608 = vperm.xlu0 %5607, %v5579
      %v5609 = vpop.permute.xlu0 %5608
      %5610 = vset.pattern.permute.xlu0 0
      %5611 = vperm.xlu0 %5610, %v5581
      %v5612 = vpop.permute.xlu0 %5611
      %5613 = vset.pattern.permute.xlu0 0
      %5614 = vperm.xlu0 %5613, %v5583
      %v5615 = vpop.permute.xlu0 %5614
      %v5616 = vperm.slane %v5594, %v3414
      %v5617 = vperm.slane %v5597, %v3414
      %v5618 = vperm.slane %v5600, %v3414
      %v5619 = vperm.slane %v5603, %v3414
      %v5620 = vperm.slane %v5606, %v3414
      %v5621 = vperm.slane %v5609, %v3414
      %v5622 = vperm.slane %v5612, %v3414
      %v5623 = vperm.slane %v5615, %v3414
      %v5624 = vsel %vm4020, %v5617, %v5616
      %v5625 = vsel %vm4022, %v5618, %v5624
      %v5626 = vsel %vm4024, %v5619, %v5625
      %v5627 = vsel %vm4026, %v5620, %v5626
      %v5628 = vsel %vm4028, %v5621, %v5627
      %v5629 = vsel %vm4030, %v5622, %v5628
      %v5630 = vsel %vm4032, %v5623, %v5629
      %v5632 = vsel %vm4035, %v5630, 0.0
      %5633 = vadd.xlane.f32.xlu0 %v5632
      %v5634 = vpop.xlane.xlu0 %5633
      %v5635 = vadd.f32 %v5542, %v5634
      %v5636 = vrcp.pop %v5635
      %v5637 = vmul.f32 %v5542, %v4910
      %v5646 = vmul.f32 %v5594, %v5072
      %v5647 = vmul.f32 %v5597, %v5074
      %v5648 = vmul.f32 %v5600, %v5077
      %v5649 = vmul.f32 %v5603, %v5079
      %v5650 = vmul.f32 %v5606, %v5082
      %v5651 = vmul.f32 %v5609, %v5084
      %v5652 = vmul.f32 %v5612, %v5087
      %v5653 = vmul.f32 %v5615, %v5089
      %v5654 = vsel %vm4474, %v5646, 0.0
      %v5655 = vrot.slane %v5654, 4
      %v5656 = vadd.f32 %v5654, %v5655
      %v5657 = vrot.slane %v5656, 2
      %v5658 = vadd.f32 %v5656, %v5657
      %v5659 = vrot.slane %v5658, 1
      %v5660 = vadd.f32 %v5658, %v5659
      %v5661 = vsel %vm4474, %v5647, 0.0
      %v5662 = vrot.slane %v5661, 4
      %v5663 = vadd.f32 %v5661, %v5662
      %v5664 = vrot.slane %v5663, 2
      %v5665 = vadd.f32 %v5663, %v5664
      %v5666 = vrot.slane %v5665, 1
      %v5667 = vadd.f32 %v5665, %v5666
      %v5668 = vsel %vm4474, %v5648, 0.0
      %v5669 = vrot.slane %v5668, 4
      %v5670 = vadd.f32 %v5668, %v5669
      %v5671 = vrot.slane %v5670, 2
      %v5672 = vadd.f32 %v5670, %v5671
      %v5673 = vrot.slane %v5672, 1
      %v5674 = vadd.f32 %v5672, %v5673
      %v5675 = vsel %vm4474, %v5649, 0.0
      %v5676 = vrot.slane %v5675, 4
      %v5677 = vadd.f32 %v5675, %v5676
      %v5678 = vrot.slane %v5677, 2
      %v5679 = vadd.f32 %v5677, %v5678
      %v5680 = vrot.slane %v5679, 1
      %v5681 = vadd.f32 %v5679, %v5680
      %v5682 = vsel %vm4474, %v5650, 0.0
      %v5683 = vrot.slane %v5682, 4
      %v5684 = vadd.f32 %v5682, %v5683
      %v5685 = vrot.slane %v5684, 2
      %v5686 = vadd.f32 %v5684, %v5685
      %v5687 = vrot.slane %v5686, 1
      %v5688 = vadd.f32 %v5686, %v5687
      %v5689 = vsel %vm4474, %v5651, 0.0
      %v5690 = vrot.slane %v5689, 4
      %v5691 = vadd.f32 %v5689, %v5690
      %v5692 = vrot.slane %v5691, 2
      %v5693 = vadd.f32 %v5691, %v5692
      %v5694 = vrot.slane %v5693, 1
      %v5695 = vadd.f32 %v5693, %v5694
      %v5696 = vsel %vm4474, %v5652, 0.0
      %v5697 = vrot.slane %v5696, 4
      %v5698 = vadd.f32 %v5696, %v5697
      %v5699 = vrot.slane %v5698, 2
      %v5700 = vadd.f32 %v5698, %v5699
      %v5701 = vrot.slane %v5700, 1
      %v5702 = vadd.f32 %v5700, %v5701
      %v5703 = vsel %vm4474, %v5653, 0.0
      %v5704 = vrot.slane %v5703, 4
      %v5705 = vadd.f32 %v5703, %v5704
      %v5706 = vrot.slane %v5705, 2
      %v5707 = vadd.f32 %v5705, %v5706
      %v5708 = vrot.slane %v5707, 1
      %v5709 = vadd.f32 %v5707, %v5708
      %v5718 = vsel %vm4020, %v5667, %v5660
      %v5719 = vsel %vm4022, %v5674, %v5718
      %v5720 = vsel %vm4024, %v5681, %v5719
      %v5721 = vsel %vm4026, %v5688, %v5720
      %v5722 = vsel %vm4028, %v5695, %v5721
      %v5723 = vsel %vm4030, %v5702, %v5722
      %v5724 = vsel %vm4032, %v5709, %v5723
      %v5726 = vadd.f32 %v5637, %v5724
      %v5727 = vmul.f32 %v5726, %v5636
      %v5728 = vsel %vm3551, %v5407, %v5727
      %v5729 = vpack.c.bf16 %v5728, %v5728
      %v5734 = vunpack.c.l.b16 %v4744
      %v5735 = vunpack.c.l.b16 %v4745
      %v5736 = vunpack.c.l.b16 %v4746
      %v5737 = vunpack.c.l.b16 %v4747
      %v5738 = vpack.c.b16 %v5735, %v5734
      %v5739 = vpack.c.b16 %v5737, %v5736
      %v5743 = vsel %vm3461, %v5729, 0
      %5745 = vmatpush.bf16.msra.mxu0 0
      %5746 = vmatpush.bf16.msra.mxu0 0
      %5747 = vmatpush.bf16.msra.mxu0 0
      %5748 = vmatpush.bf16.msra.mxu0 0
      %5749 = vmatpush.bf16.msra.mxu0 0
      %5750 = vmatpush.bf16.msra.mxu0 0
      %5751 = vmatpush.bf16.msra.mxu0 %v5739
      %5752 = vmatpush.bf16.msra.mxu0 %v5738
      %5753 = vmatmul.bf16.gmra.mxu0 %v5743
      %v5754 = vpop.f32.mrf.mxu0
      %v5755 = vadd.f32 0.0, %v5754
      %v5756 = vpop.f32.mrf.mxu0
      %5757 = vdwg.mxu0
      %v5758 = vadd.f32 %v4713, %v5755
      %v5760 = vperm.slane %v4723, 0
      %v5762 = vadd.f32 %v5758, %v5760
      %v5763 = vsel %vm3461, %v5762, 0.0
      %5764 = vadd.xlane.f32.xlu0 %v5763
      %v5765 = vpop.xlane.xlu0 %5764
      %v5766 = vmul.f32 %v5765, %v3471
      %v5767 = vsub.f32 %v5762, %v5766
      %v5768 = vmul.f32 %v5767, %v5767
      %v5769 = vsel %vm3461, %v5768, 0.0
      %5770 = vadd.xlane.f32.xlu0 %v5769
      %v5771 = vpop.xlane.xlu0 %5770
      %v5772 = vmul.f32 %v5771, %v3471
      %v5773 = vadd.f32 %v5772, 1e-05
      %v5774 = vrsqrt.pop %v5773
      %v5775 = vmul.f32 %v5774, %v5773
      %v5776 = vmul.f32 %v5775, %v5774
      %v5777 = vmul.f32 0.5, %v5776
      %v5778 = vsub.f32 1.5, %v5777
      %v5779 = vmul.f32 %v5774, %v5778
      %vm5780 = vweird.f32 %v5773
      %vm5781 = vweird.f32 %v5774
      %vm5782 = vmor %vm5780, %vm5781
      %v5783 = vsel %vm5782, %v5774, %v5779
      %v5784 = vmul.f32 %v5767, %v5783
      %v5786 = vperm.slane %v4719, 0
      %v5788 = vmul.f32 %v5784, %v5786
      %v5790 = vperm.slane %v4721, 0
      %v5792 = vadd.f32 %v5788, %v5790
      %v5793 = vpack.c.bf16 %v5792, %v5792
      %v5795 = vperm.slane %v4725, 0
      %v5801 = vunpack.c.l.b16 %v4749
      %v5802 = vunpack.c.l.b16 %v4750
      %v5803 = vunpack.c.l.b16 %v4751
      %v5804 = vunpack.c.l.b16 %v4752
      %v5805 = vpack.c.b16 %v5802, %v5801
      %v5806 = vpack.c.b16 %v5804, %v5803
      %v5810 = vsel %vm3461, %v5793, 0
      %5812 = vmatpush.bf16.msra.mxu0 0
      %5813 = vmatpush.bf16.msra.mxu0 0
      %5814 = vmatpush.bf16.msra.mxu0 0
      %5815 = vmatpush.bf16.msra.mxu0 0
      %5816 = vmatpush.bf16.msra.mxu0 0
      %5817 = vmatpush.bf16.msra.mxu0 0
      %5818 = vmatpush.bf16.msra.mxu0 %v5806
      %5819 = vmatpush.bf16.msra.mxu0 %v5805
      %5820 = vmatmul.bf16.gmra.mxu0 %v5810
      %v5821 = vpop.f32.mrf.mxu0
      %v5822 = vadd.f32 %v5795, %v5821
      %v5823 = vpop.f32.mrf.mxu0
      %5824 = vdwg.mxu0
      %v5825 = vmax.f32 %v5822, 0.0
      %v5826 = vpack.c.bf16 %v5825, %v5825
      %v5843 = vunpack.c.l.b16 %v4754
      %v5844 = vunpack.c.l.b16 %v4755
      %v5845 = vunpack.c.l.b16 %v4756
      %v5846 = vunpack.c.l.b16 %v4757
      %v5847 = vunpack.c.l.b16 %v4758
      %v5848 = vunpack.c.l.b16 %v4759
      %v5849 = vunpack.c.l.b16 %v4760
      %v5850 = vunpack.c.l.b16 %v4761
      %v5851 = vunpack.c.l.b16 %v4762
      %v5852 = vunpack.c.l.b16 %v4763
      %v5853 = vunpack.c.l.b16 %v4764
      %v5854 = vunpack.c.l.b16 %v4765
      %v5855 = vunpack.c.l.b16 %v4766
      %v5856 = vunpack.c.l.b16 %v4767
      %v5857 = vunpack.c.l.b16 %v4768
      %v5858 = vunpack.c.l.b16 %v4769
      %v5859 = vpack.c.b16 %v5844, %v5843
      %v5860 = vpack.c.b16 %v5846, %v5845
      %v5861 = vpack.c.b16 %v5848, %v5847
      %v5862 = vpack.c.b16 %v5850, %v5849
      %v5863 = vpack.c.b16 %v5852, %v5851
      %v5864 = vpack.c.b16 %v5854, %v5853
      %v5865 = vpack.c.b16 %v5856, %v5855
      %v5866 = vpack.c.b16 %v5858, %v5857
      %5875 = vmatpush.bf16.msra.mxu0 %v5866
      %5876 = vmatpush.bf16.msra.mxu0 %v5865
      %5877 = vmatpush.bf16.msra.mxu0 %v5864
      %5878 = vmatpush.bf16.msra.mxu0 %v5863
      %5879 = vmatpush.bf16.msra.mxu0 %v5862
      %5880 = vmatpush.bf16.msra.mxu0 %v5861
      %5881 = vmatpush.bf16.msra.mxu0 %v5860
      %5882 = vmatpush.bf16.msra.mxu0 %v5859
      %5883 = vmatmul.bf16.gmra.mxu0 %v5826
      %v5884 = vpop.f32.mrf.mxu0
      %v5885 = vadd.f32 0.0, %v5884
      %v5886 = vpop.f32.mrf.mxu0
      %5887 = vdwg.mxu0
      %v5888 = vadd.f32 %v5762, %v5885
      %v5890 = vperm.slane %v4727, 0
      %v5892 = vadd.f32 %v5888, %v5890
      %5893 = vst.msk [vmem:[%s604] sm:$0xff] %vm3461, %v5892
      %p5894 = scmp.lt.s32.totalorder %s28, 1
      %s5895 = scalar_select %p5894, %s28, 1
      %s5896 = smul.addr %s5895, 8
      %s5897 = scalar_lea.vmem %s17, %s5896
      // Predicated region
      $region89: #{ulto_decoder2d_forward.1} parent=87 // pred_check
        %p5898 = pneg %p423
      $region90: #{ulto_decoder2d_forward.1} parent=87 // pred_check_branch
        %5900 = sbr.rel (%p5898) target = $region92
      $region91: #{ulto_decoder2d_forward.1} parent=87 // pred_region
        _
      $region92: #{ulto_decoder2d_forward.1} parent=87 // pred_fallthru
        _
    $region88: #{ulto_decoder2d_forward.1} parent=5 // pred_fallthru
      _
    %p5901 = scmp.le.s32.totalorder 2, %s23
    // Predicated region
    $region93: #{ulto_decoder2d_forward.1} parent=5 // pred_check
      %p5902 = pneg %p5901
    $region94: #{ulto_decoder2d_forward.1} parent=5 // pred_check_branch
      %5904 = sbr.rel (%p5902) target = $region96
    $region95: #{ulto_decoder2d_forward.1} parent=5 // pred_region
      %s5905 = ssub.s32 %s23, 2
      // Predicated region
      $region97: #{ulto_decoder2d_forward.1} parent=95 // pred_check
        %p5906 = pneg %p429
      $region98: #{ulto_decoder2d_forward.1} parent=95 // pred_check_branch
        %5908 = sbr.rel (%p5906) target = $region100
      $region99: #{ulto_decoder2d_forward.1} parent=95 // pred_region
        %p5909 = scmp.lt.s32.totalorder %s29, 1
        %s5910 = scalar_select %p5909, %s29, 1
        %s5911 = smul.addr %s5910, 8
        %s5912 = scalar_lea.vmem %s17, %s5911
      $region100: #{ulto_decoder2d_forward.1} parent=95 // pred_fallthru
        _
    $region96: #{ulto_decoder2d_forward.1} parent=5 // pred_fallthru
      _
  $region6: #{ulto_decoder2d_forward.1} parent=0 // loop_footer
    %s27 = sadd.s32 1, %s23
  $region7: #{ulto_decoder2d_forward.1} parent=0 // loop_footer_branch
    %22 = sbr.rel target = $region3
  $region8: #{ulto_decoder2d_forward.1} parent=0 // loop_exit
    _

</llo_original>
